<compile_context>
chip_gen: v5e
topology: v5e:2x2
jax: 0.10.0
libtpu: 0.0.40
codegen_flags: <defaults>
</compile_context>

<pallas_src>
import jax
import jax.numpy as jnp
from jax.experimental import pallas as pl
from jax.experimental.pallas import tpu as pltpu

KSIZE = 3  # both convs are 3x3, stride 1, no padding


# ----------------------------------------------------------------------------
# Fused kernel factory (one grid step == one tile of NB samples)
# ----------------------------------------------------------------------------
def _make_kernel(C, H, W, NB, D1):
    HW = H * W
    PAD = (KSIZE - 1) * W + (KSIZE - 1)   # largest shift offset = 2*W + 2
    HWp = HW + PAD                        # per-sample padded canvas length
    L1 = NB * HWp                         # batched conv output canvas length
    Lx = L1 + PAD                         # batched input canvas length (+tail pad)

    def kernel(x_ref, w1_ref, b1_ref, w2_ref, b2_ref,
               fw1_ref, fb1_ref, fw2_ref, fb2_ref, fw3_ref, fb3_ref,
               out_ref, h1_ref, h2c_ref, h2_ref):
        # x_ref   : (1, C, Lx)   NB samples concatenated on lanes, zero padded
        # w1_ref  : (9, C, C)    conv1 per-tap channel-mixing matrices [s, co, ci]
        # b1_ref  : (C, 1)
        # fw1_ref : (C, HW, D1)  FC1 weight on the full canvas (zero rows at invalid pos)
        # fw3_ref : (D2, A_pad)  lane-padded head weight
        # h1_ref  : VMEM (C, Lx) padded conv1 canvas
        # h2c_ref : VMEM (C, L1) conv2 canvas
        # h2_ref  : VMEM (C, NB, HW) per-sample conv2 slabs for the FC head

        # ---- conv1 (+ReLU): 9 static lane-shifted slices, channel mix on the MXU,
        #      whole batch tile on the lane axis.
        acc = jnp.zeros((C, L1), jnp.float32)
        for dy in range(KSIZE):
            for dx in range(KSIZE):
                off = dy * W + dx
                acc = acc + jnp.dot(w1_ref[dy * KSIZE + dx],
                                    x_ref[0, :, off:off + L1],
                                    preferred_element_type=jnp.float32)
        h1_ref[:, :L1] = jnp.maximum(acc + b1_ref[...], 0.0)
        h1_ref[:, L1:] = jnp.zeros((C, Lx - L1), jnp.float32)  # keep tail finite

        # ---- conv2 (+ReLU): same batched-canvas pattern, reading padded h1
        acc = jnp.zeros((C, L1), jnp.float32)
        for dy in range(KSIZE):
            for dx in range(KSIZE):
                off = dy * W + dx
                acc = acc + jnp.dot(w2_ref[dy * KSIZE + dx],
                                    h1_ref[:, off:off + L1],
                                    preferred_element_type=jnp.float32)
        h2c_ref[...] = jnp.maximum(acc + b2_ref[...], 0.0)

        # ---- gather per-sample (C, HW) slabs -> (C, NB, HW) so FC1 runs batched
        for n in range(NB):
            h2_ref[:, n, :] = h2c_ref[:, n * HWp:n * HWp + HW]

        # ---- MLP head; the NCHW flatten is folded into fw1's canvas layout
        a = jnp.zeros((NB, D1), jnp.float32)
        for c in range(C):
            a = a + jnp.dot(h2_ref[c], fw1_ref[c],
                            preferred_element_type=jnp.float32)      # (NB, D1)
        a = jnp.maximum(a + fb1_ref[...], 0.0)
        a = jnp.maximum(jnp.dot(a, fw2_ref[...],
                                preferred_element_type=jnp.float32) + fb2_ref[...], 0.0)
        out_ref[0] = jnp.dot(a, fw3_ref[...],
                             preferred_element_type=jnp.float32) + fb3_ref[...]

    return kernel, HW, HWp, PAD, L1, Lx


# ----------------------------------------------------------------------------
# Parameter container / init (mimics PyTorch uniform(-1/sqrt(fan_in)))
# ----------------------------------------------------------------------------
def init_params(key, observation_shape, action_shape):
    H, W, C = observation_shape
    H2, W2 = H - 2 * (KSIZE - 1), W - 2 * (KSIZE - 1)
    flat_dim = C * H2 * W2

    def uni(k, shape, fan_in):
        bound = 1.0 / (fan_in ** 0.5)
        return jax.random.uniform(k, shape, jnp.float32, -bound, bound)

    ks = jax.random.split(key, 10)
    conv_fan = C * KSIZE * KSIZE
    params = {
        "cw1": uni(ks[0], (C, C, KSIZE, KSIZE), conv_fan),
        "cb1": uni(ks[1], (C,), conv_fan),
        "cw2": uni(ks[2], (C, C, KSIZE, KSIZE), conv_fan),
        "cb2": uni(ks[3], (C,), conv_fan),
        "fw1": uni(ks[4], (flat_dim, 120), flat_dim),
        "fb1": uni(ks[5], (1, 120), flat_dim),
        "fw2": uni(ks[6], (120, 84), 120),
        "fb2": uni(ks[7], (1, 84), 120),
        "fw3": uni(ks[8], (84, action_shape), 84),
        "fb3": uni(ks[9], (1, action_shape), 84),
    }
    return params, flat_dim


# ----------------------------------------------------------------------------
# Forward pass: one fused pallas_call, grid over batch tiles ("parallel")
# ----------------------------------------------------------------------------
def dqn_forward(params, x, batch_tile=4):
    assert x.ndim >= 3, "only support magent input observation"
    if x.ndim == 3:
        x = x[None]                                   # (1, C, H, W)
    N, C, H, W = x.shape
    H2, W2 = H - 2 * (KSIZE - 1), W - 2 * (KSIZE - 1)
    A = params["fw3"].shape[1]
    D1 = params["fw1"].shape[1]

    NB = min(N, batch_tile)
    Ntiles = -(-N // NB)
    Np = Ntiles * NB

    kernel, HW, HWp, PAD, L1, Lx = _make_kernel(C, H, W, NB, D1)

    # ---- wrapper-side layout prep (pure data plumbing, done once by XLA) ----
    xf = x.astype(jnp.float32).reshape(N, C, HW)
    xf = jnp.pad(xf, ((0, Np - N), (0, 0), (0, HWp - HW)))          # per-sample pad
    xf = xf.reshape(Ntiles, NB, C, HWp).transpose(0, 2, 1, 3)
    xf = xf.reshape(Ntiles, C, NB * HWp)
    xf = jnp.pad(xf, ((0, 0), (0, 0), (0, Lx - NB * HWp)))          # tile tail pad

    w1_r = params["cw1"].transpose(2, 3, 0, 1).reshape(KSIZE * KSIZE, C, C)
    w2_r = params["cw2"].transpose(2, 3, 0, 1).reshape(KSIZE * KSIZE, C, C)
    b1_r = params["cb1"].reshape(C, 1)
    b2_r = params["cb2"].reshape(C, 1)
    # FC1 weight: torch NCHW-flatten rows (c, y, x) mapped onto the full HxW canvas,
    # zero rows at invalid (right/bottom) positions.
    fw1_r = params["fw1"].reshape(C, H2, W2, D1)
    fw1_r = jnp.pad(fw1_r, ((0, 0), (0, H - H2), (0, W - W2), (0, 0)))
    fw1_r = fw1_r.reshape(C, HW, D1)
    # Lane-dense head output: pad A to a multiple of 128.
    A_pad = -(-A // 128) * 128
    fw3_r = jnp.pad(params["fw3"], ((0, 0), (0, A_pad - A)))
    fb3_r = jnp.pad(params["fb3"], ((0, 0), (0, A_pad - A)))

    def resident(arr):
        nd = arr.ndim
        return pl.BlockSpec(tuple(arr.shape), lambda i, _nd=nd: (0,) * _nd)

    grid_spec = pltpu.PrefetchScalarGridSpec(
        num_scalar_prefetch=0,
        grid=(Ntiles,),
        in_specs=[
            pl.BlockSpec((1, C, Lx), lambda i: (i, 0, 0)),   # x: one batch tile / step
            resident(w1_r), resident(b1_r),
            resident(w2_r), resident(b2_r),
            resident(fw1_r), resident(params["fb1"]),
            resident(params["fw2"]), resident(params["fb2"]),
            resident(fw3_r), resident(fb3_r),
        ],
        out_specs=pl.BlockSpec((1, NB, A_pad), lambda i: (i, 0, 0)),
        scratch_shapes=[pltpu.VMEM((C, Lx), jnp.float32),        # conv1 canvas
                        pltpu.VMEM((C, L1), jnp.float32),        # conv2 canvas
                        pltpu.VMEM((C, NB, HW), jnp.float32)],   # per-sample slabs
    )

    out = pl.pallas_call(
        kernel,
        grid_spec=grid_spec,
        out_shape=jax.ShapeDtypeStruct((Ntiles, NB, A_pad), jnp.float32),
        compiler_params=pltpu.CompilerParams(
            dimension_semantics=("parallel",)),
    )(xf, w1_r, b1_r, w2_r, b2_r,
      fw1_r, params["fb1"], params["fw2"], params["fb2"], fw3_r, fb3_r)

    return out.reshape(Np, A_pad)[:N, :A]


# ----------------------------------------------------------------------------
# Pure-JAX reference (sanity check)
# ----------------------------------------------------------------------------
def dqn_reference(params, x):
    def conv(h, w, b):
        o = jax.lax.conv_general_dilated(
            h, w, window_strides=(1, 1), padding="VALID",
            dimension_numbers=("NCHW", "OIHW", "NCHW"))
        return jax.nn.relu(o + b[None, :, None, None])

    h = conv(x, params["cw1"], params["cb1"])
    h = conv(h, params["cw2"], params["cb2"])
    h = h.reshape(x.shape[0], -1)
    h = jax.nn.relu(h @ params["fw1"] + params["fb1"])
    h = jax.nn.relu(h @ params["fw2"] + params["fb2"])
    return h @ params["fw3"] + params["fb3"]


if __name__ == "__main__":
    observation_shape = (16, 16, 4)   # (H, W, C) — matches torch permute(2,0,1)
    action_shape = 6
    N = 2

    key = jax.random.PRNGKey(0)
    kp, kx = jax.random.split(key)
    params, flat_dim = init_params(kp, observation_shape, action_shape)

    H, W, C = observation_shape
    x = jax.random.normal(kx, (N, C, H, W), jnp.float32)  # NCHW input

    out = jax.block_until_ready(dqn_forward(params, x))
    ref = jax.block_until_ready(dqn_reference(params, x))

    assert out.shape == (N, action_shape), out.shape
    assert jnp.allclose(out, ref, atol=2e-3, rtol=2e-3), (
        float(jnp.max(jnp.abs(out - ref))))
    print("KERNEL_OK")
</pallas_src>

<mosaic_0001>
module attributes {stable_mosaic.version = 11 : i64} {
  func.func @kernel(%arg0: i32, %arg1: memref<1x4x614xf32, #tpu.memory_space<vmem>>, %arg2: memref<9x4x4xf32, #tpu.memory_space<vmem>>, %arg3: memref<4x1xf32, #tpu.memory_space<vmem>>, %arg4: memref<9x4x4xf32, #tpu.memory_space<vmem>>, %arg5: memref<4x1xf32, #tpu.memory_space<vmem>>, %arg6: memref<4x256x120xf32, #tpu.memory_space<vmem>>, %arg7: memref<1x120xf32, #tpu.memory_space<vmem>>, %arg8: memref<120x84xf32, #tpu.memory_space<vmem>>, %arg9: memref<1x84xf32, #tpu.memory_space<vmem>>, %arg10: memref<84x128xf32, #tpu.memory_space<vmem>>, %arg11: memref<1x128xf32, #tpu.memory_space<vmem>>, %arg12: memref<1x2x128xf32, #tpu.memory_space<vmem>>, %arg13: memref<4x614xf32, #tpu.memory_space<vmem>>, %arg14: memref<4x580xf32, #tpu.memory_space<vmem>>, %arg15: memref<4x2x256xf32, #tpu.memory_space<vmem>>) attributes {dimension_semantics = [#tpu.dimension_semantics<parallel>], iteration_bounds = array<i64: 1>, scalar_prefetch = 0 : i64, scratch_operands = 3 : i64, tpu.core_type = #tpu.core_type<tc>, window_params = [{transform_indices = @transform_0, window_bounds = array<i64: 1, 4, 614>}, {pipeline_mode = #tpu.pipeline_mode<synchronous>, transform_indices = @transform_1, window_bounds = array<i64: 9, 4, 4>}, {pipeline_mode = #tpu.pipeline_mode<synchronous>, transform_indices = @transform_2, window_bounds = array<i64: 4, 1>}, {pipeline_mode = #tpu.pipeline_mode<synchronous>, transform_indices = @transform_3, window_bounds = array<i64: 9, 4, 4>}, {pipeline_mode = #tpu.pipeline_mode<synchronous>, transform_indices = @transform_4, window_bounds = array<i64: 4, 1>}, {pipeline_mode = #tpu.pipeline_mode<synchronous>, transform_indices = @transform_5, window_bounds = array<i64: 4, 256, 120>}, {pipeline_mode = #tpu.pipeline_mode<synchronous>, transform_indices = @transform_6, window_bounds = array<i64: 1, 120>}, {pipeline_mode = #tpu.pipeline_mode<synchronous>, transform_indices = @transform_7, window_bounds = array<i64: 120, 84>}, {pipeline_mode = #tpu.pipeline_mode<synchronous>, transform_indices = @transform_8, window_bounds = array<i64: 1, 84>}, {pipeline_mode = #tpu.pipeline_mode<synchronous>, transform_indices = @transform_9, window_bounds = array<i64: 84, 128>}, {pipeline_mode = #tpu.pipeline_mode<synchronous>, transform_indices = @transform_10, window_bounds = array<i64: 1, 128>}, {transform_indices = @transform_11, window_bounds = array<i64: 1, 2, 128>}]} {
    %cst = arith.constant 0.000000e+00 : f32
    %0 = vector.broadcast %cst : f32 to vector<4x580xf32>
    %c0 = arith.constant 0 : index
    %c0_0 = arith.constant 0 : index
    %c0_1 = arith.constant 0 : index
    %1 = vector.load %arg2[%c0, %c0_0, %c0_1] : memref<9x4x4xf32, #tpu.memory_space<vmem>>, vector<1x4x4xf32>
    %2 = vector.shape_cast %1 : vector<1x4x4xf32> to vector<4x4xf32>
    %c0_2 = arith.constant 0 : index
    %c0_3 = arith.constant 0 : index
    %c0_4 = arith.constant 0 : index
    %3 = vector.load %arg1[%c0_2, %c0_3, %c0_4] : memref<1x4x614xf32, #tpu.memory_space<vmem>>, vector<1x4x580xf32>
    %4 = vector.shape_cast %3 : vector<1x4x580xf32> to vector<4x580xf32>
    %cst_5 = arith.constant dense<0.000000e+00> : vector<4x580xf32>
    %5 = tpu.matmul %2, %4, %cst_5 {dimension_numbers = #tpu.dot_dimension_numbers<[1], [0], [0], [1], [0, 0, 1, 1], [], []>} : vector<4x4xf32>, vector<4x580xf32>, vector<4x580xf32> -> vector<4x580xf32>
    %6 = arith.addf %0, %5 : vector<4x580xf32>
    %c1 = arith.constant 1 : index
    %c0_6 = arith.constant 0 : index
    %c0_7 = arith.constant 0 : index
    %7 = vector.load %arg2[%c1, %c0_6, %c0_7] : memref<9x4x4xf32, #tpu.memory_space<vmem>>, vector<1x4x4xf32>
    %8 = vector.shape_cast %7 : vector<1x4x4xf32> to vector<4x4xf32>
    %c0_8 = arith.constant 0 : index
    %c0_9 = arith.constant 0 : index
    %c1_10 = arith.constant 1 : index
    %9 = vector.load %arg1[%c0_8, %c0_9, %c1_10] : memref<1x4x614xf32, #tpu.memory_space<vmem>>, vector<1x4x580xf32>
    %10 = vector.shape_cast %9 : vector<1x4x580xf32> to vector<4x580xf32>
    %cst_11 = arith.constant dense<0.000000e+00> : vector<4x580xf32>
    %11 = tpu.matmul %8, %10, %cst_11 {dimension_numbers = #tpu.dot_dimension_numbers<[1], [0], [0], [1], [0, 0, 1, 1], [], []>} : vector<4x4xf32>, vector<4x580xf32>, vector<4x580xf32> -> vector<4x580xf32>
    %12 = arith.addf %6, %11 : vector<4x580xf32>
    %c2 = arith.constant 2 : index
    %c0_12 = arith.constant 0 : index
    %c0_13 = arith.constant 0 : index
    %13 = vector.load %arg2[%c2, %c0_12, %c0_13] : memref<9x4x4xf32, #tpu.memory_space<vmem>>, vector<1x4x4xf32>
    %14 = vector.shape_cast %13 : vector<1x4x4xf32> to vector<4x4xf32>
    %c0_14 = arith.constant 0 : index
    %c0_15 = arith.constant 0 : index
    %c2_16 = arith.constant 2 : index
    %15 = vector.load %arg1[%c0_14, %c0_15, %c2_16] : memref<1x4x614xf32, #tpu.memory_space<vmem>>, vector<1x4x580xf32>
    %16 = vector.shape_cast %15 : vector<1x4x580xf32> to vector<4x580xf32>
    %cst_17 = arith.constant dense<0.000000e+00> : vector<4x580xf32>
    %17 = tpu.matmul %14, %16, %cst_17 {dimension_numbers = #tpu.dot_dimension_numbers<[1], [0], [0], [1], [0, 0, 1, 1], [], []>} : vector<4x4xf32>, vector<4x580xf32>, vector<4x580xf32> -> vector<4x580xf32>
    %18 = arith.addf %12, %17 : vector<4x580xf32>
    %c3 = arith.constant 3 : index
    %c0_18 = arith.constant 0 : index
    %c0_19 = arith.constant 0 : index
    %19 = vector.load %arg2[%c3, %c0_18, %c0_19] : memref<9x4x4xf32, #tpu.memory_space<vmem>>, vector<1x4x4xf32>
    %20 = vector.shape_cast %19 : vector<1x4x4xf32> to vector<4x4xf32>
    %c0_20 = arith.constant 0 : index
    %c0_21 = arith.constant 0 : index
    %c16 = arith.constant 16 : index
    %21 = vector.load %arg1[%c0_20, %c0_21, %c16] : memref<1x4x614xf32, #tpu.memory_space<vmem>>, vector<1x4x580xf32>
    %22 = vector.shape_cast %21 : vector<1x4x580xf32> to vector<4x580xf32>
    %cst_22 = arith.constant dense<0.000000e+00> : vector<4x580xf32>
    %23 = tpu.matmul %20, %22, %cst_22 {dimension_numbers = #tpu.dot_dimension_numbers<[1], [0], [0], [1], [0, 0, 1, 1], [], []>} : vector<4x4xf32>, vector<4x580xf32>, vector<4x580xf32> -> vector<4x580xf32>
    %24 = arith.addf %18, %23 : vector<4x580xf32>
    %c4 = arith.constant 4 : index
    %c0_23 = arith.constant 0 : index
    %c0_24 = arith.constant 0 : index
    %25 = vector.load %arg2[%c4, %c0_23, %c0_24] : memref<9x4x4xf32, #tpu.memory_space<vmem>>, vector<1x4x4xf32>
    %26 = vector.shape_cast %25 : vector<1x4x4xf32> to vector<4x4xf32>
    %c0_25 = arith.constant 0 : index
    %c0_26 = arith.constant 0 : index
    %c17 = arith.constant 17 : index
    %27 = vector.load %arg1[%c0_25, %c0_26, %c17] : memref<1x4x614xf32, #tpu.memory_space<vmem>>, vector<1x4x580xf32>
    %28 = vector.shape_cast %27 : vector<1x4x580xf32> to vector<4x580xf32>
    %cst_27 = arith.constant dense<0.000000e+00> : vector<4x580xf32>
    %29 = tpu.matmul %26, %28, %cst_27 {dimension_numbers = #tpu.dot_dimension_numbers<[1], [0], [0], [1], [0, 0, 1, 1], [], []>} : vector<4x4xf32>, vector<4x580xf32>, vector<4x580xf32> -> vector<4x580xf32>
    %30 = arith.addf %24, %29 : vector<4x580xf32>
    %c5 = arith.constant 5 : index
    %c0_28 = arith.constant 0 : index
    %c0_29 = arith.constant 0 : index
    %31 = vector.load %arg2[%c5, %c0_28, %c0_29] : memref<9x4x4xf32, #tpu.memory_space<vmem>>, vector<1x4x4xf32>
    %32 = vector.shape_cast %31 : vector<1x4x4xf32> to vector<4x4xf32>
    %c0_30 = arith.constant 0 : index
    %c0_31 = arith.constant 0 : index
    %c18 = arith.constant 18 : index
    %33 = vector.load %arg1[%c0_30, %c0_31, %c18] : memref<1x4x614xf32, #tpu.memory_space<vmem>>, vector<1x4x580xf32>
    %34 = vector.shape_cast %33 : vector<1x4x580xf32> to vector<4x580xf32>
    %cst_32 = arith.constant dense<0.000000e+00> : vector<4x580xf32>
    %35 = tpu.matmul %32, %34, %cst_32 {dimension_numbers = #tpu.dot_dimension_numbers<[1], [0], [0], [1], [0, 0, 1, 1], [], []>} : vector<4x4xf32>, vector<4x580xf32>, vector<4x580xf32> -> vector<4x580xf32>
    %36 = arith.addf %30, %35 : vector<4x580xf32>
    %c6 = arith.constant 6 : index
    %c0_33 = arith.constant 0 : index
    %c0_34 = arith.constant 0 : index
    %37 = vector.load %arg2[%c6, %c0_33, %c0_34] : memref<9x4x4xf32, #tpu.memory_space<vmem>>, vector<1x4x4xf32>
    %38 = vector.shape_cast %37 : vector<1x4x4xf32> to vector<4x4xf32>
    %c0_35 = arith.constant 0 : index
    %c0_36 = arith.constant 0 : index
    %c32 = arith.constant 32 : index
    %39 = vector.load %arg1[%c0_35, %c0_36, %c32] : memref<1x4x614xf32, #tpu.memory_space<vmem>>, vector<1x4x580xf32>
    %40 = vector.shape_cast %39 : vector<1x4x580xf32> to vector<4x580xf32>
    %cst_37 = arith.constant dense<0.000000e+00> : vector<4x580xf32>
    %41 = tpu.matmul %38, %40, %cst_37 {dimension_numbers = #tpu.dot_dimension_numbers<[1], [0], [0], [1], [0, 0, 1, 1], [], []>} : vector<4x4xf32>, vector<4x580xf32>, vector<4x580xf32> -> vector<4x580xf32>
    %42 = arith.addf %36, %41 : vector<4x580xf32>
    %c7 = arith.constant 7 : index
    %c0_38 = arith.constant 0 : index
    %c0_39 = arith.constant 0 : index
    %43 = vector.load %arg2[%c7, %c0_38, %c0_39] : memref<9x4x4xf32, #tpu.memory_space<vmem>>, vector<1x4x4xf32>
    %44 = vector.shape_cast %43 : vector<1x4x4xf32> to vector<4x4xf32>
    %c0_40 = arith.constant 0 : index
    %c0_41 = arith.constant 0 : index
    %c33 = arith.constant 33 : index
    %45 = vector.load %arg1[%c0_40, %c0_41, %c33] : memref<1x4x614xf32, #tpu.memory_space<vmem>>, vector<1x4x580xf32>
    %46 = vector.shape_cast %45 : vector<1x4x580xf32> to vector<4x580xf32>
    %cst_42 = arith.constant dense<0.000000e+00> : vector<4x580xf32>
    %47 = tpu.matmul %44, %46, %cst_42 {dimension_numbers = #tpu.dot_dimension_numbers<[1], [0], [0], [1], [0, 0, 1, 1], [], []>} : vector<4x4xf32>, vector<4x580xf32>, vector<4x580xf32> -> vector<4x580xf32>
    %48 = arith.addf %42, %47 : vector<4x580xf32>
    %c8 = arith.constant 8 : index
    %c0_43 = arith.constant 0 : index
    %c0_44 = arith.constant 0 : index
    %49 = vector.load %arg2[%c8, %c0_43, %c0_44] : memref<9x4x4xf32, #tpu.memory_space<vmem>>, vector<1x4x4xf32>
    %50 = vector.shape_cast %49 : vector<1x4x4xf32> to vector<4x4xf32>
    %c0_45 = arith.constant 0 : index
    %c0_46 = arith.constant 0 : index
    %c34 = arith.constant 34 : index
    %51 = vector.load %arg1[%c0_45, %c0_46, %c34] : memref<1x4x614xf32, #tpu.memory_space<vmem>>, vector<1x4x580xf32>
    %52 = vector.shape_cast %51 : vector<1x4x580xf32> to vector<4x580xf32>
    %cst_47 = arith.constant dense<0.000000e+00> : vector<4x580xf32>
    %53 = tpu.matmul %50, %52, %cst_47 {dimension_numbers = #tpu.dot_dimension_numbers<[1], [0], [0], [1], [0, 0, 1, 1], [], []>} : vector<4x4xf32>, vector<4x580xf32>, vector<4x580xf32> -> vector<4x580xf32>
    %54 = arith.addf %48, %53 : vector<4x580xf32>
    %c0_48 = arith.constant 0 : index
    %c0_49 = arith.constant 0 : index
    %55 = vector.load %arg3[%c0_48, %c0_49] : memref<4x1xf32, #tpu.memory_space<vmem>>, vector<4x1xf32>
    %56 = vector.broadcast %55 : vector<4x1xf32> to vector<4x580xf32>
    %57 = arith.addf %54, %56 : vector<4x580xf32>
    %cst_50 = arith.constant 0.000000e+00 : f32
    %58 = vector.broadcast %cst_50 : f32 to vector<4x580xf32>
    %59 = arith.maximumf %57, %58 : vector<4x580xf32>
    %c0_51 = arith.constant 0 : index
    %c0_52 = arith.constant 0 : index
    %60 = vector.load %arg13[%c0_51, %c0_52] : memref<4x614xf32, #tpu.memory_space<vmem>>, vector<4x580xf32>
    tpu.vector_store %arg13[%c0_51, %c0_52], %59 {strides = array<i32>} : memref<4x614xf32, #tpu.memory_space<vmem>>, vector<4x580xf32>,
    %cst_53 = arith.constant 0.000000e+00 : f32
    %61 = vector.broadcast %cst_53 : f32 to vector<4x34xf32>
    %c0_54 = arith.constant 0 : index
    %c580 = arith.constant 580 : index
    %62 = vector.load %arg13[%c0_54, %c580] : memref<4x614xf32, #tpu.memory_space<vmem>>, vector<4x34xf32>
    tpu.vector_store %arg13[%c0_54, %c580], %61 {strides = array<i32>} : memref<4x614xf32, #tpu.memory_space<vmem>>, vector<4x34xf32>,
    %cst_55 = arith.constant 0.000000e+00 : f32
    %63 = vector.broadcast %cst_55 : f32 to vector<4x580xf32>
    %c0_56 = arith.constant 0 : index
    %c0_57 = arith.constant 0 : index
    %c0_58 = arith.constant 0 : index
    %64 = vector.load %arg4[%c0_56, %c0_57, %c0_58] : memref<9x4x4xf32, #tpu.memory_space<vmem>>, vector<1x4x4xf32>
    %65 = vector.shape_cast %64 : vector<1x4x4xf32> to vector<4x4xf32>
    %c0_59 = arith.constant 0 : index
    %c0_60 = arith.constant 0 : index
    %66 = vector.load %arg13[%c0_59, %c0_60] : memref<4x614xf32, #tpu.memory_space<vmem>>, vector<4x580xf32>
    %cst_61 = arith.constant dense<0.000000e+00> : vector<4x580xf32>
    %67 = tpu.matmul %65, %66, %cst_61 {dimension_numbers = #tpu.dot_dimension_numbers<[1], [0], [0], [1], [0, 0, 1, 1], [], []>} : vector<4x4xf32>, vector<4x580xf32>, vector<4x580xf32> -> vector<4x580xf32>
    %68 = arith.addf %63, %67 : vector<4x580xf32>
    %c1_62 = arith.constant 1 : index
    %c0_63 = arith.constant 0 : index
    %c0_64 = arith.constant 0 : index
    %69 = vector.load %arg4[%c1_62, %c0_63, %c0_64] : memref<9x4x4xf32, #tpu.memory_space<vmem>>, vector<1x4x4xf32>
    %70 = vector.shape_cast %69 : vector<1x4x4xf32> to vector<4x4xf32>
    %c0_65 = arith.constant 0 : index
    %c1_66 = arith.constant 1 : index
    %71 = vector.load %arg13[%c0_65, %c1_66] : memref<4x614xf32, #tpu.memory_space<vmem>>, vector<4x580xf32>
    %cst_67 = arith.constant dense<0.000000e+00> : vector<4x580xf32>
    %72 = tpu.matmul %70, %71, %cst_67 {dimension_numbers = #tpu.dot_dimension_numbers<[1], [0], [0], [1], [0, 0, 1, 1], [], []>} : vector<4x4xf32>, vector<4x580xf32>, vector<4x580xf32> -> vector<4x580xf32>
    %73 = arith.addf %68, %72 : vector<4x580xf32>
    %c2_68 = arith.constant 2 : index
    %c0_69 = arith.constant 0 : index
    %c0_70 = arith.constant 0 : index
    %74 = vector.load %arg4[%c2_68, %c0_69, %c0_70] : memref<9x4x4xf32, #tpu.memory_space<vmem>>, vector<1x4x4xf32>
    %75 = vector.shape_cast %74 : vector<1x4x4xf32> to vector<4x4xf32>
    %c0_71 = arith.constant 0 : index
    %c2_72 = arith.constant 2 : index
    %76 = vector.load %arg13[%c0_71, %c2_72] : memref<4x614xf32, #tpu.memory_space<vmem>>, vector<4x580xf32>
    %cst_73 = arith.constant dense<0.000000e+00> : vector<4x580xf32>
    %77 = tpu.matmul %75, %76, %cst_73 {dimension_numbers = #tpu.dot_dimension_numbers<[1], [0], [0], [1], [0, 0, 1, 1], [], []>} : vector<4x4xf32>, vector<4x580xf32>, vector<4x580xf32> -> vector<4x580xf32>
    %78 = arith.addf %73, %77 : vector<4x580xf32>
    %c3_74 = arith.constant 3 : index
    %c0_75 = arith.constant 0 : index
    %c0_76 = arith.constant 0 : index
    %79 = vector.load %arg4[%c3_74, %c0_75, %c0_76] : memref<9x4x4xf32, #tpu.memory_space<vmem>>, vector<1x4x4xf32>
    %80 = vector.shape_cast %79 : vector<1x4x4xf32> to vector<4x4xf32>
    %c0_77 = arith.constant 0 : index
    %c16_78 = arith.constant 16 : index
    %81 = vector.load %arg13[%c0_77, %c16_78] : memref<4x614xf32, #tpu.memory_space<vmem>>, vector<4x580xf32>
    %cst_79 = arith.constant dense<0.000000e+00> : vector<4x580xf32>
    %82 = tpu.matmul %80, %81, %cst_79 {dimension_numbers = #tpu.dot_dimension_numbers<[1], [0], [0], [1], [0, 0, 1, 1], [], []>} : vector<4x4xf32>, vector<4x580xf32>, vector<4x580xf32> -> vector<4x580xf32>
    %83 = arith.addf %78, %82 : vector<4x580xf32>
    %c4_80 = arith.constant 4 : index
    %c0_81 = arith.constant 0 : index
    %c0_82 = arith.constant 0 : index
    %84 = vector.load %arg4[%c4_80, %c0_81, %c0_82] : memref<9x4x4xf32, #tpu.memory_space<vmem>>, vector<1x4x4xf32>
    %85 = vector.shape_cast %84 : vector<1x4x4xf32> to vector<4x4xf32>
    %c0_83 = arith.constant 0 : index
    %c17_84 = arith.constant 17 : index
    %86 = vector.load %arg13[%c0_83, %c17_84] : memref<4x614xf32, #tpu.memory_space<vmem>>, vector<4x580xf32>
    %cst_85 = arith.constant dense<0.000000e+00> : vector<4x580xf32>
    %87 = tpu.matmul %85, %86, %cst_85 {dimension_numbers = #tpu.dot_dimension_numbers<[1], [0], [0], [1], [0, 0, 1, 1], [], []>} : vector<4x4xf32>, vector<4x580xf32>, vector<4x580xf32> -> vector<4x580xf32>
    %88 = arith.addf %83, %87 : vector<4x580xf32>
    %c5_86 = arith.constant 5 : index
    %c0_87 = arith.constant 0 : index
    %c0_88 = arith.constant 0 : index
    %89 = vector.load %arg4[%c5_86, %c0_87, %c0_88] : memref<9x4x4xf32, #tpu.memory_space<vmem>>, vector<1x4x4xf32>
    %90 = vector.shape_cast %89 : vector<1x4x4xf32> to vector<4x4xf32>
    %c0_89 = arith.constant 0 : index
    %c18_90 = arith.constant 18 : index
    %91 = vector.load %arg13[%c0_89, %c18_90] : memref<4x614xf32, #tpu.memory_space<vmem>>, vector<4x580xf32>
    %cst_91 = arith.constant dense<0.000000e+00> : vector<4x580xf32>
    %92 = tpu.matmul %90, %91, %cst_91 {dimension_numbers = #tpu.dot_dimension_numbers<[1], [0], [0], [1], [0, 0, 1, 1], [], []>} : vector<4x4xf32>, vector<4x580xf32>, vector<4x580xf32> -> vector<4x580xf32>
    %93 = arith.addf %88, %92 : vector<4x580xf32>
    %c6_92 = arith.constant 6 : index
    %c0_93 = arith.constant 0 : index
    %c0_94 = arith.constant 0 : index
    %94 = vector.load %arg4[%c6_92, %c0_93, %c0_94] : memref<9x4x4xf32, #tpu.memory_space<vmem>>, vector<1x4x4xf32>
    %95 = vector.shape_cast %94 : vector<1x4x4xf32> to vector<4x4xf32>
    %c0_95 = arith.constant 0 : index
    %c32_96 = arith.constant 32 : index
    %96 = vector.load %arg13[%c0_95, %c32_96] : memref<4x614xf32, #tpu.memory_space<vmem>>, vector<4x580xf32>
    %cst_97 = arith.constant dense<0.000000e+00> : vector<4x580xf32>
    %97 = tpu.matmul %95, %96, %cst_97 {dimension_numbers = #tpu.dot_dimension_numbers<[1], [0], [0], [1], [0, 0, 1, 1], [], []>} : vector<4x4xf32>, vector<4x580xf32>, vector<4x580xf32> -> vector<4x580xf32>
    %98 = arith.addf %93, %97 : vector<4x580xf32>
    %c7_98 = arith.constant 7 : index
    %c0_99 = arith.constant 0 : index
    %c0_100 = arith.constant 0 : index
    %99 = vector.load %arg4[%c7_98, %c0_99, %c0_100] : memref<9x4x4xf32, #tpu.memory_space<vmem>>, vector<1x4x4xf32>
    %100 = vector.shape_cast %99 : vector<1x4x4xf32> to vector<4x4xf32>
    %c0_101 = arith.constant 0 : index
    %c33_102 = arith.constant 33 : index
    %101 = vector.load %arg13[%c0_101, %c33_102] : memref<4x614xf32, #tpu.memory_space<vmem>>, vector<4x580xf32>
    %cst_103 = arith.constant dense<0.000000e+00> : vector<4x580xf32>
    %102 = tpu.matmul %100, %101, %cst_103 {dimension_numbers = #tpu.dot_dimension_numbers<[1], [0], [0], [1], [0, 0, 1, 1], [], []>} : vector<4x4xf32>, vector<4x580xf32>, vector<4x580xf32> -> vector<4x580xf32>
    %103 = arith.addf %98, %102 : vector<4x580xf32>
    %c8_104 = arith.constant 8 : index
    %c0_105 = arith.constant 0 : index
    %c0_106 = arith.constant 0 : index
    %104 = vector.load %arg4[%c8_104, %c0_105, %c0_106] : memref<9x4x4xf32, #tpu.memory_space<vmem>>, vector<1x4x4xf32>
    %105 = vector.shape_cast %104 : vector<1x4x4xf32> to vector<4x4xf32>
    %c0_107 = arith.constant 0 : index
    %c34_108 = arith.constant 34 : index
    %106 = vector.load %arg13[%c0_107, %c34_108] : memref<4x614xf32, #tpu.memory_space<vmem>>, vector<4x580xf32>
    %cst_109 = arith.constant dense<0.000000e+00> : vector<4x580xf32>
    %107 = tpu.matmul %105, %106, %cst_109 {dimension_numbers = #tpu.dot_dimension_numbers<[1], [0], [0], [1], [0, 0, 1, 1], [], []>} : vector<4x4xf32>, vector<4x580xf32>, vector<4x580xf32> -> vector<4x580xf32>
    %108 = arith.addf %103, %107 : vector<4x580xf32>
    %c0_110 = arith.constant 0 : index
    %c0_111 = arith.constant 0 : index
    %109 = vector.load %arg5[%c0_110, %c0_111] : memref<4x1xf32, #tpu.memory_space<vmem>>, vector<4x1xf32>
    %110 = vector.broadcast %109 : vector<4x1xf32> to vector<4x580xf32>
    %111 = arith.addf %108, %110 : vector<4x580xf32>
    %cst_112 = arith.constant 0.000000e+00 : f32
    %112 = vector.broadcast %cst_112 : f32 to vector<4x580xf32>
    %113 = arith.maximumf %111, %112 : vector<4x580xf32>
    %c0_113 = arith.constant 0 : index
    %c0_114 = arith.constant 0 : index
    %114 = vector.load %arg14[%c0_113, %c0_114] : memref<4x580xf32, #tpu.memory_space<vmem>>, vector<4x580xf32>
    tpu.vector_store %arg14[%c0_113, %c0_114], %113 {strides = array<i32>} : memref<4x580xf32, #tpu.memory_space<vmem>>, vector<4x580xf32>,
    %c0_115 = arith.constant 0 : index
    %c0_116 = arith.constant 0 : index
    %115 = vector.load %arg14[%c0_115, %c0_116] : memref<4x580xf32, #tpu.memory_space<vmem>>, vector<4x256xf32>
    %c0_117 = arith.constant 0 : index
    %c0_118 = arith.constant 0 : index
    %c0_119 = arith.constant 0 : index
    %116 = vector.load %arg15[%c0_117, %c0_118, %c0_119] : memref<4x2x256xf32, #tpu.memory_space<vmem>>, vector<4x1x256xf32>
    %117 = vector.shape_cast %116 : vector<4x1x256xf32> to vector<4x256xf32>
    %118 = vector.shape_cast %115 : vector<4x256xf32> to vector<4x1x256xf32>
    tpu.vector_store %arg15[%c0_117, %c0_118, %c0_119], %118 {strides = array<i32>} : memref<4x2x256xf32, #tpu.memory_space<vmem>>, vector<4x1x256xf32>,
    %c0_120 = arith.constant 0 : index
    %c290 = arith.constant 290 : index
    %119 = vector.load %arg14[%c0_120, %c290] : memref<4x580xf32, #tpu.memory_space<vmem>>, vector<4x256xf32>
    %c0_121 = arith.constant 0 : index
    %c1_122 = arith.constant 1 : index
    %c0_123 = arith.constant 0 : index
    %120 = vector.load %arg15[%c0_121, %c1_122, %c0_123] : memref<4x2x256xf32, #tpu.memory_space<vmem>>, vector<4x1x256xf32>
    %121 = vector.shape_cast %120 : vector<4x1x256xf32> to vector<4x256xf32>
    %122 = vector.shape_cast %119 : vector<4x256xf32> to vector<4x1x256xf32>
    tpu.vector_store %arg15[%c0_121, %c1_122, %c0_123], %122 {strides = array<i32>} : memref<4x2x256xf32, #tpu.memory_space<vmem>>, vector<4x1x256xf32>,
    %cst_124 = arith.constant 0.000000e+00 : f32
    %123 = vector.broadcast %cst_124 : f32 to vector<2x120xf32>
    %c0_125 = arith.constant 0 : index
    %c0_126 = arith.constant 0 : index
    %c0_127 = arith.constant 0 : index
    %124 = vector.load %arg15[%c0_125, %c0_126, %c0_127] : memref<4x2x256xf32, #tpu.memory_space<vmem>>, vector<1x2x256xf32>
    %125 = vector.shape_cast %124 : vector<1x2x256xf32> to vector<2x256xf32>
    %c0_128 = arith.constant 0 : index
    %c0_129 = arith.constant 0 : index
    %c0_130 = arith.constant 0 : index
    %126 = vector.load %arg6[%c0_128, %c0_129, %c0_130] : memref<4x256x120xf32, #tpu.memory_space<vmem>>, vector<1x256x120xf32>
    %127 = vector.shape_cast %126 : vector<1x256x120xf32> to vector<256x120xf32>
    %cst_131 = arith.constant dense<0.000000e+00> : vector<2x120xf32>
    %128 = tpu.matmul %125, %127, %cst_131 {dimension_numbers = #tpu.dot_dimension_numbers<[1], [0], [0], [1], [0, 0, 1, 1], [], []>} : vector<2x256xf32>, vector<256x120xf32>, vector<2x120xf32> -> vector<2x120xf32>
    %129 = arith.addf %123, %128 : vector<2x120xf32>
    %c1_132 = arith.constant 1 : index
    %c0_133 = arith.constant 0 : index
    %c0_134 = arith.constant 0 : index
    %130 = vector.load %arg15[%c1_132, %c0_133, %c0_134] : memref<4x2x256xf32, #tpu.memory_space<vmem>>, vector<1x2x256xf32>
    %131 = vector.shape_cast %130 : vector<1x2x256xf32> to vector<2x256xf32>
    %c1_135 = arith.constant 1 : index
    %c0_136 = arith.constant 0 : index
    %c0_137 = arith.constant 0 : index
    %132 = vector.load %arg6[%c1_135, %c0_136, %c0_137] : memref<4x256x120xf32, #tpu.memory_space<vmem>>, vector<1x256x120xf32>
    %133 = vector.shape_cast %132 : vector<1x256x120xf32> to vector<256x120xf32>
    %cst_138 = arith.constant dense<0.000000e+00> : vector<2x120xf32>
    %134 = tpu.matmul %131, %133, %cst_138 {dimension_numbers = #tpu.dot_dimension_numbers<[1], [0], [0], [1], [0, 0, 1, 1], [], []>} : vector<2x256xf32>, vector<256x120xf32>, vector<2x120xf32> -> vector<2x120xf32>
    %135 = arith.addf %129, %134 : vector<2x120xf32>
    %c2_139 = arith.constant 2 : index
    %c0_140 = arith.constant 0 : index
    %c0_141 = arith.constant 0 : index
    %136 = vector.load %arg15[%c2_139, %c0_140, %c0_141] : memref<4x2x256xf32, #tpu.memory_space<vmem>>, vector<1x2x256xf32>
    %137 = vector.shape_cast %136 : vector<1x2x256xf32> to vector<2x256xf32>
    %c2_142 = arith.constant 2 : index
    %c0_143 = arith.constant 0 : index
    %c0_144 = arith.constant 0 : index
    %138 = vector.load %arg6[%c2_142, %c0_143, %c0_144] : memref<4x256x120xf32, #tpu.memory_space<vmem>>, vector<1x256x120xf32>
    %139 = vector.shape_cast %138 : vector<1x256x120xf32> to vector<256x120xf32>
    %cst_145 = arith.constant dense<0.000000e+00> : vector<2x120xf32>
    %140 = tpu.matmul %137, %139, %cst_145 {dimension_numbers = #tpu.dot_dimension_numbers<[1], [0], [0], [1], [0, 0, 1, 1], [], []>} : vector<2x256xf32>, vector<256x120xf32>, vector<2x120xf32> -> vector<2x120xf32>
    %141 = arith.addf %135, %140 : vector<2x120xf32>
    %c3_146 = arith.constant 3 : index
    %c0_147 = arith.constant 0 : index
    %c0_148 = arith.constant 0 : index
    %142 = vector.load %arg15[%c3_146, %c0_147, %c0_148] : memref<4x2x256xf32, #tpu.memory_space<vmem>>, vector<1x2x256xf32>
    %143 = vector.shape_cast %142 : vector<1x2x256xf32> to vector<2x256xf32>
    %c3_149 = arith.constant 3 : index
    %c0_150 = arith.constant 0 : index
    %c0_151 = arith.constant 0 : index
    %144 = vector.load %arg6[%c3_149, %c0_150, %c0_151] : memref<4x256x120xf32, #tpu.memory_space<vmem>>, vector<1x256x120xf32>
    %145 = vector.shape_cast %144 : vector<1x256x120xf32> to vector<256x120xf32>
    %cst_152 = arith.constant dense<0.000000e+00> : vector<2x120xf32>
    %146 = tpu.matmul %143, %145, %cst_152 {dimension_numbers = #tpu.dot_dimension_numbers<[1], [0], [0], [1], [0, 0, 1, 1], [], []>} : vector<2x256xf32>, vector<256x120xf32>, vector<2x120xf32> -> vector<2x120xf32>
    %147 = arith.addf %141, %146 : vector<2x120xf32>
    %c0_153 = arith.constant 0 : index
    %c0_154 = arith.constant 0 : index
    %148 = vector.load %arg7[%c0_153, %c0_154] : memref<1x120xf32, #tpu.memory_space<vmem>>, vector<1x120xf32>
    %149 = vector.broadcast %148 : vector<1x120xf32> to vector<2x120xf32>
    %150 = arith.addf %147, %149 : vector<2x120xf32>
    %cst_155 = arith.constant 0.000000e+00 : f32
    %151 = vector.broadcast %cst_155 : f32 to vector<2x120xf32>
    %152 = arith.maximumf %150, %151 : vector<2x120xf32>
    %c0_156 = arith.constant 0 : index
    %c0_157 = arith.constant 0 : index
    %153 = vector.load %arg8[%c0_156, %c0_157] : memref<120x84xf32, #tpu.memory_space<vmem>>, vector<120x84xf32>
    %cst_158 = arith.constant dense<0.000000e+00> : vector<2x84xf32>
    %154 = tpu.matmul %152, %153, %cst_158 {dimension_numbers = #tpu.dot_dimension_numbers<[1], [0], [0], [1], [0, 0, 1, 1], [], []>} : vector<2x120xf32>, vector<120x84xf32>, vector<2x84xf32> -> vector<2x84xf32>
    %c0_159 = arith.constant 0 : index
    %c0_160 = arith.constant 0 : index
    %155 = vector.load %arg9[%c0_159, %c0_160] : memref<1x84xf32, #tpu.memory_space<vmem>>, vector<1x84xf32>
    %156 = vector.broadcast %155 : vector<1x84xf32> to vector<2x84xf32>
    %157 = arith.addf %154, %156 : vector<2x84xf32>
    %cst_161 = arith.constant 0.000000e+00 : f32
    %158 = vector.broadcast %cst_161 : f32 to vector<2x84xf32>
    %159 = arith.maximumf %157, %158 : vector<2x84xf32>
    %c0_162 = arith.constant 0 : index
    %c0_163 = arith.constant 0 : index
    %160 = vector.load %arg10[%c0_162, %c0_163] : memref<84x128xf32, #tpu.memory_space<vmem>>, vector<84x128xf32>
    %cst_164 = arith.constant dense<0.000000e+00> : vector<2x128xf32>
    %161 = tpu.matmul %159, %160, %cst_164 {dimension_numbers = #tpu.dot_dimension_numbers<[1], [0], [0], [1], [0, 0, 1, 1], [], []>} : vector<2x84xf32>, vector<84x128xf32>, vector<2x128xf32> -> vector<2x128xf32>
    %c0_165 = arith.constant 0 : index
    %c0_166 = arith.constant 0 : index
    %162 = vector.load %arg11[%c0_165, %c0_166] : memref<1x128xf32, #tpu.memory_space<vmem>>, vector<1x128xf32>
    %163 = vector.broadcast %162 : vector<1x128xf32> to vector<2x128xf32>
    %164 = arith.addf %161, %163 : vector<2x128xf32>
    %c0_167 = arith.constant 0 : index
    %c0_168 = arith.constant 0 : index
    %c0_169 = arith.constant 0 : index
    %165 = vector.load %arg12[%c0_167, %c0_168, %c0_169] : memref<1x2x128xf32, #tpu.memory_space<vmem>>, vector<1x2x128xf32>
    %166 = vector.shape_cast %165 : vector<1x2x128xf32> to vector<2x128xf32>
    %167 = vector.shape_cast %164 : vector<2x128xf32> to vector<1x2x128xf32>
    tpu.vector_store %arg12[%c0_167, %c0_168, %c0_169], %167 {strides = array<i32>} : memref<1x2x128xf32, #tpu.memory_space<vmem>>, vector<1x2x128xf32>,
    return
  }
  func.func @transform_0(%arg0: i32) -> (i32, i32, i32) {
    %c0_i32 = arith.constant 0 : i32
    %c0_i32_0 = arith.constant 0 : i32
    %c0_i32_1 = arith.constant 0 : i32
    return %arg0, %c0_i32, %c0_i32_0 : i32, i32, i32
  }
  func.func @transform_1(%arg0: i32) -> (i32, i32, i32) {
    %c0_i32 = arith.constant 0 : i32
    %c0_i32_0 = arith.constant 0 : i32
    %c0_i32_1 = arith.constant 0 : i32
    %c0_i32_2 = arith.constant 0 : i32
    return %c0_i32, %c0_i32_0, %c0_i32_1 : i32, i32, i32
  }
  func.func @transform_2(%arg0: i32) -> (i32, i32) {
    %c0_i32 = arith.constant 0 : i32
    %c0_i32_0 = arith.constant 0 : i32
    %c0_i32_1 = arith.constant 0 : i32
    return %c0_i32, %c0_i32_0 : i32, i32
  }
  func.func @transform_3(%arg0: i32) -> (i32, i32, i32) {
    %c0_i32 = arith.constant 0 : i32
    %c0_i32_0 = arith.constant 0 : i32
    %c0_i32_1 = arith.constant 0 : i32
    %c0_i32_2 = arith.constant 0 : i32
    return %c0_i32, %c0_i32_0, %c0_i32_1 : i32, i32, i32
  }
  func.func @transform_4(%arg0: i32) -> (i32, i32) {
    %c0_i32 = arith.constant 0 : i32
    %c0_i32_0 = arith.constant 0 : i32
    %c0_i32_1 = arith.constant 0 : i32
    return %c0_i32, %c0_i32_0 : i32, i32
  }
  func.func @transform_5(%arg0: i32) -> (i32, i32, i32) {
    %c0_i32 = arith.constant 0 : i32
    %c0_i32_0 = arith.constant 0 : i32
    %c0_i32_1 = arith.constant 0 : i32
    %c0_i32_2 = arith.constant 0 : i32
    return %c0_i32, %c0_i32_0, %c0_i32_1 : i32, i32, i32
  }
  func.func @transform_6(%arg0: i32) -> (i32, i32) {
    %c0_i32 = arith.constant 0 : i32
    %c0_i32_0 = arith.constant 0 : i32
    %c0_i32_1 = arith.constant 0 : i32
    return %c0_i32, %c0_i32_0 : i32, i32
  }
  func.func @transform_7(%arg0: i32) -> (i32, i32) {
    %c0_i32 = arith.constant 0 : i32
    %c0_i32_0 = arith.constant 0 : i32
    %c0_i32_1 = arith.constant 0 : i32
    return %c0_i32, %c0_i32_0 : i32, i32
  }
  func.func @transform_8(%arg0: i32) -> (i32, i32) {
    %c0_i32 = arith.constant 0 : i32
    %c0_i32_0 = arith.constant 0 : i32
    %c0_i32_1 = arith.constant 0 : i32
    return %c0_i32, %c0_i32_0 : i32, i32
  }
  func.func @transform_9(%arg0: i32) -> (i32, i32) {
    %c0_i32 = arith.constant 0 : i32
    %c0_i32_0 = arith.constant 0 : i32
    %c0_i32_1 = arith.constant 0 : i32
    return %c0_i32, %c0_i32_0 : i32, i32
  }
  func.func @transform_10(%arg0: i32) -> (i32, i32) {
    %c0_i32 = arith.constant 0 : i32
    %c0_i32_0 = arith.constant 0 : i32
    %c0_i32_1 = arith.constant 0 : i32
    return %c0_i32, %c0_i32_0 : i32, i32
  }
  func.func @transform_11(%arg0: i32) -> (i32, i32, i32) {
    %c0_i32 = arith.constant 0 : i32
    %c0_i32_0 = arith.constant 0 : i32
    %c0_i32_1 = arith.constant 0 : i32
    return %arg0, %c0_i32, %c0_i32_0 : i32, i32, i32
  }
}

</mosaic_0001>

<llo_original>
// kernel: tpu_custom_call.1
$region0: #{tpu_custom_call.1}
  #allocation0 [shape = 'u32[]', space=smem, size = 0x4, offset = 0x4, fixed_abs, tag = 'smem constant byte address 0x4 - core index']
  #allocation1 [shape = 'u32[72,128]{1,0:T(1,128)}', space=vmem, size = 0x9000, scoped, tag = 'internal scratch']
  #allocation2 [shape = 'f32[4,614]{1,0:T(4,128)}', space=vmem, size = 0x2800, scoped, tag = 'scratch operand']
  #allocation3 [shape = 'f32[4,580]{1,0:T(4,128)}', space=vmem, size = 0x2800, scoped, tag = 'scratch operand']
  #allocation4 [shape = 'f32[4,2,256]{2,1,0:T(2,128)}', space=vmem, size = 0x2000, scoped, tag = 'scratch operand']
  %s0 = inlined_call_operand.vmem [shape: f32[1,4,614], index: 0, kind: input, shape index: {}]
  %s1 = inlined_call_operand.vmem [shape: f32[9,4,4], index: 1, kind: input, shape index: {}]
  %s2 = inlined_call_operand.vmem [shape: f32[4,1], index: 2, kind: input, shape index: {}]
  %s3 = inlined_call_operand.vmem [shape: f32[9,4,4], index: 3, kind: input, shape index: {}]
  %s4 = inlined_call_operand.vmem [shape: f32[4,1], index: 4, kind: input, shape index: {}]
  %s5 = inlined_call_operand.vmem [shape: f32[4,256,120], index: 5, kind: input, shape index: {}]
  %s6 = inlined_call_operand.vmem [shape: f32[1,120], index: 6, kind: input, shape index: {}]
  %s7 = inlined_call_operand.vmem [shape: f32[120,84], index: 7, kind: input, shape index: {}]
  %s8 = inlined_call_operand.vmem [shape: f32[1,84], index: 8, kind: input, shape index: {}]
  %s9 = inlined_call_operand.vmem [shape: f32[84,128], index: 9, kind: input, shape index: {}]
  %s10 = inlined_call_operand.vmem [shape: f32[1,128], index: 10, kind: input, shape index: {}]
  %s11 = inlined_call_operand.hbm [shape: f32[1,2,128], index: 11, kind: output, shape index: {}]
  %s12 = sld [smem:[#allocation0]]
  $region54: #{tpu_custom_call.1} parent=0
    _
  %s14 = ssub.s32 1, %s12
  %s15 = scalar_select 0, %s14, %s12
  $region1: #{tpu_custom_call.1} parent=0
    #allocation5 [shape = 'u8[1024]{0}', space=vmem, size = 0x400, scoped, tag = 'output window, operand 0, single buffered']
    #allocation6 [shape = 's32[1]{0}', space=sflag, size = 0x4, scoped, tag = 'scoped memory for tpu_custom_call.1']
    %16 = vsyncpa [#allocation6], 0
    // Predicated region
    $region2: #{tpu_custom_call.1} parent=1 // pred_check
      _
    $region3: #{tpu_custom_call.1} parent=1 // pred_check_branch
      %18 = sbr.rel (0) target = $region5
    $region4: #{tpu_custom_call.1} parent=1 // pred_region
      _
    $region5: #{tpu_custom_call.1} parent=1 // pred_fallthru
      _
    // Predicated region
    $region6: #{tpu_custom_call.1} parent=1 // pred_check
      _
    $region7: #{tpu_custom_call.1} parent=1 // pred_check_branch
      %20 = sbr.rel (0) target = $region9
    $region8: #{tpu_custom_call.1} parent=1 // pred_region
      _
    $region9: #{tpu_custom_call.1} parent=1 // pred_fallthru
      _
    // Predicated region
    $region10: #{tpu_custom_call.1} parent=1 // pred_check
      _
    $region11: #{tpu_custom_call.1} parent=1 // pred_check_branch
      %22 = sbr.rel (0) target = $region13
    $region12: #{tpu_custom_call.1} parent=1 // pred_region
      _
    $region13: #{tpu_custom_call.1} parent=1 // pred_fallthru
      _
    // Predicated region
    $region14: #{tpu_custom_call.1} parent=1 // pred_check
      _
    $region15: #{tpu_custom_call.1} parent=1 // pred_check_branch
      %24 = sbr.rel (0) target = $region17
    $region16: #{tpu_custom_call.1} parent=1 // pred_region
      _
    $region17: #{tpu_custom_call.1} parent=1 // pred_fallthru
      _
    // Predicated region
    $region18: #{tpu_custom_call.1} parent=1 // pred_check
      _
    $region19: #{tpu_custom_call.1} parent=1 // pred_check_branch
      %26 = sbr.rel (0) target = $region21
    $region20: #{tpu_custom_call.1} parent=1 // pred_region
      _
    $region21: #{tpu_custom_call.1} parent=1 // pred_fallthru
      _
    // Predicated region
    $region22: #{tpu_custom_call.1} parent=1 // pred_check
      _
    $region23: #{tpu_custom_call.1} parent=1 // pred_check_branch
      %28 = sbr.rel (0) target = $region25
    $region24: #{tpu_custom_call.1} parent=1 // pred_region
      _
    $region25: #{tpu_custom_call.1} parent=1 // pred_fallthru
      _
    // Predicated region
    $region26: #{tpu_custom_call.1} parent=1 // pred_check
      _
    $region27: #{tpu_custom_call.1} parent=1 // pred_check_branch
      %30 = sbr.rel (0) target = $region29
    $region28: #{tpu_custom_call.1} parent=1 // pred_region
      _
    $region29: #{tpu_custom_call.1} parent=1 // pred_fallthru
      _
    // Predicated region
    $region30: #{tpu_custom_call.1} parent=1 // pred_check
      _
    $region31: #{tpu_custom_call.1} parent=1 // pred_check_branch
      %32 = sbr.rel (0) target = $region33
    $region32: #{tpu_custom_call.1} parent=1 // pred_region
      _
    $region33: #{tpu_custom_call.1} parent=1 // pred_fallthru
      _
    // Predicated region
    $region34: #{tpu_custom_call.1} parent=1 // pred_check
      _
    $region35: #{tpu_custom_call.1} parent=1 // pred_check_branch
      %34 = sbr.rel (0) target = $region37
    $region36: #{tpu_custom_call.1} parent=1 // pred_region
      _
    $region37: #{tpu_custom_call.1} parent=1 // pred_fallthru
      _
    // Predicated region
    $region38: #{tpu_custom_call.1} parent=1 // pred_check
      _
    $region39: #{tpu_custom_call.1} parent=1 // pred_check_branch
      %36 = sbr.rel (0) target = $region41
    $region40: #{tpu_custom_call.1} parent=1 // pred_region
      _
    $region41: #{tpu_custom_call.1} parent=1 // pred_fallthru
      _
    // Predicated region
    $region42: #{tpu_custom_call.1} parent=1 // pred_check
      _
    $region43: #{tpu_custom_call.1} parent=1 // pred_check_branch
      %38 = sbr.rel (0) target = $region45
    $region44: #{tpu_custom_call.1} parent=1 // pred_region
      _
    $region45: #{tpu_custom_call.1} parent=1 // pred_fallthru
      _
    %v39 = vld [vmem:[%s1] sm:$0xf]
    %v40 = vld [vmem:[%s0] sm:$0xff]
    %v41 = vld [vmem:[%s0 + $0x8] sm:$0xff]
    %v42 = vld [vmem:[%s0 + $0x10] sm:$0xf]
    %s43 = scalar_lea.vmem %s1, 4
    %v44 = vld [vmem:[%s43] sm:$0xf]
    %48 = vst [vmem:[#allocation1] ss:$2 sm:$0xff] %v40
    %s49 = scalar_lea.vmem [#allocation1], 16
    %50 = vst [vmem:[%s49] ss:$2 sm:$0xff] %v41
    %s51 = scalar_lea.vmem [#allocation1], 32
    %52 = vst [vmem:[%s51] ss:$2 sm:$0xff] %v42
    %v53 = vld.sshfl [vmem:[#allocation1] sm:$0xff pattern:$0x75316420]
    %v54 = vld.sshfl [vmem:[#allocation1 + $0x8] sm:$0xff pattern:$0x75316420]
    %v55 = vld.sshfl [vmem:[#allocation1 + $0x10] sm:$0xff pattern:$0x75316420]
    %v56 = vld.sshfl [vmem:[#allocation1 + $0x18] sm:$0xff pattern:$0x75316420]
    %v57 = vld.sshfl [vmem:[#allocation1 + $0x20] sm:$0xff pattern:$0x75316420]
    %58 = vrot.lane.b32.xlu0 %v53, 127
    %v59 = vpop.permute.xlu0 %58
    %60 = vrot.lane.b32.xlu0 %v54, 127
    %v61 = vpop.permute.xlu0 %60
    %62 = vrot.lane.b32.xlu0 %v55, 127
    %v63 = vpop.permute.xlu0 %62
    %64 = vrot.lane.b32.xlu0 %v56, 127
    %v65 = vpop.permute.xlu0 %64
    %66 = vrot.lane.b32.xlu0 %v57, 127
    %v67 = vpop.permute.xlu0 %66
    %vm68 = vcmask 1039360
    %v69 = vsel %vm68, %v59, %v61
    %v70 = vsel %vm68, %v61, %v63
    %v71 = vsel %vm68, %v63, %v65
    %v72 = vsel %vm68, %v65, %v67
    %vm73 = vcmask 31744
    %v75 = vsel %vm73, %v44, 0
    %vm77 = vcmask 1043456
    %v78 = vsel %vm77, %v69, 0
    %v80 = vsel %vm77, %v70, 0
    %v82 = vsel %vm77, %v71, 0
    %v84 = vsel %vm77, %v72, 0
    %v86 = vsel %vm77, %v67, 0
    %88 = vmatpush.msra.mxu0 0.0
    %89 = vmatpush.msra.mxu0 0.0
    %90 = vmatpush.msra.mxu0 0.0
    %91 = vmatpush.msra.mxu0 0.0
    %92 = vmatpush.msra.mxu0 0.0
    %93 = vmatpush.msra.mxu0 0.0
    %94 = vmatpush.msra.mxu0 0.0
    %95 = vmatpush.msra.mxu0 0.0
    %96 = vmatpush.msra.mxu0 0.0
    %97 = vmatpush.msra.mxu0 0.0
    %98 = vmatpush.msra.mxu0 0.0
    %99 = vmatpush.msra.mxu0 0.0
    %100 = vmatpush.msra.mxu0 0.0
    %101 = vmatpush.msra.mxu0 0.0
    %102 = vmatpush.msra.mxu0 0.0
    %103 = vmatpush.msra.mxu0 %v78
    %104 = vmatmul.f32.gmra.mxu0 %v75
    %v105 = vpop.f32.mrf.mxu0
    %v106 = vadd.f32 0.0, %v105
    %107 = vdwg.mxu0
    %108 = vmatpush.msra.mxu0 0.0
    %109 = vmatpush.msra.mxu0 0.0
    %110 = vmatpush.msra.mxu0 0.0
    %111 = vmatpush.msra.mxu0 0.0
    %112 = vmatpush.msra.mxu0 0.0
    %113 = vmatpush.msra.mxu0 0.0
    %114 = vmatpush.msra.mxu0 0.0
    %115 = vmatpush.msra.mxu0 0.0
    %116 = vmatpush.msra.mxu0 0.0
    %117 = vmatpush.msra.mxu0 0.0
    %118 = vmatpush.msra.mxu0 0.0
    %119 = vmatpush.msra.mxu0 0.0
    %120 = vmatpush.msra.mxu0 0.0
    %121 = vmatpush.msra.mxu0 0.0
    %122 = vmatpush.msra.mxu0 0.0
    %123 = vmatpush.msra.mxu0 %v80
    %124 = vmatmul.f32.gmra.mxu0 %v75
    %v125 = vpop.f32.mrf.mxu0
    %v126 = vadd.f32 0.0, %v125
    %127 = vdwg.mxu0
    %128 = vmatpush.msra.mxu0 0.0
    %129 = vmatpush.msra.mxu0 0.0
    %130 = vmatpush.msra.mxu0 0.0
    %131 = vmatpush.msra.mxu0 0.0
    %132 = vmatpush.msra.mxu0 0.0
    %133 = vmatpush.msra.mxu0 0.0
    %134 = vmatpush.msra.mxu0 0.0
    %135 = vmatpush.msra.mxu0 0.0
    %136 = vmatpush.msra.mxu0 0.0
    %137 = vmatpush.msra.mxu0 0.0
    %138 = vmatpush.msra.mxu0 0.0
    %139 = vmatpush.msra.mxu0 0.0
    %140 = vmatpush.msra.mxu0 0.0
    %141 = vmatpush.msra.mxu0 0.0
    %142 = vmatpush.msra.mxu0 0.0
    %143 = vmatpush.msra.mxu0 %v82
    %144 = vmatmul.f32.gmra.mxu0 %v75
    %v145 = vpop.f32.mrf.mxu0
    %v146 = vadd.f32 0.0, %v145
    %147 = vdwg.mxu0
    %148 = vmatpush.msra.mxu0 0.0
    %149 = vmatpush.msra.mxu0 0.0
    %150 = vmatpush.msra.mxu0 0.0
    %151 = vmatpush.msra.mxu0 0.0
    %152 = vmatpush.msra.mxu0 0.0
    %153 = vmatpush.msra.mxu0 0.0
    %154 = vmatpush.msra.mxu0 0.0
    %155 = vmatpush.msra.mxu0 0.0
    %156 = vmatpush.msra.mxu0 0.0
    %157 = vmatpush.msra.mxu0 0.0
    %158 = vmatpush.msra.mxu0 0.0
    %159 = vmatpush.msra.mxu0 0.0
    %160 = vmatpush.msra.mxu0 0.0
    %161 = vmatpush.msra.mxu0 0.0
    %162 = vmatpush.msra.mxu0 0.0
    %163 = vmatpush.msra.mxu0 %v84
    %164 = vmatmul.f32.gmra.mxu0 %v75
    %v165 = vpop.f32.mrf.mxu0
    %v166 = vadd.f32 0.0, %v165
    %167 = vdwg.mxu0
    %168 = vmatpush.msra.mxu0 0.0
    %169 = vmatpush.msra.mxu0 0.0
    %170 = vmatpush.msra.mxu0 0.0
    %171 = vmatpush.msra.mxu0 0.0
    %172 = vmatpush.msra.mxu0 0.0
    %173 = vmatpush.msra.mxu0 0.0
    %174 = vmatpush.msra.mxu0 0.0
    %175 = vmatpush.msra.mxu0 0.0
    %176 = vmatpush.msra.mxu0 0.0
    %177 = vmatpush.msra.mxu0 0.0
    %178 = vmatpush.msra.mxu0 0.0
    %179 = vmatpush.msra.mxu0 0.0
    %180 = vmatpush.msra.mxu0 0.0
    %181 = vmatpush.msra.mxu0 0.0
    %182 = vmatpush.msra.mxu0 0.0
    %183 = vmatpush.msra.mxu0 %v86
    %184 = vmatmul.f32.gmra.mxu0 %v75
    %v185 = vpop.f32.mrf.mxu0
    %v186 = vadd.f32 0.0, %v185
    %187 = vdwg.mxu0
    %188 = vst [vmem:[#allocation1] ss:$2 sm:$0xff] %v40
    %s189 = scalar_lea.vmem [#allocation1], 16
    %190 = vst [vmem:[%s189] ss:$2 sm:$0xff] %v41
    %s191 = scalar_lea.vmem [#allocation1], 32
    %192 = vst [vmem:[%s191] ss:$2 sm:$0xff] %v42
    %v193 = vld.sshfl [vmem:[#allocation1] sm:$0xff pattern:$0x75316420]
    %v194 = vld.sshfl [vmem:[#allocation1 + $0x8] sm:$0xff pattern:$0x75316420]
    %v195 = vld.sshfl [vmem:[#allocation1 + $0x10] sm:$0xff pattern:$0x75316420]
    %v196 = vld.sshfl [vmem:[#allocation1 + $0x18] sm:$0xff pattern:$0x75316420]
    %v197 = vld.sshfl [vmem:[#allocation1 + $0x20] sm:$0xff pattern:$0x75316420]
    %v199 = vsel %vm73, %v39, 0
    %v201 = vsel %vm77, %v193, 0
    %v203 = vsel %vm77, %v194, 0
    %v205 = vsel %vm77, %v195, 0
    %v207 = vsel %vm77, %v196, 0
    %v209 = vsel %vm77, %v197, 0
    %211 = vmatpush.msra.mxu0 0.0
    %212 = vmatpush.msra.mxu0 0.0
    %213 = vmatpush.msra.mxu0 0.0
    %214 = vmatpush.msra.mxu0 0.0
    %215 = vmatpush.msra.mxu0 0.0
    %216 = vmatpush.msra.mxu0 0.0
    %217 = vmatpush.msra.mxu0 0.0
    %218 = vmatpush.msra.mxu0 0.0
    %219 = vmatpush.msra.mxu0 0.0
    %220 = vmatpush.msra.mxu0 0.0
    %221 = vmatpush.msra.mxu0 0.0
    %222 = vmatpush.msra.mxu0 0.0
    %223 = vmatpush.msra.mxu0 0.0
    %224 = vmatpush.msra.mxu0 0.0
    %225 = vmatpush.msra.mxu0 0.0
    %226 = vmatpush.msra.mxu0 %v201
    %227 = vmatmul.f32.gmra.mxu0 %v199
    %v228 = vpop.f32.mrf.mxu0
    %v229 = vadd.f32 %v106, %v228
    %230 = vdwg.mxu0
    %231 = vmatpush.msra.mxu0 0.0
    %232 = vmatpush.msra.mxu0 0.0
    %233 = vmatpush.msra.mxu0 0.0
    %234 = vmatpush.msra.mxu0 0.0
    %235 = vmatpush.msra.mxu0 0.0
    %236 = vmatpush.msra.mxu0 0.0
    %237 = vmatpush.msra.mxu0 0.0
    %238 = vmatpush.msra.mxu0 0.0
    %239 = vmatpush.msra.mxu0 0.0
    %240 = vmatpush.msra.mxu0 0.0
    %241 = vmatpush.msra.mxu0 0.0
    %242 = vmatpush.msra.mxu0 0.0
    %243 = vmatpush.msra.mxu0 0.0
    %244 = vmatpush.msra.mxu0 0.0
    %245 = vmatpush.msra.mxu0 0.0
    %246 = vmatpush.msra.mxu0 %v203
    %247 = vmatmul.f32.gmra.mxu0 %v199
    %v248 = vpop.f32.mrf.mxu0
    %v249 = vadd.f32 %v126, %v248
    %250 = vdwg.mxu0
    %251 = vmatpush.msra.mxu0 0.0
    %252 = vmatpush.msra.mxu0 0.0
    %253 = vmatpush.msra.mxu0 0.0
    %254 = vmatpush.msra.mxu0 0.0
    %255 = vmatpush.msra.mxu0 0.0
    %256 = vmatpush.msra.mxu0 0.0
    %257 = vmatpush.msra.mxu0 0.0
    %258 = vmatpush.msra.mxu0 0.0
    %259 = vmatpush.msra.mxu0 0.0
    %260 = vmatpush.msra.mxu0 0.0
    %261 = vmatpush.msra.mxu0 0.0
    %262 = vmatpush.msra.mxu0 0.0
    %263 = vmatpush.msra.mxu0 0.0
    %264 = vmatpush.msra.mxu0 0.0
    %265 = vmatpush.msra.mxu0 0.0
    %266 = vmatpush.msra.mxu0 %v205
    %267 = vmatmul.f32.gmra.mxu0 %v199
    %v268 = vpop.f32.mrf.mxu0
    %v269 = vadd.f32 %v146, %v268
    %270 = vdwg.mxu0
    %271 = vmatpush.msra.mxu0 0.0
    %272 = vmatpush.msra.mxu0 0.0
    %273 = vmatpush.msra.mxu0 0.0
    %274 = vmatpush.msra.mxu0 0.0
    %275 = vmatpush.msra.mxu0 0.0
    %276 = vmatpush.msra.mxu0 0.0
    %277 = vmatpush.msra.mxu0 0.0
    %278 = vmatpush.msra.mxu0 0.0
    %279 = vmatpush.msra.mxu0 0.0
    %280 = vmatpush.msra.mxu0 0.0
    %281 = vmatpush.msra.mxu0 0.0
    %282 = vmatpush.msra.mxu0 0.0
    %283 = vmatpush.msra.mxu0 0.0
    %284 = vmatpush.msra.mxu0 0.0
    %285 = vmatpush.msra.mxu0 0.0
    %286 = vmatpush.msra.mxu0 %v207
    %287 = vmatmul.f32.gmra.mxu0 %v199
    %v288 = vpop.f32.mrf.mxu0
    %v289 = vadd.f32 %v166, %v288
    %290 = vdwg.mxu0
    %291 = vmatpush.msra.mxu0 0.0
    %292 = vmatpush.msra.mxu0 0.0
    %293 = vmatpush.msra.mxu0 0.0
    %294 = vmatpush.msra.mxu0 0.0
    %295 = vmatpush.msra.mxu0 0.0
    %296 = vmatpush.msra.mxu0 0.0
    %297 = vmatpush.msra.mxu0 0.0
    %298 = vmatpush.msra.mxu0 0.0
    %299 = vmatpush.msra.mxu0 0.0
    %300 = vmatpush.msra.mxu0 0.0
    %301 = vmatpush.msra.mxu0 0.0
    %302 = vmatpush.msra.mxu0 0.0
    %303 = vmatpush.msra.mxu0 0.0
    %304 = vmatpush.msra.mxu0 0.0
    %305 = vmatpush.msra.mxu0 0.0
    %306 = vmatpush.msra.mxu0 %v209
    %307 = vmatmul.f32.gmra.mxu0 %v199
    %v308 = vpop.f32.mrf.mxu0
    %v309 = vadd.f32 %v186, %v308
    %310 = vdwg.mxu0
    %s311 = scalar_lea.vmem %s1, 8
    %v312 = vld [vmem:[%s311] sm:$0xf]
    %v313 = vld [vmem:[%s0] sm:$0xff]
    %v314 = vld [vmem:[%s0 + $0x8] sm:$0xff]
    %v315 = vld [vmem:[%s0 + $0x10] sm:$0xf]
    %319 = vst [vmem:[#allocation1] ss:$2 sm:$0xff] %v313
    %s320 = scalar_lea.vmem [#allocation1], 16
    %321 = vst [vmem:[%s320] ss:$2 sm:$0xff] %v314
    %s322 = scalar_lea.vmem [#allocation1], 32
    %323 = vst [vmem:[%s322] ss:$2 sm:$0xff] %v315
    %v324 = vld.sshfl [vmem:[#allocation1] sm:$0xff pattern:$0x75316420]
    %v325 = vld.sshfl [vmem:[#allocation1 + $0x8] sm:$0xff pattern:$0x75316420]
    %v326 = vld.sshfl [vmem:[#allocation1 + $0x10] sm:$0xff pattern:$0x75316420]
    %v327 = vld.sshfl [vmem:[#allocation1 + $0x18] sm:$0xff pattern:$0x75316420]
    %v328 = vld.sshfl [vmem:[#allocation1 + $0x20] sm:$0xff pattern:$0x75316420]
    %329 = vrot.lane.b32.xlu0 %v324, 126
    %v330 = vpop.permute.xlu0 %329
    %331 = vrot.lane.b32.xlu0 %v325, 126
    %v332 = vpop.permute.xlu0 %331
    %333 = vrot.lane.b32.xlu0 %v326, 126
    %v334 = vpop.permute.xlu0 %333
    %335 = vrot.lane.b32.xlu0 %v327, 126
    %v336 = vpop.permute.xlu0 %335
    %337 = vrot.lane.b32.xlu0 %v328, 126
    %v338 = vpop.permute.xlu0 %337
    %vm339 = vcmask 1031168
    %v340 = vsel %vm339, %v330, %v332
    %v341 = vsel %vm339, %v332, %v334
    %v342 = vsel %vm339, %v334, %v336
    %v343 = vsel %vm339, %v336, %v338
    %v345 = vsel %vm73, %v312, 0
    %v347 = vsel %vm77, %v340, 0
    %v349 = vsel %vm77, %v341, 0
    %v351 = vsel %vm77, %v342, 0
    %v353 = vsel %vm77, %v343, 0
    %v355 = vsel %vm77, %v338, 0
    %357 = vmatpush.msra.mxu0 0.0
    %358 = vmatpush.msra.mxu0 0.0
    %359 = vmatpush.msra.mxu0 0.0
    %360 = vmatpush.msra.mxu0 0.0
    %361 = vmatpush.msra.mxu0 0.0
    %362 = vmatpush.msra.mxu0 0.0
    %363 = vmatpush.msra.mxu0 0.0
    %364 = vmatpush.msra.mxu0 0.0
    %365 = vmatpush.msra.mxu0 0.0
    %366 = vmatpush.msra.mxu0 0.0
    %367 = vmatpush.msra.mxu0 0.0
    %368 = vmatpush.msra.mxu0 0.0
    %369 = vmatpush.msra.mxu0 0.0
    %370 = vmatpush.msra.mxu0 0.0
    %371 = vmatpush.msra.mxu0 0.0
    %372 = vmatpush.msra.mxu0 %v347
    %373 = vmatmul.f32.gmra.mxu0 %v345
    %v374 = vpop.f32.mrf.mxu0
    %v375 = vadd.f32 0.0, %v374
    %376 = vdwg.mxu0
    %377 = vmatpush.msra.mxu0 0.0
    %378 = vmatpush.msra.mxu0 0.0
    %379 = vmatpush.msra.mxu0 0.0
    %380 = vmatpush.msra.mxu0 0.0
    %381 = vmatpush.msra.mxu0 0.0
    %382 = vmatpush.msra.mxu0 0.0
    %383 = vmatpush.msra.mxu0 0.0
    %384 = vmatpush.msra.mxu0 0.0
    %385 = vmatpush.msra.mxu0 0.0
    %386 = vmatpush.msra.mxu0 0.0
    %387 = vmatpush.msra.mxu0 0.0
    %388 = vmatpush.msra.mxu0 0.0
    %389 = vmatpush.msra.mxu0 0.0
    %390 = vmatpush.msra.mxu0 0.0
    %391 = vmatpush.msra.mxu0 0.0
    %392 = vmatpush.msra.mxu0 %v349
    %393 = vmatmul.f32.gmra.mxu0 %v345
    %v394 = vpop.f32.mrf.mxu0
    %v395 = vadd.f32 0.0, %v394
    %396 = vdwg.mxu0
    %397 = vmatpush.msra.mxu0 0.0
    %398 = vmatpush.msra.mxu0 0.0
    %399 = vmatpush.msra.mxu0 0.0
    %400 = vmatpush.msra.mxu0 0.0
    %401 = vmatpush.msra.mxu0 0.0
    %402 = vmatpush.msra.mxu0 0.0
    %403 = vmatpush.msra.mxu0 0.0
    %404 = vmatpush.msra.mxu0 0.0
    %405 = vmatpush.msra.mxu0 0.0
    %406 = vmatpush.msra.mxu0 0.0
    %407 = vmatpush.msra.mxu0 0.0
    %408 = vmatpush.msra.mxu0 0.0
    %409 = vmatpush.msra.mxu0 0.0
    %410 = vmatpush.msra.mxu0 0.0
    %411 = vmatpush.msra.mxu0 0.0
    %412 = vmatpush.msra.mxu0 %v351
    %413 = vmatmul.f32.gmra.mxu0 %v345
    %v414 = vpop.f32.mrf.mxu0
    %v415 = vadd.f32 0.0, %v414
    %416 = vdwg.mxu0
    %417 = vmatpush.msra.mxu0 0.0
    %418 = vmatpush.msra.mxu0 0.0
    %419 = vmatpush.msra.mxu0 0.0
    %420 = vmatpush.msra.mxu0 0.0
    %421 = vmatpush.msra.mxu0 0.0
    %422 = vmatpush.msra.mxu0 0.0
    %423 = vmatpush.msra.mxu0 0.0
    %424 = vmatpush.msra.mxu0 0.0
    %425 = vmatpush.msra.mxu0 0.0
    %426 = vmatpush.msra.mxu0 0.0
    %427 = vmatpush.msra.mxu0 0.0
    %428 = vmatpush.msra.mxu0 0.0
    %429 = vmatpush.msra.mxu0 0.0
    %430 = vmatpush.msra.mxu0 0.0
    %431 = vmatpush.msra.mxu0 0.0
    %432 = vmatpush.msra.mxu0 %v353
    %433 = vmatmul.f32.gmra.mxu0 %v345
    %v434 = vpop.f32.mrf.mxu0
    %v435 = vadd.f32 0.0, %v434
    %436 = vdwg.mxu0
    %437 = vmatpush.msra.mxu0 0.0
    %438 = vmatpush.msra.mxu0 0.0
    %439 = vmatpush.msra.mxu0 0.0
    %440 = vmatpush.msra.mxu0 0.0
    %441 = vmatpush.msra.mxu0 0.0
    %442 = vmatpush.msra.mxu0 0.0
    %443 = vmatpush.msra.mxu0 0.0
    %444 = vmatpush.msra.mxu0 0.0
    %445 = vmatpush.msra.mxu0 0.0
    %446 = vmatpush.msra.mxu0 0.0
    %447 = vmatpush.msra.mxu0 0.0
    %448 = vmatpush.msra.mxu0 0.0
    %449 = vmatpush.msra.mxu0 0.0
    %450 = vmatpush.msra.mxu0 0.0
    %451 = vmatpush.msra.mxu0 0.0
    %452 = vmatpush.msra.mxu0 %v355
    %453 = vmatmul.f32.gmra.mxu0 %v345
    %v454 = vpop.f32.mrf.mxu0
    %v455 = vadd.f32 0.0, %v454
    %456 = vdwg.mxu0
    %v457 = vadd.f32 %v229, %v375
    %v458 = vadd.f32 %v249, %v395
    %v459 = vadd.f32 %v269, %v415
    %v460 = vadd.f32 %v289, %v435
    %v461 = vadd.f32 %v309, %v455
    %s462 = scalar_lea.vmem %s1, 12
    %v463 = vld [vmem:[%s462] sm:$0xf]
    %v464 = vld [vmem:[%s0] sm:$0xff]
    %v465 = vld [vmem:[%s0 + $0x8] sm:$0xff]
    %v466 = vld [vmem:[%s0 + $0x10] sm:$0xf]
    %470 = vst [vmem:[#allocation1] ss:$2 sm:$0xff] %v464
    %s471 = scalar_lea.vmem [#allocation1], 16
    %472 = vst [vmem:[%s471] ss:$2 sm:$0xff] %v465
    %s473 = scalar_lea.vmem [#allocation1], 32
    %474 = vst [vmem:[%s473] ss:$2 sm:$0xff] %v466
    %v475 = vld.sshfl [vmem:[#allocation1] sm:$0xff pattern:$0x75316420]
    %v476 = vld.sshfl [vmem:[#allocation1 + $0x8] sm:$0xff pattern:$0x75316420]
    %v477 = vld.sshfl [vmem:[#allocation1 + $0x10] sm:$0xff pattern:$0x75316420]
    %v478 = vld.sshfl [vmem:[#allocation1 + $0x18] sm:$0xff pattern:$0x75316420]
    %v479 = vld.sshfl [vmem:[#allocation1 + $0x20] sm:$0xff pattern:$0x75316420]
    %480 = vrot.lane.b32.xlu0 %v475, 112
    %v481 = vpop.permute.xlu0 %480
    %482 = vrot.lane.b32.xlu0 %v476, 112
    %v483 = vpop.permute.xlu0 %482
    %484 = vrot.lane.b32.xlu0 %v477, 112
    %v485 = vpop.permute.xlu0 %484
    %486 = vrot.lane.b32.xlu0 %v478, 112
    %v487 = vpop.permute.xlu0 %486
    %488 = vrot.lane.b32.xlu0 %v479, 112
    %v489 = vpop.permute.xlu0 %488
    %vm490 = vcmask 916480
    %v491 = vsel %vm490, %v481, %v483
    %v492 = vsel %vm490, %v483, %v485
    %v493 = vsel %vm490, %v485, %v487
    %v494 = vsel %vm490, %v487, %v489
    %v496 = vsel %vm73, %v463, 0
    %v498 = vsel %vm77, %v491, 0
    %v500 = vsel %vm77, %v492, 0
    %v502 = vsel %vm77, %v493, 0
    %v504 = vsel %vm77, %v494, 0
    %v506 = vsel %vm77, %v489, 0
    %508 = vmatpush.msra.mxu0 0.0
    %509 = vmatpush.msra.mxu0 0.0
    %510 = vmatpush.msra.mxu0 0.0
    %511 = vmatpush.msra.mxu0 0.0
    %512 = vmatpush.msra.mxu0 0.0
    %513 = vmatpush.msra.mxu0 0.0
    %514 = vmatpush.msra.mxu0 0.0
    %515 = vmatpush.msra.mxu0 0.0
    %516 = vmatpush.msra.mxu0 0.0
    %517 = vmatpush.msra.mxu0 0.0
    %518 = vmatpush.msra.mxu0 0.0
    %519 = vmatpush.msra.mxu0 0.0
    %520 = vmatpush.msra.mxu0 0.0
    %521 = vmatpush.msra.mxu0 0.0
    %522 = vmatpush.msra.mxu0 0.0
    %523 = vmatpush.msra.mxu0 %v498
    %524 = vmatmul.f32.gmra.mxu0 %v496
    %v525 = vpop.f32.mrf.mxu0
    %v526 = vadd.f32 0.0, %v525
    %527 = vdwg.mxu0
    %528 = vmatpush.msra.mxu0 0.0
    %529 = vmatpush.msra.mxu0 0.0
    %530 = vmatpush.msra.mxu0 0.0
    %531 = vmatpush.msra.mxu0 0.0
    %532 = vmatpush.msra.mxu0 0.0
    %533 = vmatpush.msra.mxu0 0.0
    %534 = vmatpush.msra.mxu0 0.0
    %535 = vmatpush.msra.mxu0 0.0
    %536 = vmatpush.msra.mxu0 0.0
    %537 = vmatpush.msra.mxu0 0.0
    %538 = vmatpush.msra.mxu0 0.0
    %539 = vmatpush.msra.mxu0 0.0
    %540 = vmatpush.msra.mxu0 0.0
    %541 = vmatpush.msra.mxu0 0.0
    %542 = vmatpush.msra.mxu0 0.0
    %543 = vmatpush.msra.mxu0 %v500
    %544 = vmatmul.f32.gmra.mxu0 %v496
    %v545 = vpop.f32.mrf.mxu0
    %v546 = vadd.f32 0.0, %v545
    %547 = vdwg.mxu0
    %548 = vmatpush.msra.mxu0 0.0
    %549 = vmatpush.msra.mxu0 0.0
    %550 = vmatpush.msra.mxu0 0.0
    %551 = vmatpush.msra.mxu0 0.0
    %552 = vmatpush.msra.mxu0 0.0
    %553 = vmatpush.msra.mxu0 0.0
    %554 = vmatpush.msra.mxu0 0.0
    %555 = vmatpush.msra.mxu0 0.0
    %556 = vmatpush.msra.mxu0 0.0
    %557 = vmatpush.msra.mxu0 0.0
    %558 = vmatpush.msra.mxu0 0.0
    %559 = vmatpush.msra.mxu0 0.0
    %560 = vmatpush.msra.mxu0 0.0
    %561 = vmatpush.msra.mxu0 0.0
    %562 = vmatpush.msra.mxu0 0.0
    %563 = vmatpush.msra.mxu0 %v502
    %564 = vmatmul.f32.gmra.mxu0 %v496
    %v565 = vpop.f32.mrf.mxu0
    %v566 = vadd.f32 0.0, %v565
    %567 = vdwg.mxu0
    %568 = vmatpush.msra.mxu0 0.0
    %569 = vmatpush.msra.mxu0 0.0
    %570 = vmatpush.msra.mxu0 0.0
    %571 = vmatpush.msra.mxu0 0.0
    %572 = vmatpush.msra.mxu0 0.0
    %573 = vmatpush.msra.mxu0 0.0
    %574 = vmatpush.msra.mxu0 0.0
    %575 = vmatpush.msra.mxu0 0.0
    %576 = vmatpush.msra.mxu0 0.0
    %577 = vmatpush.msra.mxu0 0.0
    %578 = vmatpush.msra.mxu0 0.0
    %579 = vmatpush.msra.mxu0 0.0
    %580 = vmatpush.msra.mxu0 0.0
    %581 = vmatpush.msra.mxu0 0.0
    %582 = vmatpush.msra.mxu0 0.0
    %583 = vmatpush.msra.mxu0 %v504
    %584 = vmatmul.f32.gmra.mxu0 %v496
    %v585 = vpop.f32.mrf.mxu0
    %v586 = vadd.f32 0.0, %v585
    %587 = vdwg.mxu0
    %588 = vmatpush.msra.mxu0 0.0
    %589 = vmatpush.msra.mxu0 0.0
    %590 = vmatpush.msra.mxu0 0.0
    %591 = vmatpush.msra.mxu0 0.0
    %592 = vmatpush.msra.mxu0 0.0
    %593 = vmatpush.msra.mxu0 0.0
    %594 = vmatpush.msra.mxu0 0.0
    %595 = vmatpush.msra.mxu0 0.0
    %596 = vmatpush.msra.mxu0 0.0
    %597 = vmatpush.msra.mxu0 0.0
    %598 = vmatpush.msra.mxu0 0.0
    %599 = vmatpush.msra.mxu0 0.0
    %600 = vmatpush.msra.mxu0 0.0
    %601 = vmatpush.msra.mxu0 0.0
    %602 = vmatpush.msra.mxu0 0.0
    %603 = vmatpush.msra.mxu0 %v506
    %604 = vmatmul.f32.gmra.mxu0 %v496
    %v605 = vpop.f32.mrf.mxu0
    %v606 = vadd.f32 0.0, %v605
    %607 = vdwg.mxu0
    %v608 = vadd.f32 %v457, %v526
    %v609 = vadd.f32 %v458, %v546
    %v610 = vadd.f32 %v459, %v566
    %v611 = vadd.f32 %v460, %v586
    %v612 = vadd.f32 %v461, %v606
    %s613 = scalar_lea.vmem %s1, 16
    %v614 = vld [vmem:[%s613] sm:$0xf]
    %v615 = vld [vmem:[%s0] sm:$0xff]
    %v616 = vld [vmem:[%s0 + $0x8] sm:$0xff]
    %v617 = vld [vmem:[%s0 + $0x10] sm:$0xf]
    %621 = vst [vmem:[#allocation1] ss:$2 sm:$0xff] %v615
    %s622 = scalar_lea.vmem [#allocation1], 16
    %623 = vst [vmem:[%s622] ss:$2 sm:$0xff] %v616
    %s624 = scalar_lea.vmem [#allocation1], 32
    %625 = vst [vmem:[%s624] ss:$2 sm:$0xff] %v617
    %v626 = vld.sshfl [vmem:[#allocation1] sm:$0xff pattern:$0x75316420]
    %v627 = vld.sshfl [vmem:[#allocation1 + $0x8] sm:$0xff pattern:$0x75316420]
    %v628 = vld.sshfl [vmem:[#allocation1 + $0x10] sm:$0xff pattern:$0x75316420]
    %v629 = vld.sshfl [vmem:[#allocation1 + $0x18] sm:$0xff pattern:$0x75316420]
    %v630 = vld.sshfl [vmem:[#allocation1 + $0x20] sm:$0xff pattern:$0x75316420]
    %631 = vrot.lane.b32.xlu0 %v626, 111
    %v632 = vpop.permute.xlu0 %631
    %633 = vrot.lane.b32.xlu0 %v627, 111
    %v634 = vpop.permute.xlu0 %633
    %635 = vrot.lane.b32.xlu0 %v628, 111
    %v636 = vpop.permute.xlu0 %635
    %637 = vrot.lane.b32.xlu0 %v629, 111
    %v638 = vpop.permute.xlu0 %637
    %639 = vrot.lane.b32.xlu0 %v630, 111
    %v640 = vpop.permute.xlu0 %639
    %vm641 = vcmask 908288
    %v642 = vsel %vm641, %v632, %v634
    %v643 = vsel %vm641, %v634, %v636
    %v644 = vsel %vm641, %v636, %v638
    %v645 = vsel %vm641, %v638, %v640
    %v647 = vsel %vm73, %v614, 0
    %v649 = vsel %vm77, %v642, 0
    %v651 = vsel %vm77, %v643, 0
    %v653 = vsel %vm77, %v644, 0
    %v655 = vsel %vm77, %v645, 0
    %v657 = vsel %vm77, %v640, 0
    %659 = vmatpush.msra.mxu0 0.0
    %660 = vmatpush.msra.mxu0 0.0
    %661 = vmatpush.msra.mxu0 0.0
    %662 = vmatpush.msra.mxu0 0.0
    %663 = vmatpush.msra.mxu0 0.0
    %664 = vmatpush.msra.mxu0 0.0
    %665 = vmatpush.msra.mxu0 0.0
    %666 = vmatpush.msra.mxu0 0.0
    %667 = vmatpush.msra.mxu0 0.0
    %668 = vmatpush.msra.mxu0 0.0
    %669 = vmatpush.msra.mxu0 0.0
    %670 = vmatpush.msra.mxu0 0.0
    %671 = vmatpush.msra.mxu0 0.0
    %672 = vmatpush.msra.mxu0 0.0
    %673 = vmatpush.msra.mxu0 0.0
    %674 = vmatpush.msra.mxu0 %v649
    %675 = vmatmul.f32.gmra.mxu0 %v647
    %v676 = vpop.f32.mrf.mxu0
    %v677 = vadd.f32 0.0, %v676
    %678 = vdwg.mxu0
    %679 = vmatpush.msra.mxu0 0.0
    %680 = vmatpush.msra.mxu0 0.0
    %681 = vmatpush.msra.mxu0 0.0
    %682 = vmatpush.msra.mxu0 0.0
    %683 = vmatpush.msra.mxu0 0.0
    %684 = vmatpush.msra.mxu0 0.0
    %685 = vmatpush.msra.mxu0 0.0
    %686 = vmatpush.msra.mxu0 0.0
    %687 = vmatpush.msra.mxu0 0.0
    %688 = vmatpush.msra.mxu0 0.0
    %689 = vmatpush.msra.mxu0 0.0
    %690 = vmatpush.msra.mxu0 0.0
    %691 = vmatpush.msra.mxu0 0.0
    %692 = vmatpush.msra.mxu0 0.0
    %693 = vmatpush.msra.mxu0 0.0
    %694 = vmatpush.msra.mxu0 %v651
    %695 = vmatmul.f32.gmra.mxu0 %v647
    %v696 = vpop.f32.mrf.mxu0
    %v697 = vadd.f32 0.0, %v696
    %698 = vdwg.mxu0
    %699 = vmatpush.msra.mxu0 0.0
    %700 = vmatpush.msra.mxu0 0.0
    %701 = vmatpush.msra.mxu0 0.0
    %702 = vmatpush.msra.mxu0 0.0
    %703 = vmatpush.msra.mxu0 0.0
    %704 = vmatpush.msra.mxu0 0.0
    %705 = vmatpush.msra.mxu0 0.0
    %706 = vmatpush.msra.mxu0 0.0
    %707 = vmatpush.msra.mxu0 0.0
    %708 = vmatpush.msra.mxu0 0.0
    %709 = vmatpush.msra.mxu0 0.0
    %710 = vmatpush.msra.mxu0 0.0
    %711 = vmatpush.msra.mxu0 0.0
    %712 = vmatpush.msra.mxu0 0.0
    %713 = vmatpush.msra.mxu0 0.0
    %714 = vmatpush.msra.mxu0 %v653
    %715 = vmatmul.f32.gmra.mxu0 %v647
    %v716 = vpop.f32.mrf.mxu0
    %v717 = vadd.f32 0.0, %v716
    %718 = vdwg.mxu0
    %719 = vmatpush.msra.mxu0 0.0
    %720 = vmatpush.msra.mxu0 0.0
    %721 = vmatpush.msra.mxu0 0.0
    %722 = vmatpush.msra.mxu0 0.0
    %723 = vmatpush.msra.mxu0 0.0
    %724 = vmatpush.msra.mxu0 0.0
    %725 = vmatpush.msra.mxu0 0.0
    %726 = vmatpush.msra.mxu0 0.0
    %727 = vmatpush.msra.mxu0 0.0
    %728 = vmatpush.msra.mxu0 0.0
    %729 = vmatpush.msra.mxu0 0.0
    %730 = vmatpush.msra.mxu0 0.0
    %731 = vmatpush.msra.mxu0 0.0
    %732 = vmatpush.msra.mxu0 0.0
    %733 = vmatpush.msra.mxu0 0.0
    %734 = vmatpush.msra.mxu0 %v655
    %735 = vmatmul.f32.gmra.mxu0 %v647
    %v736 = vpop.f32.mrf.mxu0
    %v737 = vadd.f32 0.0, %v736
    %738 = vdwg.mxu0
    %739 = vmatpush.msra.mxu0 0.0
    %740 = vmatpush.msra.mxu0 0.0
    %741 = vmatpush.msra.mxu0 0.0
    %742 = vmatpush.msra.mxu0 0.0
    %743 = vmatpush.msra.mxu0 0.0
    %744 = vmatpush.msra.mxu0 0.0
    %745 = vmatpush.msra.mxu0 0.0
    %746 = vmatpush.msra.mxu0 0.0
    %747 = vmatpush.msra.mxu0 0.0
    %748 = vmatpush.msra.mxu0 0.0
    %749 = vmatpush.msra.mxu0 0.0
    %750 = vmatpush.msra.mxu0 0.0
    %751 = vmatpush.msra.mxu0 0.0
    %752 = vmatpush.msra.mxu0 0.0
    %753 = vmatpush.msra.mxu0 0.0
    %754 = vmatpush.msra.mxu0 %v657
    %755 = vmatmul.f32.gmra.mxu0 %v647
    %v756 = vpop.f32.mrf.mxu0
    %v757 = vadd.f32 0.0, %v756
    %758 = vdwg.mxu0
    %v759 = vadd.f32 %v608, %v677
    %v760 = vadd.f32 %v609, %v697
    %v761 = vadd.f32 %v610, %v717
    %v762 = vadd.f32 %v611, %v737
    %v763 = vadd.f32 %v612, %v757
    %s764 = scalar_lea.vmem %s1, 20
    %v765 = vld [vmem:[%s764] sm:$0xf]
    %v766 = vld [vmem:[%s0] sm:$0xff]
    %v767 = vld [vmem:[%s0 + $0x8] sm:$0xff]
    %v768 = vld [vmem:[%s0 + $0x10] sm:$0xf]
    %772 = vst [vmem:[#allocation1] ss:$2 sm:$0xff] %v766
    %s773 = scalar_lea.vmem [#allocation1], 16
    %774 = vst [vmem:[%s773] ss:$2 sm:$0xff] %v767
    %s775 = scalar_lea.vmem [#allocation1], 32
    %776 = vst [vmem:[%s775] ss:$2 sm:$0xff] %v768
    %v777 = vld.sshfl [vmem:[#allocation1] sm:$0xff pattern:$0x75316420]
    %v778 = vld.sshfl [vmem:[#allocation1 + $0x8] sm:$0xff pattern:$0x75316420]
    %v779 = vld.sshfl [vmem:[#allocation1 + $0x10] sm:$0xff pattern:$0x75316420]
    %v780 = vld.sshfl [vmem:[#allocation1 + $0x18] sm:$0xff pattern:$0x75316420]
    %v781 = vld.sshfl [vmem:[#allocation1 + $0x20] sm:$0xff pattern:$0x75316420]
    %782 = vrot.lane.b32.xlu0 %v777, 110
    %v783 = vpop.permute.xlu0 %782
    %784 = vrot.lane.b32.xlu0 %v778, 110
    %v785 = vpop.permute.xlu0 %784
    %786 = vrot.lane.b32.xlu0 %v779, 110
    %v787 = vpop.permute.xlu0 %786
    %788 = vrot.lane.b32.xlu0 %v780, 110
    %v789 = vpop.permute.xlu0 %788
    %790 = vrot.lane.b32.xlu0 %v781, 110
    %v791 = vpop.permute.xlu0 %790
    %vm792 = vcmask 900096
    %v793 = vsel %vm792, %v783, %v785
    %v794 = vsel %vm792, %v785, %v787
    %v795 = vsel %vm792, %v787, %v789
    %v796 = vsel %vm792, %v789, %v791
    %v798 = vsel %vm73, %v765, 0
    %v800 = vsel %vm77, %v793, 0
    %v802 = vsel %vm77, %v794, 0
    %v804 = vsel %vm77, %v795, 0
    %v806 = vsel %vm77, %v796, 0
    %v808 = vsel %vm77, %v791, 0
    %810 = vmatpush.msra.mxu0 0.0
    %811 = vmatpush.msra.mxu0 0.0
    %812 = vmatpush.msra.mxu0 0.0
    %813 = vmatpush.msra.mxu0 0.0
    %814 = vmatpush.msra.mxu0 0.0
    %815 = vmatpush.msra.mxu0 0.0
    %816 = vmatpush.msra.mxu0 0.0
    %817 = vmatpush.msra.mxu0 0.0
    %818 = vmatpush.msra.mxu0 0.0
    %819 = vmatpush.msra.mxu0 0.0
    %820 = vmatpush.msra.mxu0 0.0
    %821 = vmatpush.msra.mxu0 0.0
    %822 = vmatpush.msra.mxu0 0.0
    %823 = vmatpush.msra.mxu0 0.0
    %824 = vmatpush.msra.mxu0 0.0
    %825 = vmatpush.msra.mxu0 %v800
    %826 = vmatmul.f32.gmra.mxu0 %v798
    %v827 = vpop.f32.mrf.mxu0
    %v828 = vadd.f32 0.0, %v827
    %829 = vdwg.mxu0
    %830 = vmatpush.msra.mxu0 0.0
    %831 = vmatpush.msra.mxu0 0.0
    %832 = vmatpush.msra.mxu0 0.0
    %833 = vmatpush.msra.mxu0 0.0
    %834 = vmatpush.msra.mxu0 0.0
    %835 = vmatpush.msra.mxu0 0.0
    %836 = vmatpush.msra.mxu0 0.0
    %837 = vmatpush.msra.mxu0 0.0
    %838 = vmatpush.msra.mxu0 0.0
    %839 = vmatpush.msra.mxu0 0.0
    %840 = vmatpush.msra.mxu0 0.0
    %841 = vmatpush.msra.mxu0 0.0
    %842 = vmatpush.msra.mxu0 0.0
    %843 = vmatpush.msra.mxu0 0.0
    %844 = vmatpush.msra.mxu0 0.0
    %845 = vmatpush.msra.mxu0 %v802
    %846 = vmatmul.f32.gmra.mxu0 %v798
    %v847 = vpop.f32.mrf.mxu0
    %v848 = vadd.f32 0.0, %v847
    %849 = vdwg.mxu0
    %850 = vmatpush.msra.mxu0 0.0
    %851 = vmatpush.msra.mxu0 0.0
    %852 = vmatpush.msra.mxu0 0.0
    %853 = vmatpush.msra.mxu0 0.0
    %854 = vmatpush.msra.mxu0 0.0
    %855 = vmatpush.msra.mxu0 0.0
    %856 = vmatpush.msra.mxu0 0.0
    %857 = vmatpush.msra.mxu0 0.0
    %858 = vmatpush.msra.mxu0 0.0
    %859 = vmatpush.msra.mxu0 0.0
    %860 = vmatpush.msra.mxu0 0.0
    %861 = vmatpush.msra.mxu0 0.0
    %862 = vmatpush.msra.mxu0 0.0
    %863 = vmatpush.msra.mxu0 0.0
    %864 = vmatpush.msra.mxu0 0.0
    %865 = vmatpush.msra.mxu0 %v804
    %866 = vmatmul.f32.gmra.mxu0 %v798
    %v867 = vpop.f32.mrf.mxu0
    %v868 = vadd.f32 0.0, %v867
    %869 = vdwg.mxu0
    %870 = vmatpush.msra.mxu0 0.0
    %871 = vmatpush.msra.mxu0 0.0
    %872 = vmatpush.msra.mxu0 0.0
    %873 = vmatpush.msra.mxu0 0.0
    %874 = vmatpush.msra.mxu0 0.0
    %875 = vmatpush.msra.mxu0 0.0
    %876 = vmatpush.msra.mxu0 0.0
    %877 = vmatpush.msra.mxu0 0.0
    %878 = vmatpush.msra.mxu0 0.0
    %879 = vmatpush.msra.mxu0 0.0
    %880 = vmatpush.msra.mxu0 0.0
    %881 = vmatpush.msra.mxu0 0.0
    %882 = vmatpush.msra.mxu0 0.0
    %883 = vmatpush.msra.mxu0 0.0
    %884 = vmatpush.msra.mxu0 0.0
    %885 = vmatpush.msra.mxu0 %v806
    %886 = vmatmul.f32.gmra.mxu0 %v798
    %v887 = vpop.f32.mrf.mxu0
    %v888 = vadd.f32 0.0, %v887
    %889 = vdwg.mxu0
    %890 = vmatpush.msra.mxu0 0.0
    %891 = vmatpush.msra.mxu0 0.0
    %892 = vmatpush.msra.mxu0 0.0
    %893 = vmatpush.msra.mxu0 0.0
    %894 = vmatpush.msra.mxu0 0.0
    %895 = vmatpush.msra.mxu0 0.0
    %896 = vmatpush.msra.mxu0 0.0
    %897 = vmatpush.msra.mxu0 0.0
    %898 = vmatpush.msra.mxu0 0.0
    %899 = vmatpush.msra.mxu0 0.0
    %900 = vmatpush.msra.mxu0 0.0
    %901 = vmatpush.msra.mxu0 0.0
    %902 = vmatpush.msra.mxu0 0.0
    %903 = vmatpush.msra.mxu0 0.0
    %904 = vmatpush.msra.mxu0 0.0
    %905 = vmatpush.msra.mxu0 %v808
    %906 = vmatmul.f32.gmra.mxu0 %v798
    %v907 = vpop.f32.mrf.mxu0
    %v908 = vadd.f32 0.0, %v907
    %909 = vdwg.mxu0
    %v910 = vadd.f32 %v759, %v828
    %v911 = vadd.f32 %v760, %v848
    %v912 = vadd.f32 %v761, %v868
    %v913 = vadd.f32 %v762, %v888
    %v914 = vadd.f32 %v763, %v908
    %s915 = scalar_lea.vmem %s1, 24
    %v916 = vld [vmem:[%s915] sm:$0xf]
    %v917 = vld [vmem:[%s0] sm:$0xff]
    %v918 = vld [vmem:[%s0 + $0x8] sm:$0xff]
    %v919 = vld [vmem:[%s0 + $0x10] sm:$0xf]
    %923 = vst [vmem:[#allocation1] ss:$2 sm:$0xff] %v917
    %s924 = scalar_lea.vmem [#allocation1], 16
    %925 = vst [vmem:[%s924] ss:$2 sm:$0xff] %v918
    %s926 = scalar_lea.vmem [#allocation1], 32
    %927 = vst [vmem:[%s926] ss:$2 sm:$0xff] %v919
    %v928 = vld.sshfl [vmem:[#allocation1] sm:$0xff pattern:$0x75316420]
    %v929 = vld.sshfl [vmem:[#allocation1 + $0x8] sm:$0xff pattern:$0x75316420]
    %v930 = vld.sshfl [vmem:[#allocation1 + $0x10] sm:$0xff pattern:$0x75316420]
    %v931 = vld.sshfl [vmem:[#allocation1 + $0x18] sm:$0xff pattern:$0x75316420]
    %v932 = vld.sshfl [vmem:[#allocation1 + $0x20] sm:$0xff pattern:$0x75316420]
    %933 = vrot.lane.b32.xlu0 %v928, 96
    %v934 = vpop.permute.xlu0 %933
    %935 = vrot.lane.b32.xlu0 %v929, 96
    %v936 = vpop.permute.xlu0 %935
    %937 = vrot.lane.b32.xlu0 %v930, 96
    %v938 = vpop.permute.xlu0 %937
    %939 = vrot.lane.b32.xlu0 %v931, 96
    %v940 = vpop.permute.xlu0 %939
    %941 = vrot.lane.b32.xlu0 %v932, 96
    %v942 = vpop.permute.xlu0 %941
    %vm943 = vcmask 785408
    %v944 = vsel %vm943, %v934, %v936
    %v945 = vsel %vm943, %v936, %v938
    %v946 = vsel %vm943, %v938, %v940
    %v947 = vsel %vm943, %v940, %v942
    %v949 = vsel %vm73, %v916, 0
    %v951 = vsel %vm77, %v944, 0
    %v953 = vsel %vm77, %v945, 0
    %v955 = vsel %vm77, %v946, 0
    %v957 = vsel %vm77, %v947, 0
    %v959 = vsel %vm77, %v942, 0
    %961 = vmatpush.msra.mxu0 0.0
    %962 = vmatpush.msra.mxu0 0.0
    %963 = vmatpush.msra.mxu0 0.0
    %964 = vmatpush.msra.mxu0 0.0
    %965 = vmatpush.msra.mxu0 0.0
    %966 = vmatpush.msra.mxu0 0.0
    %967 = vmatpush.msra.mxu0 0.0
    %968 = vmatpush.msra.mxu0 0.0
    %969 = vmatpush.msra.mxu0 0.0
    %970 = vmatpush.msra.mxu0 0.0
    %971 = vmatpush.msra.mxu0 0.0
    %972 = vmatpush.msra.mxu0 0.0
    %973 = vmatpush.msra.mxu0 0.0
    %974 = vmatpush.msra.mxu0 0.0
    %975 = vmatpush.msra.mxu0 0.0
    %976 = vmatpush.msra.mxu0 %v951
    %977 = vmatmul.f32.gmra.mxu0 %v949
    %v978 = vpop.f32.mrf.mxu0
    %v979 = vadd.f32 0.0, %v978
    %980 = vdwg.mxu0
    %981 = vmatpush.msra.mxu0 0.0
    %982 = vmatpush.msra.mxu0 0.0
    %983 = vmatpush.msra.mxu0 0.0
    %984 = vmatpush.msra.mxu0 0.0
    %985 = vmatpush.msra.mxu0 0.0
    %986 = vmatpush.msra.mxu0 0.0
    %987 = vmatpush.msra.mxu0 0.0
    %988 = vmatpush.msra.mxu0 0.0
    %989 = vmatpush.msra.mxu0 0.0
    %990 = vmatpush.msra.mxu0 0.0
    %991 = vmatpush.msra.mxu0 0.0
    %992 = vmatpush.msra.mxu0 0.0
    %993 = vmatpush.msra.mxu0 0.0
    %994 = vmatpush.msra.mxu0 0.0
    %995 = vmatpush.msra.mxu0 0.0
    %996 = vmatpush.msra.mxu0 %v953
    %997 = vmatmul.f32.gmra.mxu0 %v949
    %v998 = vpop.f32.mrf.mxu0
    %v999 = vadd.f32 0.0, %v998
    %1000 = vdwg.mxu0
    %1001 = vmatpush.msra.mxu0 0.0
    %1002 = vmatpush.msra.mxu0 0.0
    %1003 = vmatpush.msra.mxu0 0.0
    %1004 = vmatpush.msra.mxu0 0.0
    %1005 = vmatpush.msra.mxu0 0.0
    %1006 = vmatpush.msra.mxu0 0.0
    %1007 = vmatpush.msra.mxu0 0.0
    %1008 = vmatpush.msra.mxu0 0.0
    %1009 = vmatpush.msra.mxu0 0.0
    %1010 = vmatpush.msra.mxu0 0.0
    %1011 = vmatpush.msra.mxu0 0.0
    %1012 = vmatpush.msra.mxu0 0.0
    %1013 = vmatpush.msra.mxu0 0.0
    %1014 = vmatpush.msra.mxu0 0.0
    %1015 = vmatpush.msra.mxu0 0.0
    %1016 = vmatpush.msra.mxu0 %v955
    %1017 = vmatmul.f32.gmra.mxu0 %v949
    %v1018 = vpop.f32.mrf.mxu0
    %v1019 = vadd.f32 0.0, %v1018
    %1020 = vdwg.mxu0
    %1021 = vmatpush.msra.mxu0 0.0
    %1022 = vmatpush.msra.mxu0 0.0
    %1023 = vmatpush.msra.mxu0 0.0
    %1024 = vmatpush.msra.mxu0 0.0
    %1025 = vmatpush.msra.mxu0 0.0
    %1026 = vmatpush.msra.mxu0 0.0
    %1027 = vmatpush.msra.mxu0 0.0
    %1028 = vmatpush.msra.mxu0 0.0
    %1029 = vmatpush.msra.mxu0 0.0
    %1030 = vmatpush.msra.mxu0 0.0
    %1031 = vmatpush.msra.mxu0 0.0
    %1032 = vmatpush.msra.mxu0 0.0
    %1033 = vmatpush.msra.mxu0 0.0
    %1034 = vmatpush.msra.mxu0 0.0
    %1035 = vmatpush.msra.mxu0 0.0
    %1036 = vmatpush.msra.mxu0 %v957
    %1037 = vmatmul.f32.gmra.mxu0 %v949
    %v1038 = vpop.f32.mrf.mxu0
    %v1039 = vadd.f32 0.0, %v1038
    %1040 = vdwg.mxu0
    %1041 = vmatpush.msra.mxu0 0.0
    %1042 = vmatpush.msra.mxu0 0.0
    %1043 = vmatpush.msra.mxu0 0.0
    %1044 = vmatpush.msra.mxu0 0.0
    %1045 = vmatpush.msra.mxu0 0.0
    %1046 = vmatpush.msra.mxu0 0.0
    %1047 = vmatpush.msra.mxu0 0.0
    %1048 = vmatpush.msra.mxu0 0.0
    %1049 = vmatpush.msra.mxu0 0.0
    %1050 = vmatpush.msra.mxu0 0.0
    %1051 = vmatpush.msra.mxu0 0.0
    %1052 = vmatpush.msra.mxu0 0.0
    %1053 = vmatpush.msra.mxu0 0.0
    %1054 = vmatpush.msra.mxu0 0.0
    %1055 = vmatpush.msra.mxu0 0.0
    %1056 = vmatpush.msra.mxu0 %v959
    %1057 = vmatmul.f32.gmra.mxu0 %v949
    %v1058 = vpop.f32.mrf.mxu0
    %v1059 = vadd.f32 0.0, %v1058
    %1060 = vdwg.mxu0
    %v1061 = vadd.f32 %v910, %v979
    %v1062 = vadd.f32 %v911, %v999
    %v1063 = vadd.f32 %v912, %v1019
    %v1064 = vadd.f32 %v913, %v1039
    %v1065 = vadd.f32 %v914, %v1059
    %s1066 = scalar_lea.vmem %s1, 28
    %v1067 = vld [vmem:[%s1066] sm:$0xf]
    %v1068 = vld [vmem:[%s0] sm:$0xff]
    %v1069 = vld [vmem:[%s0 + $0x8] sm:$0xff]
    %v1070 = vld [vmem:[%s0 + $0x10] sm:$0xf]
    %1074 = vst [vmem:[#allocation1] ss:$2 sm:$0xff] %v1068
    %s1075 = scalar_lea.vmem [#allocation1], 16
    %1076 = vst [vmem:[%s1075] ss:$2 sm:$0xff] %v1069
    %s1077 = scalar_lea.vmem [#allocation1], 32
    %1078 = vst [vmem:[%s1077] ss:$2 sm:$0xff] %v1070
    %v1079 = vld.sshfl [vmem:[#allocation1] sm:$0xff pattern:$0x75316420]
    %v1080 = vld.sshfl [vmem:[#allocation1 + $0x8] sm:$0xff pattern:$0x75316420]
    %v1081 = vld.sshfl [vmem:[#allocation1 + $0x10] sm:$0xff pattern:$0x75316420]
    %v1082 = vld.sshfl [vmem:[#allocation1 + $0x18] sm:$0xff pattern:$0x75316420]
    %v1083 = vld.sshfl [vmem:[#allocation1 + $0x20] sm:$0xff pattern:$0x75316420]
    %1084 = vrot.lane.b32.xlu0 %v1079, 95
    %v1085 = vpop.permute.xlu0 %1084
    %1086 = vrot.lane.b32.xlu0 %v1080, 95
    %v1087 = vpop.permute.xlu0 %1086
    %1088 = vrot.lane.b32.xlu0 %v1081, 95
    %v1089 = vpop.permute.xlu0 %1088
    %1090 = vrot.lane.b32.xlu0 %v1082, 95
    %v1091 = vpop.permute.xlu0 %1090
    %1092 = vrot.lane.b32.xlu0 %v1083, 95
    %v1093 = vpop.permute.xlu0 %1092
    %vm1094 = vcmask 777216
    %v1095 = vsel %vm1094, %v1085, %v1087
    %v1096 = vsel %vm1094, %v1087, %v1089
    %v1097 = vsel %vm1094, %v1089, %v1091
    %v1098 = vsel %vm1094, %v1091, %v1093
    %v1100 = vsel %vm73, %v1067, 0
    %v1102 = vsel %vm77, %v1095, 0
    %v1104 = vsel %vm77, %v1096, 0
    %v1106 = vsel %vm77, %v1097, 0
    %v1108 = vsel %vm77, %v1098, 0
    %v1110 = vsel %vm77, %v1093, 0
    %1112 = vmatpush.msra.mxu0 0.0
    %1113 = vmatpush.msra.mxu0 0.0
    %1114 = vmatpush.msra.mxu0 0.0
    %1115 = vmatpush.msra.mxu0 0.0
    %1116 = vmatpush.msra.mxu0 0.0
    %1117 = vmatpush.msra.mxu0 0.0
    %1118 = vmatpush.msra.mxu0 0.0
    %1119 = vmatpush.msra.mxu0 0.0
    %1120 = vmatpush.msra.mxu0 0.0
    %1121 = vmatpush.msra.mxu0 0.0
    %1122 = vmatpush.msra.mxu0 0.0
    %1123 = vmatpush.msra.mxu0 0.0
    %1124 = vmatpush.msra.mxu0 0.0
    %1125 = vmatpush.msra.mxu0 0.0
    %1126 = vmatpush.msra.mxu0 0.0
    %1127 = vmatpush.msra.mxu0 %v1102
    %1128 = vmatmul.f32.gmra.mxu0 %v1100
    %v1129 = vpop.f32.mrf.mxu0
    %v1130 = vadd.f32 0.0, %v1129
    %1131 = vdwg.mxu0
    %1132 = vmatpush.msra.mxu0 0.0
    %1133 = vmatpush.msra.mxu0 0.0
    %1134 = vmatpush.msra.mxu0 0.0
    %1135 = vmatpush.msra.mxu0 0.0
    %1136 = vmatpush.msra.mxu0 0.0
    %1137 = vmatpush.msra.mxu0 0.0
    %1138 = vmatpush.msra.mxu0 0.0
    %1139 = vmatpush.msra.mxu0 0.0
    %1140 = vmatpush.msra.mxu0 0.0
    %1141 = vmatpush.msra.mxu0 0.0
    %1142 = vmatpush.msra.mxu0 0.0
    %1143 = vmatpush.msra.mxu0 0.0
    %1144 = vmatpush.msra.mxu0 0.0
    %1145 = vmatpush.msra.mxu0 0.0
    %1146 = vmatpush.msra.mxu0 0.0
    %1147 = vmatpush.msra.mxu0 %v1104
    %1148 = vmatmul.f32.gmra.mxu0 %v1100
    %v1149 = vpop.f32.mrf.mxu0
    %v1150 = vadd.f32 0.0, %v1149
    %1151 = vdwg.mxu0
    %1152 = vmatpush.msra.mxu0 0.0
    %1153 = vmatpush.msra.mxu0 0.0
    %1154 = vmatpush.msra.mxu0 0.0
    %1155 = vmatpush.msra.mxu0 0.0
    %1156 = vmatpush.msra.mxu0 0.0
    %1157 = vmatpush.msra.mxu0 0.0
    %1158 = vmatpush.msra.mxu0 0.0
    %1159 = vmatpush.msra.mxu0 0.0
    %1160 = vmatpush.msra.mxu0 0.0
    %1161 = vmatpush.msra.mxu0 0.0
    %1162 = vmatpush.msra.mxu0 0.0
    %1163 = vmatpush.msra.mxu0 0.0
    %1164 = vmatpush.msra.mxu0 0.0
    %1165 = vmatpush.msra.mxu0 0.0
    %1166 = vmatpush.msra.mxu0 0.0
    %1167 = vmatpush.msra.mxu0 %v1106
    %1168 = vmatmul.f32.gmra.mxu0 %v1100
    %v1169 = vpop.f32.mrf.mxu0
    %v1170 = vadd.f32 0.0, %v1169
    %1171 = vdwg.mxu0
    %1172 = vmatpush.msra.mxu0 0.0
    %1173 = vmatpush.msra.mxu0 0.0
    %1174 = vmatpush.msra.mxu0 0.0
    %1175 = vmatpush.msra.mxu0 0.0
    %1176 = vmatpush.msra.mxu0 0.0
    %1177 = vmatpush.msra.mxu0 0.0
    %1178 = vmatpush.msra.mxu0 0.0
    %1179 = vmatpush.msra.mxu0 0.0
    %1180 = vmatpush.msra.mxu0 0.0
    %1181 = vmatpush.msra.mxu0 0.0
    %1182 = vmatpush.msra.mxu0 0.0
    %1183 = vmatpush.msra.mxu0 0.0
    %1184 = vmatpush.msra.mxu0 0.0
    %1185 = vmatpush.msra.mxu0 0.0
    %1186 = vmatpush.msra.mxu0 0.0
    %1187 = vmatpush.msra.mxu0 %v1108
    %1188 = vmatmul.f32.gmra.mxu0 %v1100
    %v1189 = vpop.f32.mrf.mxu0
    %v1190 = vadd.f32 0.0, %v1189
    %1191 = vdwg.mxu0
    %1192 = vmatpush.msra.mxu0 0.0
    %1193 = vmatpush.msra.mxu0 0.0
    %1194 = vmatpush.msra.mxu0 0.0
    %1195 = vmatpush.msra.mxu0 0.0
    %1196 = vmatpush.msra.mxu0 0.0
    %1197 = vmatpush.msra.mxu0 0.0
    %1198 = vmatpush.msra.mxu0 0.0
    %1199 = vmatpush.msra.mxu0 0.0
    %1200 = vmatpush.msra.mxu0 0.0
    %1201 = vmatpush.msra.mxu0 0.0
    %1202 = vmatpush.msra.mxu0 0.0
    %1203 = vmatpush.msra.mxu0 0.0
    %1204 = vmatpush.msra.mxu0 0.0
    %1205 = vmatpush.msra.mxu0 0.0
    %1206 = vmatpush.msra.mxu0 0.0
    %1207 = vmatpush.msra.mxu0 %v1110
    %1208 = vmatmul.f32.gmra.mxu0 %v1100
    %v1209 = vpop.f32.mrf.mxu0
    %v1210 = vadd.f32 0.0, %v1209
    %1211 = vdwg.mxu0
    %v1212 = vadd.f32 %v1061, %v1130
    %v1213 = vadd.f32 %v1062, %v1150
    %v1214 = vadd.f32 %v1063, %v1170
    %v1215 = vadd.f32 %v1064, %v1190
    %v1216 = vadd.f32 %v1065, %v1210
    %s1217 = scalar_lea.vmem %s1, 32
    %v1218 = vld [vmem:[%s1217] sm:$0xf]
    %v1219 = vld [vmem:[%s0] sm:$0xff]
    %v1220 = vld [vmem:[%s0 + $0x8] sm:$0xff]
    %v1221 = vld [vmem:[%s0 + $0x10] sm:$0xf]
    %1225 = vst [vmem:[#allocation1] ss:$2 sm:$0xff] %v1219
    %s1226 = scalar_lea.vmem [#allocation1], 16
    %1227 = vst [vmem:[%s1226] ss:$2 sm:$0xff] %v1220
    %s1228 = scalar_lea.vmem [#allocation1], 32
    %1229 = vst [vmem:[%s1228] ss:$2 sm:$0xff] %v1221
    %v1230 = vld.sshfl [vmem:[#allocation1] sm:$0xff pattern:$0x75316420]
    %v1231 = vld.sshfl [vmem:[#allocation1 + $0x8] sm:$0xff pattern:$0x75316420]
    %v1232 = vld.sshfl [vmem:[#allocation1 + $0x10] sm:$0xff pattern:$0x75316420]
    %v1233 = vld.sshfl [vmem:[#allocation1 + $0x18] sm:$0xff pattern:$0x75316420]
    %v1234 = vld.sshfl [vmem:[#allocation1 + $0x20] sm:$0xff pattern:$0x75316420]
    %1235 = vrot.lane.b32.xlu0 %v1230, 94
    %v1236 = vpop.permute.xlu0 %1235
    %1237 = vrot.lane.b32.xlu0 %v1231, 94
    %v1238 = vpop.permute.xlu0 %1237
    %1239 = vrot.lane.b32.xlu0 %v1232, 94
    %v1240 = vpop.permute.xlu0 %1239
    %1241 = vrot.lane.b32.xlu0 %v1233, 94
    %v1242 = vpop.permute.xlu0 %1241
    %1243 = vrot.lane.b32.xlu0 %v1234, 94
    %v1244 = vpop.permute.xlu0 %1243
    %vm1245 = vcmask 769024
    %v1246 = vsel %vm1245, %v1236, %v1238
    %v1247 = vsel %vm1245, %v1238, %v1240
    %v1248 = vsel %vm1245, %v1240, %v1242
    %v1249 = vsel %vm1245, %v1242, %v1244
    %v1251 = vsel %vm73, %v1218, 0
    %v1253 = vsel %vm77, %v1246, 0
    %v1255 = vsel %vm77, %v1247, 0
    %v1257 = vsel %vm77, %v1248, 0
    %v1259 = vsel %vm77, %v1249, 0
    %v1261 = vsel %vm77, %v1244, 0
    %1263 = vmatpush.msra.mxu0 0.0
    %1264 = vmatpush.msra.mxu0 0.0
    %1265 = vmatpush.msra.mxu0 0.0
    %1266 = vmatpush.msra.mxu0 0.0
    %1267 = vmatpush.msra.mxu0 0.0
    %1268 = vmatpush.msra.mxu0 0.0
    %1269 = vmatpush.msra.mxu0 0.0
    %1270 = vmatpush.msra.mxu0 0.0
    %1271 = vmatpush.msra.mxu0 0.0
    %1272 = vmatpush.msra.mxu0 0.0
    %1273 = vmatpush.msra.mxu0 0.0
    %1274 = vmatpush.msra.mxu0 0.0
    %1275 = vmatpush.msra.mxu0 0.0
    %1276 = vmatpush.msra.mxu0 0.0
    %1277 = vmatpush.msra.mxu0 0.0
    %1278 = vmatpush.msra.mxu0 %v1253
    %1279 = vmatmul.f32.gmra.mxu0 %v1251
    %v1280 = vpop.f32.mrf.mxu0
    %v1281 = vadd.f32 0.0, %v1280
    %1282 = vdwg.mxu0
    %1283 = vmatpush.msra.mxu0 0.0
    %1284 = vmatpush.msra.mxu0 0.0
    %1285 = vmatpush.msra.mxu0 0.0
    %1286 = vmatpush.msra.mxu0 0.0
    %1287 = vmatpush.msra.mxu0 0.0
    %1288 = vmatpush.msra.mxu0 0.0
    %1289 = vmatpush.msra.mxu0 0.0
    %1290 = vmatpush.msra.mxu0 0.0
    %1291 = vmatpush.msra.mxu0 0.0
    %1292 = vmatpush.msra.mxu0 0.0
    %1293 = vmatpush.msra.mxu0 0.0
    %1294 = vmatpush.msra.mxu0 0.0
    %1295 = vmatpush.msra.mxu0 0.0
    %1296 = vmatpush.msra.mxu0 0.0
    %1297 = vmatpush.msra.mxu0 0.0
    %1298 = vmatpush.msra.mxu0 %v1255
    %1299 = vmatmul.f32.gmra.mxu0 %v1251
    %v1300 = vpop.f32.mrf.mxu0
    %v1301 = vadd.f32 0.0, %v1300
    %1302 = vdwg.mxu0
    %1303 = vmatpush.msra.mxu0 0.0
    %1304 = vmatpush.msra.mxu0 0.0
    %1305 = vmatpush.msra.mxu0 0.0
    %1306 = vmatpush.msra.mxu0 0.0
    %1307 = vmatpush.msra.mxu0 0.0
    %1308 = vmatpush.msra.mxu0 0.0
    %1309 = vmatpush.msra.mxu0 0.0
    %1310 = vmatpush.msra.mxu0 0.0
    %1311 = vmatpush.msra.mxu0 0.0
    %1312 = vmatpush.msra.mxu0 0.0
    %1313 = vmatpush.msra.mxu0 0.0
    %1314 = vmatpush.msra.mxu0 0.0
    %1315 = vmatpush.msra.mxu0 0.0
    %1316 = vmatpush.msra.mxu0 0.0
    %1317 = vmatpush.msra.mxu0 0.0
    %1318 = vmatpush.msra.mxu0 %v1257
    %1319 = vmatmul.f32.gmra.mxu0 %v1251
    %v1320 = vpop.f32.mrf.mxu0
    %v1321 = vadd.f32 0.0, %v1320
    %1322 = vdwg.mxu0
    %1323 = vmatpush.msra.mxu0 0.0
    %1324 = vmatpush.msra.mxu0 0.0
    %1325 = vmatpush.msra.mxu0 0.0
    %1326 = vmatpush.msra.mxu0 0.0
    %1327 = vmatpush.msra.mxu0 0.0
    %1328 = vmatpush.msra.mxu0 0.0
    %1329 = vmatpush.msra.mxu0 0.0
    %1330 = vmatpush.msra.mxu0 0.0
    %1331 = vmatpush.msra.mxu0 0.0
    %1332 = vmatpush.msra.mxu0 0.0
    %1333 = vmatpush.msra.mxu0 0.0
    %1334 = vmatpush.msra.mxu0 0.0
    %1335 = vmatpush.msra.mxu0 0.0
    %1336 = vmatpush.msra.mxu0 0.0
    %1337 = vmatpush.msra.mxu0 0.0
    %1338 = vmatpush.msra.mxu0 %v1259
    %1339 = vmatmul.f32.gmra.mxu0 %v1251
    %v1340 = vpop.f32.mrf.mxu0
    %v1341 = vadd.f32 0.0, %v1340
    %1342 = vdwg.mxu0
    %1343 = vmatpush.msra.mxu0 0.0
    %1344 = vmatpush.msra.mxu0 0.0
    %1345 = vmatpush.msra.mxu0 0.0
    %1346 = vmatpush.msra.mxu0 0.0
    %1347 = vmatpush.msra.mxu0 0.0
    %1348 = vmatpush.msra.mxu0 0.0
    %1349 = vmatpush.msra.mxu0 0.0
    %1350 = vmatpush.msra.mxu0 0.0
    %1351 = vmatpush.msra.mxu0 0.0
    %1352 = vmatpush.msra.mxu0 0.0
    %1353 = vmatpush.msra.mxu0 0.0
    %1354 = vmatpush.msra.mxu0 0.0
    %1355 = vmatpush.msra.mxu0 0.0
    %1356 = vmatpush.msra.mxu0 0.0
    %1357 = vmatpush.msra.mxu0 0.0
    %1358 = vmatpush.msra.mxu0 %v1261
    %1359 = vmatmul.f32.gmra.mxu0 %v1251
    %v1360 = vpop.f32.mrf.mxu0
    %v1361 = vadd.f32 0.0, %v1360
    %1362 = vdwg.mxu0
    %v1363 = vadd.f32 %v1212, %v1281
    %v1364 = vadd.f32 %v1213, %v1301
    %v1365 = vadd.f32 %v1214, %v1321
    %v1366 = vadd.f32 %v1215, %v1341
    %v1367 = vadd.f32 %v1216, %v1361
    %v1368 = vld [vmem:[%s2] sm:$0xf]
    %1370 = vset.pattern.permute.xlu0 0
    %1371 = vperm.xlu0 %1370, %v1368
    %v1372 = vpop.permute.xlu0 %1371
    %v1374 = vadd.f32 %v1363, %v1372
    %v1375 = vadd.f32 %v1364, %v1372
    %v1376 = vadd.f32 %v1365, %v1372
    %v1377 = vadd.f32 %v1366, %v1372
    %v1378 = vadd.f32 %v1367, %v1372
    %v1379 = vmax.f32 %v1374, 0.0
    %v1380 = vmax.f32 %v1375, 0.0
    %v1381 = vmax.f32 %v1376, 0.0
    %v1382 = vmax.f32 %v1377, 0.0
    %v1383 = vmax.f32 %v1378, 0.0
    %v1388 = vrot.slane %v1380, 4
    %v1389 = vrot.slane %v1382, 4
    %v1390 = vsel %vm77, %v1379, %v1388
    %v1391 = vsel %vm77, %v1381, %v1389
    %1394 = vst [vmem:[#allocation2] sm:$0xff] %v1390
    %1395 = vst [vmem:[#allocation2 + $0x8] sm:$0xff] %v1391
    %vm1396 = vcmask 551936
    %1397 = vst.msk [vmem:[#allocation2 + $0x10] sm:$0xf] %vm1396, %v1383
    %vm1398 = vcmask 831008
    %1399 = vst.msk [vmem:[#allocation2 + $0x10] sm:$0xf] %vm1398, 0.0
    %v1400 = vld [vmem:[%s3] sm:$0xf]
    %v1401 = vld [vmem:[#allocation2] sm:$0xff]
    %v1402 = vld [vmem:[#allocation2 + $0x8] sm:$0xff]
    %v1403 = vld [vmem:[#allocation2 + $0x10] sm:$0xf]
    %s1404 = scalar_lea.vmem %s3, 4
    %v1405 = vld [vmem:[%s1404] sm:$0xf]
    %1409 = vst [vmem:[#allocation1] ss:$2 sm:$0xff] %v1401
    %s1410 = scalar_lea.vmem [#allocation1], 16
    %1411 = vst [vmem:[%s1410] ss:$2 sm:$0xff] %v1402
    %s1412 = scalar_lea.vmem [#allocation1], 32
    %1413 = vst [vmem:[%s1412] ss:$2 sm:$0xff] %v1403
    %v1414 = vld.sshfl [vmem:[#allocation1] sm:$0xff pattern:$0x75316420]
    %v1415 = vld.sshfl [vmem:[#allocation1 + $0x8] sm:$0xff pattern:$0x75316420]
    %v1416 = vld.sshfl [vmem:[#allocation1 + $0x10] sm:$0xff pattern:$0x75316420]
    %v1417 = vld.sshfl [vmem:[#allocation1 + $0x18] sm:$0xff pattern:$0x75316420]
    %v1418 = vld.sshfl [vmem:[#allocation1 + $0x20] sm:$0xff pattern:$0x75316420]
    %1419 = vrot.lane.b32.xlu0 %v1414, 127
    %v1420 = vpop.permute.xlu0 %1419
    %1421 = vrot.lane.b32.xlu0 %v1415, 127
    %v1422 = vpop.permute.xlu0 %1421
    %1423 = vrot.lane.b32.xlu0 %v1416, 127
    %v1424 = vpop.permute.xlu0 %1423
    %1425 = vrot.lane.b32.xlu0 %v1417, 127
    %v1426 = vpop.permute.xlu0 %1425
    %1427 = vrot.lane.b32.xlu0 %v1418, 127
    %v1428 = vpop.permute.xlu0 %1427
    %v1429 = vsel %vm68, %v1420, %v1422
    %v1430 = vsel %vm68, %v1422, %v1424
    %v1431 = vsel %vm68, %v1424, %v1426
    %v1432 = vsel %vm68, %v1426, %v1428
    %v1434 = vsel %vm73, %v1405, 0
    %v1436 = vsel %vm77, %v1429, 0
    %v1438 = vsel %vm77, %v1430, 0
    %v1440 = vsel %vm77, %v1431, 0
    %v1442 = vsel %vm77, %v1432, 0
    %v1444 = vsel %vm77, %v1428, 0
    %1446 = vmatpush.msra.mxu0 0.0
    %1447 = vmatpush.msra.mxu0 0.0
    %1448 = vmatpush.msra.mxu0 0.0
    %1449 = vmatpush.msra.mxu0 0.0
    %1450 = vmatpush.msra.mxu0 0.0
    %1451 = vmatpush.msra.mxu0 0.0
    %1452 = vmatpush.msra.mxu0 0.0
    %1453 = vmatpush.msra.mxu0 0.0
    %1454 = vmatpush.msra.mxu0 0.0
    %1455 = vmatpush.msra.mxu0 0.0
    %1456 = vmatpush.msra.mxu0 0.0
    %1457 = vmatpush.msra.mxu0 0.0
    %1458 = vmatpush.msra.mxu0 0.0
    %1459 = vmatpush.msra.mxu0 0.0
    %1460 = vmatpush.msra.mxu0 0.0
    %1461 = vmatpush.msra.mxu0 %v1436
    %1462 = vmatmul.f32.gmra.mxu0 %v1434
    %v1463 = vpop.f32.mrf.mxu0
    %v1464 = vadd.f32 0.0, %v1463
    %1465 = vdwg.mxu0
    %1466 = vmatpush.msra.mxu0 0.0
    %1467 = vmatpush.msra.mxu0 0.0
    %1468 = vmatpush.msra.mxu0 0.0
    %1469 = vmatpush.msra.mxu0 0.0
    %1470 = vmatpush.msra.mxu0 0.0
    %1471 = vmatpush.msra.mxu0 0.0
    %1472 = vmatpush.msra.mxu0 0.0
    %1473 = vmatpush.msra.mxu0 0.0
    %1474 = vmatpush.msra.mxu0 0.0
    %1475 = vmatpush.msra.mxu0 0.0
    %1476 = vmatpush.msra.mxu0 0.0
    %1477 = vmatpush.msra.mxu0 0.0
    %1478 = vmatpush.msra.mxu0 0.0
    %1479 = vmatpush.msra.mxu0 0.0
    %1480 = vmatpush.msra.mxu0 0.0
    %1481 = vmatpush.msra.mxu0 %v1438
    %1482 = vmatmul.f32.gmra.mxu0 %v1434
    %v1483 = vpop.f32.mrf.mxu0
    %v1484 = vadd.f32 0.0, %v1483
    %1485 = vdwg.mxu0
    %1486 = vmatpush.msra.mxu0 0.0
    %1487 = vmatpush.msra.mxu0 0.0
    %1488 = vmatpush.msra.mxu0 0.0
    %1489 = vmatpush.msra.mxu0 0.0
    %1490 = vmatpush.msra.mxu0 0.0
    %1491 = vmatpush.msra.mxu0 0.0
    %1492 = vmatpush.msra.mxu0 0.0
    %1493 = vmatpush.msra.mxu0 0.0
    %1494 = vmatpush.msra.mxu0 0.0
    %1495 = vmatpush.msra.mxu0 0.0
    %1496 = vmatpush.msra.mxu0 0.0
    %1497 = vmatpush.msra.mxu0 0.0
    %1498 = vmatpush.msra.mxu0 0.0
    %1499 = vmatpush.msra.mxu0 0.0
    %1500 = vmatpush.msra.mxu0 0.0
    %1501 = vmatpush.msra.mxu0 %v1440
    %1502 = vmatmul.f32.gmra.mxu0 %v1434
    %v1503 = vpop.f32.mrf.mxu0
    %v1504 = vadd.f32 0.0, %v1503
    %1505 = vdwg.mxu0
    %1506 = vmatpush.msra.mxu0 0.0
    %1507 = vmatpush.msra.mxu0 0.0
    %1508 = vmatpush.msra.mxu0 0.0
    %1509 = vmatpush.msra.mxu0 0.0
    %1510 = vmatpush.msra.mxu0 0.0
    %1511 = vmatpush.msra.mxu0 0.0
    %1512 = vmatpush.msra.mxu0 0.0
    %1513 = vmatpush.msra.mxu0 0.0
    %1514 = vmatpush.msra.mxu0 0.0
    %1515 = vmatpush.msra.mxu0 0.0
    %1516 = vmatpush.msra.mxu0 0.0
    %1517 = vmatpush.msra.mxu0 0.0
    %1518 = vmatpush.msra.mxu0 0.0
    %1519 = vmatpush.msra.mxu0 0.0
    %1520 = vmatpush.msra.mxu0 0.0
    %1521 = vmatpush.msra.mxu0 %v1442
    %1522 = vmatmul.f32.gmra.mxu0 %v1434
    %v1523 = vpop.f32.mrf.mxu0
    %v1524 = vadd.f32 0.0, %v1523
    %1525 = vdwg.mxu0
    %1526 = vmatpush.msra.mxu0 0.0
    %1527 = vmatpush.msra.mxu0 0.0
    %1528 = vmatpush.msra.mxu0 0.0
    %1529 = vmatpush.msra.mxu0 0.0
    %1530 = vmatpush.msra.mxu0 0.0
    %1531 = vmatpush.msra.mxu0 0.0
    %1532 = vmatpush.msra.mxu0 0.0
    %1533 = vmatpush.msra.mxu0 0.0
    %1534 = vmatpush.msra.mxu0 0.0
    %1535 = vmatpush.msra.mxu0 0.0
    %1536 = vmatpush.msra.mxu0 0.0
    %1537 = vmatpush.msra.mxu0 0.0
    %1538 = vmatpush.msra.mxu0 0.0
    %1539 = vmatpush.msra.mxu0 0.0
    %1540 = vmatpush.msra.mxu0 0.0
    %1541 = vmatpush.msra.mxu0 %v1444
    %1542 = vmatmul.f32.gmra.mxu0 %v1434
    %v1543 = vpop.f32.mrf.mxu0
    %v1544 = vadd.f32 0.0, %v1543
    %1545 = vdwg.mxu0
    %1546 = vst [vmem:[#allocation1] ss:$2 sm:$0xff] %v1401
    %s1547 = scalar_lea.vmem [#allocation1], 16
    %1548 = vst [vmem:[%s1547] ss:$2 sm:$0xff] %v1402
    %s1549 = scalar_lea.vmem [#allocation1], 32
    %1550 = vst [vmem:[%s1549] ss:$2 sm:$0xff] %v1403
    %v1551 = vld.sshfl [vmem:[#allocation1] sm:$0xff pattern:$0x75316420]
    %v1552 = vld.sshfl [vmem:[#allocation1 + $0x8] sm:$0xff pattern:$0x75316420]
    %v1553 = vld.sshfl [vmem:[#allocation1 + $0x10] sm:$0xff pattern:$0x75316420]
    %v1554 = vld.sshfl [vmem:[#allocation1 + $0x18] sm:$0xff pattern:$0x75316420]
    %v1555 = vld.sshfl [vmem:[#allocation1 + $0x20] sm:$0xff pattern:$0x75316420]
    %v1557 = vsel %vm73, %v1400, 0
    %v1559 = vsel %vm77, %v1551, 0
    %v1561 = vsel %vm77, %v1552, 0
    %v1563 = vsel %vm77, %v1553, 0
    %v1565 = vsel %vm77, %v1554, 0
    %v1567 = vsel %vm77, %v1555, 0
    %1569 = vmatpush.msra.mxu0 0.0
    %1570 = vmatpush.msra.mxu0 0.0
    %1571 = vmatpush.msra.mxu0 0.0
    %1572 = vmatpush.msra.mxu0 0.0
    %1573 = vmatpush.msra.mxu0 0.0
    %1574 = vmatpush.msra.mxu0 0.0
    %1575 = vmatpush.msra.mxu0 0.0
    %1576 = vmatpush.msra.mxu0 0.0
    %1577 = vmatpush.msra.mxu0 0.0
    %1578 = vmatpush.msra.mxu0 0.0
    %1579 = vmatpush.msra.mxu0 0.0
    %1580 = vmatpush.msra.mxu0 0.0
    %1581 = vmatpush.msra.mxu0 0.0
    %1582 = vmatpush.msra.mxu0 0.0
    %1583 = vmatpush.msra.mxu0 0.0
    %1584 = vmatpush.msra.mxu0 %v1559
    %1585 = vmatmul.f32.gmra.mxu0 %v1557
    %v1586 = vpop.f32.mrf.mxu0
    %v1587 = vadd.f32 %v1464, %v1586
    %1588 = vdwg.mxu0
    %1589 = vmatpush.msra.mxu0 0.0
    %1590 = vmatpush.msra.mxu0 0.0
    %1591 = vmatpush.msra.mxu0 0.0
    %1592 = vmatpush.msra.mxu0 0.0
    %1593 = vmatpush.msra.mxu0 0.0
    %1594 = vmatpush.msra.mxu0 0.0
    %1595 = vmatpush.msra.mxu0 0.0
    %1596 = vmatpush.msra.mxu0 0.0
    %1597 = vmatpush.msra.mxu0 0.0
    %1598 = vmatpush.msra.mxu0 0.0
    %1599 = vmatpush.msra.mxu0 0.0
    %1600 = vmatpush.msra.mxu0 0.0
    %1601 = vmatpush.msra.mxu0 0.0
    %1602 = vmatpush.msra.mxu0 0.0
    %1603 = vmatpush.msra.mxu0 0.0
    %1604 = vmatpush.msra.mxu0 %v1561
    %1605 = vmatmul.f32.gmra.mxu0 %v1557
    %v1606 = vpop.f32.mrf.mxu0
    %v1607 = vadd.f32 %v1484, %v1606
    %1608 = vdwg.mxu0
    %1609 = vmatpush.msra.mxu0 0.0
    %1610 = vmatpush.msra.mxu0 0.0
    %1611 = vmatpush.msra.mxu0 0.0
    %1612 = vmatpush.msra.mxu0 0.0
    %1613 = vmatpush.msra.mxu0 0.0
    %1614 = vmatpush.msra.mxu0 0.0
    %1615 = vmatpush.msra.mxu0 0.0
    %1616 = vmatpush.msra.mxu0 0.0
    %1617 = vmatpush.msra.mxu0 0.0
    %1618 = vmatpush.msra.mxu0 0.0
    %1619 = vmatpush.msra.mxu0 0.0
    %1620 = vmatpush.msra.mxu0 0.0
    %1621 = vmatpush.msra.mxu0 0.0
    %1622 = vmatpush.msra.mxu0 0.0
    %1623 = vmatpush.msra.mxu0 0.0
    %1624 = vmatpush.msra.mxu0 %v1563
    %1625 = vmatmul.f32.gmra.mxu0 %v1557
    %v1626 = vpop.f32.mrf.mxu0
    %v1627 = vadd.f32 %v1504, %v1626
    %1628 = vdwg.mxu0
    %1629 = vmatpush.msra.mxu0 0.0
    %1630 = vmatpush.msra.mxu0 0.0
    %1631 = vmatpush.msra.mxu0 0.0
    %1632 = vmatpush.msra.mxu0 0.0
    %1633 = vmatpush.msra.mxu0 0.0
    %1634 = vmatpush.msra.mxu0 0.0
    %1635 = vmatpush.msra.mxu0 0.0
    %1636 = vmatpush.msra.mxu0 0.0
    %1637 = vmatpush.msra.mxu0 0.0
    %1638 = vmatpush.msra.mxu0 0.0
    %1639 = vmatpush.msra.mxu0 0.0
    %1640 = vmatpush.msra.mxu0 0.0
    %1641 = vmatpush.msra.mxu0 0.0
    %1642 = vmatpush.msra.mxu0 0.0
    %1643 = vmatpush.msra.mxu0 0.0
    %1644 = vmatpush.msra.mxu0 %v1565
    %1645 = vmatmul.f32.gmra.mxu0 %v1557
    %v1646 = vpop.f32.mrf.mxu0
    %v1647 = vadd.f32 %v1524, %v1646
    %1648 = vdwg.mxu0
    %1649 = vmatpush.msra.mxu0 0.0
    %1650 = vmatpush.msra.mxu0 0.0
    %1651 = vmatpush.msra.mxu0 0.0
    %1652 = vmatpush.msra.mxu0 0.0
    %1653 = vmatpush.msra.mxu0 0.0
    %1654 = vmatpush.msra.mxu0 0.0
    %1655 = vmatpush.msra.mxu0 0.0
    %1656 = vmatpush.msra.mxu0 0.0
    %1657 = vmatpush.msra.mxu0 0.0
    %1658 = vmatpush.msra.mxu0 0.0
    %1659 = vmatpush.msra.mxu0 0.0
    %1660 = vmatpush.msra.mxu0 0.0
    %1661 = vmatpush.msra.mxu0 0.0
    %1662 = vmatpush.msra.mxu0 0.0
    %1663 = vmatpush.msra.mxu0 0.0
    %1664 = vmatpush.msra.mxu0 %v1567
    %1665 = vmatmul.f32.gmra.mxu0 %v1557
    %v1666 = vpop.f32.mrf.mxu0
    %v1667 = vadd.f32 %v1544, %v1666
    %1668 = vdwg.mxu0
    %s1669 = scalar_lea.vmem %s3, 8
    %v1670 = vld [vmem:[%s1669] sm:$0xf]
    %v1671 = vld [vmem:[#allocation2] sm:$0xff]
    %v1672 = vld [vmem:[#allocation2 + $0x8] sm:$0xff]
    %v1673 = vld [vmem:[#allocation2 + $0x10] sm:$0xf]
    %1677 = vst [vmem:[#allocation1] ss:$2 sm:$0xff] %v1671
    %s1678 = scalar_lea.vmem [#allocation1], 16
    %1679 = vst [vmem:[%s1678] ss:$2 sm:$0xff] %v1672
    %s1680 = scalar_lea.vmem [#allocation1], 32
    %1681 = vst [vmem:[%s1680] ss:$2 sm:$0xff] %v1673
    %v1682 = vld.sshfl [vmem:[#allocation1] sm:$0xff pattern:$0x75316420]
    %v1683 = vld.sshfl [vmem:[#allocation1 + $0x8] sm:$0xff pattern:$0x75316420]
    %v1684 = vld.sshfl [vmem:[#allocation1 + $0x10] sm:$0xff pattern:$0x75316420]
    %v1685 = vld.sshfl [vmem:[#allocation1 + $0x18] sm:$0xff pattern:$0x75316420]
    %v1686 = vld.sshfl [vmem:[#allocation1 + $0x20] sm:$0xff pattern:$0x75316420]
    %1687 = vrot.lane.b32.xlu0 %v1682, 126
    %v1688 = vpop.permute.xlu0 %1687
    %1689 = vrot.lane.b32.xlu0 %v1683, 126
    %v1690 = vpop.permute.xlu0 %1689
    %1691 = vrot.lane.b32.xlu0 %v1684, 126
    %v1692 = vpop.permute.xlu0 %1691
    %1693 = vrot.lane.b32.xlu0 %v1685, 126
    %v1694 = vpop.permute.xlu0 %1693
    %1695 = vrot.lane.b32.xlu0 %v1686, 126
    %v1696 = vpop.permute.xlu0 %1695
    %v1697 = vsel %vm339, %v1688, %v1690
    %v1698 = vsel %vm339, %v1690, %v1692
    %v1699 = vsel %vm339, %v1692, %v1694
    %v1700 = vsel %vm339, %v1694, %v1696
    %v1702 = vsel %vm73, %v1670, 0
    %v1704 = vsel %vm77, %v1697, 0
    %v1706 = vsel %vm77, %v1698, 0
    %v1708 = vsel %vm77, %v1699, 0
    %v1710 = vsel %vm77, %v1700, 0
    %v1712 = vsel %vm77, %v1696, 0
    %1714 = vmatpush.msra.mxu0 0.0
    %1715 = vmatpush.msra.mxu0 0.0
    %1716 = vmatpush.msra.mxu0 0.0
    %1717 = vmatpush.msra.mxu0 0.0
    %1718 = vmatpush.msra.mxu0 0.0
    %1719 = vmatpush.msra.mxu0 0.0
    %1720 = vmatpush.msra.mxu0 0.0
    %1721 = vmatpush.msra.mxu0 0.0
    %1722 = vmatpush.msra.mxu0 0.0
    %1723 = vmatpush.msra.mxu0 0.0
    %1724 = vmatpush.msra.mxu0 0.0
    %1725 = vmatpush.msra.mxu0 0.0
    %1726 = vmatpush.msra.mxu0 0.0
    %1727 = vmatpush.msra.mxu0 0.0
    %1728 = vmatpush.msra.mxu0 0.0
    %1729 = vmatpush.msra.mxu0 %v1704
    %1730 = vmatmul.f32.gmra.mxu0 %v1702
    %v1731 = vpop.f32.mrf.mxu0
    %v1732 = vadd.f32 0.0, %v1731
    %1733 = vdwg.mxu0
    %1734 = vmatpush.msra.mxu0 0.0
    %1735 = vmatpush.msra.mxu0 0.0
    %1736 = vmatpush.msra.mxu0 0.0
    %1737 = vmatpush.msra.mxu0 0.0
    %1738 = vmatpush.msra.mxu0 0.0
    %1739 = vmatpush.msra.mxu0 0.0
    %1740 = vmatpush.msra.mxu0 0.0
    %1741 = vmatpush.msra.mxu0 0.0
    %1742 = vmatpush.msra.mxu0 0.0
    %1743 = vmatpush.msra.mxu0 0.0
    %1744 = vmatpush.msra.mxu0 0.0
    %1745 = vmatpush.msra.mxu0 0.0
    %1746 = vmatpush.msra.mxu0 0.0
    %1747 = vmatpush.msra.mxu0 0.0
    %1748 = vmatpush.msra.mxu0 0.0
    %1749 = vmatpush.msra.mxu0 %v1706
    %1750 = vmatmul.f32.gmra.mxu0 %v1702
    %v1751 = vpop.f32.mrf.mxu0
    %v1752 = vadd.f32 0.0, %v1751
    %1753 = vdwg.mxu0
    %1754 = vmatpush.msra.mxu0 0.0
    %1755 = vmatpush.msra.mxu0 0.0
    %1756 = vmatpush.msra.mxu0 0.0
    %1757 = vmatpush.msra.mxu0 0.0
    %1758 = vmatpush.msra.mxu0 0.0
    %1759 = vmatpush.msra.mxu0 0.0
    %1760 = vmatpush.msra.mxu0 0.0
    %1761 = vmatpush.msra.mxu0 0.0
    %1762 = vmatpush.msra.mxu0 0.0
    %1763 = vmatpush.msra.mxu0 0.0
    %1764 = vmatpush.msra.mxu0 0.0
    %1765 = vmatpush.msra.mxu0 0.0
    %1766 = vmatpush.msra.mxu0 0.0
    %1767 = vmatpush.msra.mxu0 0.0
    %1768 = vmatpush.msra.mxu0 0.0
    %1769 = vmatpush.msra.mxu0 %v1708
    %1770 = vmatmul.f32.gmra.mxu0 %v1702
    %v1771 = vpop.f32.mrf.mxu0
    %v1772 = vadd.f32 0.0, %v1771
    %1773 = vdwg.mxu0
    %1774 = vmatpush.msra.mxu0 0.0
    %1775 = vmatpush.msra.mxu0 0.0
    %1776 = vmatpush.msra.mxu0 0.0
    %1777 = vmatpush.msra.mxu0 0.0
    %1778 = vmatpush.msra.mxu0 0.0
    %1779 = vmatpush.msra.mxu0 0.0
    %1780 = vmatpush.msra.mxu0 0.0
    %1781 = vmatpush.msra.mxu0 0.0
    %1782 = vmatpush.msra.mxu0 0.0
    %1783 = vmatpush.msra.mxu0 0.0
    %1784 = vmatpush.msra.mxu0 0.0
    %1785 = vmatpush.msra.mxu0 0.0
    %1786 = vmatpush.msra.mxu0 0.0
    %1787 = vmatpush.msra.mxu0 0.0
    %1788 = vmatpush.msra.mxu0 0.0
    %1789 = vmatpush.msra.mxu0 %v1710
    %1790 = vmatmul.f32.gmra.mxu0 %v1702
    %v1791 = vpop.f32.mrf.mxu0
    %v1792 = vadd.f32 0.0, %v1791
    %1793 = vdwg.mxu0
    %1794 = vmatpush.msra.mxu0 0.0
    %1795 = vmatpush.msra.mxu0 0.0
    %1796 = vmatpush.msra.mxu0 0.0
    %1797 = vmatpush.msra.mxu0 0.0
    %1798 = vmatpush.msra.mxu0 0.0
    %1799 = vmatpush.msra.mxu0 0.0
    %1800 = vmatpush.msra.mxu0 0.0
    %1801 = vmatpush.msra.mxu0 0.0
    %1802 = vmatpush.msra.mxu0 0.0
    %1803 = vmatpush.msra.mxu0 0.0
    %1804 = vmatpush.msra.mxu0 0.0
    %1805 = vmatpush.msra.mxu0 0.0
    %1806 = vmatpush.msra.mxu0 0.0
    %1807 = vmatpush.msra.mxu0 0.0
    %1808 = vmatpush.msra.mxu0 0.0
    %1809 = vmatpush.msra.mxu0 %v1712
    %1810 = vmatmul.f32.gmra.mxu0 %v1702
    %v1811 = vpop.f32.mrf.mxu0
    %v1812 = vadd.f32 0.0, %v1811
    %1813 = vdwg.mxu0
    %v1814 = vadd.f32 %v1587, %v1732
    %v1815 = vadd.f32 %v1607, %v1752
    %v1816 = vadd.f32 %v1627, %v1772
    %v1817 = vadd.f32 %v1647, %v1792
    %v1818 = vadd.f32 %v1667, %v1812
    %s1819 = scalar_lea.vmem %s3, 12
    %v1820 = vld [vmem:[%s1819] sm:$0xf]
    %v1821 = vld [vmem:[#allocation2] sm:$0xff]
    %v1822 = vld [vmem:[#allocation2 + $0x8] sm:$0xff]
    %v1823 = vld [vmem:[#allocation2 + $0x10] sm:$0xf]
    %1827 = vst [vmem:[#allocation1] ss:$2 sm:$0xff] %v1821
    %s1828 = scalar_lea.vmem [#allocation1], 16
    %1829 = vst [vmem:[%s1828] ss:$2 sm:$0xff] %v1822
    %s1830 = scalar_lea.vmem [#allocation1], 32
    %1831 = vst [vmem:[%s1830] ss:$2 sm:$0xff] %v1823
    %v1832 = vld.sshfl [vmem:[#allocation1] sm:$0xff pattern:$0x75316420]
    %v1833 = vld.sshfl [vmem:[#allocation1 + $0x8] sm:$0xff pattern:$0x75316420]
    %v1834 = vld.sshfl [vmem:[#allocation1 + $0x10] sm:$0xff pattern:$0x75316420]
    %v1835 = vld.sshfl [vmem:[#allocation1 + $0x18] sm:$0xff pattern:$0x75316420]
    %v1836 = vld.sshfl [vmem:[#allocation1 + $0x20] sm:$0xff pattern:$0x75316420]
    %1837 = vrot.lane.b32.xlu0 %v1832, 112
    %v1838 = vpop.permute.xlu0 %1837
    %1839 = vrot.lane.b32.xlu0 %v1833, 112
    %v1840 = vpop.permute.xlu0 %1839
    %1841 = vrot.lane.b32.xlu0 %v1834, 112
    %v1842 = vpop.permute.xlu0 %1841
    %1843 = vrot.lane.b32.xlu0 %v1835, 112
    %v1844 = vpop.permute.xlu0 %1843
    %1845 = vrot.lane.b32.xlu0 %v1836, 112
    %v1846 = vpop.permute.xlu0 %1845
    %v1847 = vsel %vm490, %v1838, %v1840
    %v1848 = vsel %vm490, %v1840, %v1842
    %v1849 = vsel %vm490, %v1842, %v1844
    %v1850 = vsel %vm490, %v1844, %v1846
    %v1852 = vsel %vm73, %v1820, 0
    %v1854 = vsel %vm77, %v1847, 0
    %v1856 = vsel %vm77, %v1848, 0
    %v1858 = vsel %vm77, %v1849, 0
    %v1860 = vsel %vm77, %v1850, 0
    %v1862 = vsel %vm77, %v1846, 0
    %1864 = vmatpush.msra.mxu0 0.0
    %1865 = vmatpush.msra.mxu0 0.0
    %1866 = vmatpush.msra.mxu0 0.0
    %1867 = vmatpush.msra.mxu0 0.0
    %1868 = vmatpush.msra.mxu0 0.0
    %1869 = vmatpush.msra.mxu0 0.0
    %1870 = vmatpush.msra.mxu0 0.0
    %1871 = vmatpush.msra.mxu0 0.0
    %1872 = vmatpush.msra.mxu0 0.0
    %1873 = vmatpush.msra.mxu0 0.0
    %1874 = vmatpush.msra.mxu0 0.0
    %1875 = vmatpush.msra.mxu0 0.0
    %1876 = vmatpush.msra.mxu0 0.0
    %1877 = vmatpush.msra.mxu0 0.0
    %1878 = vmatpush.msra.mxu0 0.0
    %1879 = vmatpush.msra.mxu0 %v1854
    %1880 = vmatmul.f32.gmra.mxu0 %v1852
    %v1881 = vpop.f32.mrf.mxu0
    %v1882 = vadd.f32 0.0, %v1881
    %1883 = vdwg.mxu0
    %1884 = vmatpush.msra.mxu0 0.0
    %1885 = vmatpush.msra.mxu0 0.0
    %1886 = vmatpush.msra.mxu0 0.0
    %1887 = vmatpush.msra.mxu0 0.0
    %1888 = vmatpush.msra.mxu0 0.0
    %1889 = vmatpush.msra.mxu0 0.0
    %1890 = vmatpush.msra.mxu0 0.0
    %1891 = vmatpush.msra.mxu0 0.0
    %1892 = vmatpush.msra.mxu0 0.0
    %1893 = vmatpush.msra.mxu0 0.0
    %1894 = vmatpush.msra.mxu0 0.0
    %1895 = vmatpush.msra.mxu0 0.0
    %1896 = vmatpush.msra.mxu0 0.0
    %1897 = vmatpush.msra.mxu0 0.0
    %1898 = vmatpush.msra.mxu0 0.0
    %1899 = vmatpush.msra.mxu0 %v1856
    %1900 = vmatmul.f32.gmra.mxu0 %v1852
    %v1901 = vpop.f32.mrf.mxu0
    %v1902 = vadd.f32 0.0, %v1901
    %1903 = vdwg.mxu0
    %1904 = vmatpush.msra.mxu0 0.0
    %1905 = vmatpush.msra.mxu0 0.0
    %1906 = vmatpush.msra.mxu0 0.0
    %1907 = vmatpush.msra.mxu0 0.0
    %1908 = vmatpush.msra.mxu0 0.0
    %1909 = vmatpush.msra.mxu0 0.0
    %1910 = vmatpush.msra.mxu0 0.0
    %1911 = vmatpush.msra.mxu0 0.0
    %1912 = vmatpush.msra.mxu0 0.0
    %1913 = vmatpush.msra.mxu0 0.0
    %1914 = vmatpush.msra.mxu0 0.0
    %1915 = vmatpush.msra.mxu0 0.0
    %1916 = vmatpush.msra.mxu0 0.0
    %1917 = vmatpush.msra.mxu0 0.0
    %1918 = vmatpush.msra.mxu0 0.0
    %1919 = vmatpush.msra.mxu0 %v1858
    %1920 = vmatmul.f32.gmra.mxu0 %v1852
    %v1921 = vpop.f32.mrf.mxu0
    %v1922 = vadd.f32 0.0, %v1921
    %1923 = vdwg.mxu0
    %1924 = vmatpush.msra.mxu0 0.0
    %1925 = vmatpush.msra.mxu0 0.0
    %1926 = vmatpush.msra.mxu0 0.0
    %1927 = vmatpush.msra.mxu0 0.0
    %1928 = vmatpush.msra.mxu0 0.0
    %1929 = vmatpush.msra.mxu0 0.0
    %1930 = vmatpush.msra.mxu0 0.0
    %1931 = vmatpush.msra.mxu0 0.0
    %1932 = vmatpush.msra.mxu0 0.0
    %1933 = vmatpush.msra.mxu0 0.0
    %1934 = vmatpush.msra.mxu0 0.0
    %1935 = vmatpush.msra.mxu0 0.0
    %1936 = vmatpush.msra.mxu0 0.0
    %1937 = vmatpush.msra.mxu0 0.0
    %1938 = vmatpush.msra.mxu0 0.0
    %1939 = vmatpush.msra.mxu0 %v1860
    %1940 = vmatmul.f32.gmra.mxu0 %v1852
    %v1941 = vpop.f32.mrf.mxu0
    %v1942 = vadd.f32 0.0, %v1941
    %1943 = vdwg.mxu0
    %1944 = vmatpush.msra.mxu0 0.0
    %1945 = vmatpush.msra.mxu0 0.0
    %1946 = vmatpush.msra.mxu0 0.0
    %1947 = vmatpush.msra.mxu0 0.0
    %1948 = vmatpush.msra.mxu0 0.0
    %1949 = vmatpush.msra.mxu0 0.0
    %1950 = vmatpush.msra.mxu0 0.0
    %1951 = vmatpush.msra.mxu0 0.0
    %1952 = vmatpush.msra.mxu0 0.0
    %1953 = vmatpush.msra.mxu0 0.0
    %1954 = vmatpush.msra.mxu0 0.0
    %1955 = vmatpush.msra.mxu0 0.0
    %1956 = vmatpush.msra.mxu0 0.0
    %1957 = vmatpush.msra.mxu0 0.0
    %1958 = vmatpush.msra.mxu0 0.0
    %1959 = vmatpush.msra.mxu0 %v1862
    %1960 = vmatmul.f32.gmra.mxu0 %v1852
    %v1961 = vpop.f32.mrf.mxu0
    %v1962 = vadd.f32 0.0, %v1961
    %1963 = vdwg.mxu0
    %v1964 = vadd.f32 %v1814, %v1882
    %v1965 = vadd.f32 %v1815, %v1902
    %v1966 = vadd.f32 %v1816, %v1922
    %v1967 = vadd.f32 %v1817, %v1942
    %v1968 = vadd.f32 %v1818, %v1962
    %s1969 = scalar_lea.vmem %s3, 16
    %v1970 = vld [vmem:[%s1969] sm:$0xf]
    %v1971 = vld [vmem:[#allocation2] sm:$0xff]
    %v1972 = vld [vmem:[#allocation2 + $0x8] sm:$0xff]
    %v1973 = vld [vmem:[#allocation2 + $0x10] sm:$0xf]
    %1977 = vst [vmem:[#allocation1] ss:$2 sm:$0xff] %v1971
    %s1978 = scalar_lea.vmem [#allocation1], 16
    %1979 = vst [vmem:[%s1978] ss:$2 sm:$0xff] %v1972
    %s1980 = scalar_lea.vmem [#allocation1], 32
    %1981 = vst [vmem:[%s1980] ss:$2 sm:$0xff] %v1973
    %v1982 = vld.sshfl [vmem:[#allocation1] sm:$0xff pattern:$0x75316420]
    %v1983 = vld.sshfl [vmem:[#allocation1 + $0x8] sm:$0xff pattern:$0x75316420]
    %v1984 = vld.sshfl [vmem:[#allocation1 + $0x10] sm:$0xff pattern:$0x75316420]
    %v1985 = vld.sshfl [vmem:[#allocation1 + $0x18] sm:$0xff pattern:$0x75316420]
    %v1986 = vld.sshfl [vmem:[#allocation1 + $0x20] sm:$0xff pattern:$0x75316420]
    %1987 = vrot.lane.b32.xlu0 %v1982, 111
    %v1988 = vpop.permute.xlu0 %1987
    %1989 = vrot.lane.b32.xlu0 %v1983, 111
    %v1990 = vpop.permute.xlu0 %1989
    %1991 = vrot.lane.b32.xlu0 %v1984, 111
    %v1992 = vpop.permute.xlu0 %1991
    %1993 = vrot.lane.b32.xlu0 %v1985, 111
    %v1994 = vpop.permute.xlu0 %1993
    %1995 = vrot.lane.b32.xlu0 %v1986, 111
    %v1996 = vpop.permute.xlu0 %1995
    %v1997 = vsel %vm641, %v1988, %v1990
    %v1998 = vsel %vm641, %v1990, %v1992
    %v1999 = vsel %vm641, %v1992, %v1994
    %v2000 = vsel %vm641, %v1994, %v1996
    %v2002 = vsel %vm73, %v1970, 0
    %v2004 = vsel %vm77, %v1997, 0
    %v2006 = vsel %vm77, %v1998, 0
    %v2008 = vsel %vm77, %v1999, 0
    %v2010 = vsel %vm77, %v2000, 0
    %v2012 = vsel %vm77, %v1996, 0
    %2014 = vmatpush.msra.mxu0 0.0
    %2015 = vmatpush.msra.mxu0 0.0
    %2016 = vmatpush.msra.mxu0 0.0
    %2017 = vmatpush.msra.mxu0 0.0
    %2018 = vmatpush.msra.mxu0 0.0
    %2019 = vmatpush.msra.mxu0 0.0
    %2020 = vmatpush.msra.mxu0 0.0
    %2021 = vmatpush.msra.mxu0 0.0
    %2022 = vmatpush.msra.mxu0 0.0
    %2023 = vmatpush.msra.mxu0 0.0
    %2024 = vmatpush.msra.mxu0 0.0
    %2025 = vmatpush.msra.mxu0 0.0
    %2026 = vmatpush.msra.mxu0 0.0
    %2027 = vmatpush.msra.mxu0 0.0
    %2028 = vmatpush.msra.mxu0 0.0
    %2029 = vmatpush.msra.mxu0 %v2004
    %2030 = vmatmul.f32.gmra.mxu0 %v2002
    %v2031 = vpop.f32.mrf.mxu0
    %v2032 = vadd.f32 0.0, %v2031
    %2033 = vdwg.mxu0
    %2034 = vmatpush.msra.mxu0 0.0
    %2035 = vmatpush.msra.mxu0 0.0
    %2036 = vmatpush.msra.mxu0 0.0
    %2037 = vmatpush.msra.mxu0 0.0
    %2038 = vmatpush.msra.mxu0 0.0
    %2039 = vmatpush.msra.mxu0 0.0
    %2040 = vmatpush.msra.mxu0 0.0
    %2041 = vmatpush.msra.mxu0 0.0
    %2042 = vmatpush.msra.mxu0 0.0
    %2043 = vmatpush.msra.mxu0 0.0
    %2044 = vmatpush.msra.mxu0 0.0
    %2045 = vmatpush.msra.mxu0 0.0
    %2046 = vmatpush.msra.mxu0 0.0
    %2047 = vmatpush.msra.mxu0 0.0
    %2048 = vmatpush.msra.mxu0 0.0
    %2049 = vmatpush.msra.mxu0 %v2006
    %2050 = vmatmul.f32.gmra.mxu0 %v2002
    %v2051 = vpop.f32.mrf.mxu0
    %v2052 = vadd.f32 0.0, %v2051
    %2053 = vdwg.mxu0
    %2054 = vmatpush.msra.mxu0 0.0
    %2055 = vmatpush.msra.mxu0 0.0
    %2056 = vmatpush.msra.mxu0 0.0
    %2057 = vmatpush.msra.mxu0 0.0
    %2058 = vmatpush.msra.mxu0 0.0
    %2059 = vmatpush.msra.mxu0 0.0
    %2060 = vmatpush.msra.mxu0 0.0
    %2061 = vmatpush.msra.mxu0 0.0
    %2062 = vmatpush.msra.mxu0 0.0
    %2063 = vmatpush.msra.mxu0 0.0
    %2064 = vmatpush.msra.mxu0 0.0
    %2065 = vmatpush.msra.mxu0 0.0
    %2066 = vmatpush.msra.mxu0 0.0
    %2067 = vmatpush.msra.mxu0 0.0
    %2068 = vmatpush.msra.mxu0 0.0
    %2069 = vmatpush.msra.mxu0 %v2008
    %2070 = vmatmul.f32.gmra.mxu0 %v2002
    %v2071 = vpop.f32.mrf.mxu0
    %v2072 = vadd.f32 0.0, %v2071
    %2073 = vdwg.mxu0
    %2074 = vmatpush.msra.mxu0 0.0
    %2075 = vmatpush.msra.mxu0 0.0
    %2076 = vmatpush.msra.mxu0 0.0
    %2077 = vmatpush.msra.mxu0 0.0
    %2078 = vmatpush.msra.mxu0 0.0
    %2079 = vmatpush.msra.mxu0 0.0
    %2080 = vmatpush.msra.mxu0 0.0
    %2081 = vmatpush.msra.mxu0 0.0
    %2082 = vmatpush.msra.mxu0 0.0
    %2083 = vmatpush.msra.mxu0 0.0
    %2084 = vmatpush.msra.mxu0 0.0
    %2085 = vmatpush.msra.mxu0 0.0
    %2086 = vmatpush.msra.mxu0 0.0
    %2087 = vmatpush.msra.mxu0 0.0
    %2088 = vmatpush.msra.mxu0 0.0
    %2089 = vmatpush.msra.mxu0 %v2010
    %2090 = vmatmul.f32.gmra.mxu0 %v2002
    %v2091 = vpop.f32.mrf.mxu0
    %v2092 = vadd.f32 0.0, %v2091
    %2093 = vdwg.mxu0
    %2094 = vmatpush.msra.mxu0 0.0
    %2095 = vmatpush.msra.mxu0 0.0
    %2096 = vmatpush.msra.mxu0 0.0
    %2097 = vmatpush.msra.mxu0 0.0
    %2098 = vmatpush.msra.mxu0 0.0
    %2099 = vmatpush.msra.mxu0 0.0
    %2100 = vmatpush.msra.mxu0 0.0
    %2101 = vmatpush.msra.mxu0 0.0
    %2102 = vmatpush.msra.mxu0 0.0
    %2103 = vmatpush.msra.mxu0 0.0
    %2104 = vmatpush.msra.mxu0 0.0
    %2105 = vmatpush.msra.mxu0 0.0
    %2106 = vmatpush.msra.mxu0 0.0
    %2107 = vmatpush.msra.mxu0 0.0
    %2108 = vmatpush.msra.mxu0 0.0
    %2109 = vmatpush.msra.mxu0 %v2012
    %2110 = vmatmul.f32.gmra.mxu0 %v2002
    %v2111 = vpop.f32.mrf.mxu0
    %v2112 = vadd.f32 0.0, %v2111
    %2113 = vdwg.mxu0
    %v2114 = vadd.f32 %v1964, %v2032
    %v2115 = vadd.f32 %v1965, %v2052
    %v2116 = vadd.f32 %v1966, %v2072
    %v2117 = vadd.f32 %v1967, %v2092
    %v2118 = vadd.f32 %v1968, %v2112
    %s2119 = scalar_lea.vmem %s3, 20
    %v2120 = vld [vmem:[%s2119] sm:$0xf]
    %v2121 = vld [vmem:[#allocation2] sm:$0xff]
    %v2122 = vld [vmem:[#allocation2 + $0x8] sm:$0xff]
    %v2123 = vld [vmem:[#allocation2 + $0x10] sm:$0xf]
    %2127 = vst [vmem:[#allocation1] ss:$2 sm:$0xff] %v2121
    %s2128 = scalar_lea.vmem [#allocation1], 16
    %2129 = vst [vmem:[%s2128] ss:$2 sm:$0xff] %v2122
    %s2130 = scalar_lea.vmem [#allocation1], 32
    %2131 = vst [vmem:[%s2130] ss:$2 sm:$0xff] %v2123
    %v2132 = vld.sshfl [vmem:[#allocation1] sm:$0xff pattern:$0x75316420]
    %v2133 = vld.sshfl [vmem:[#allocation1 + $0x8] sm:$0xff pattern:$0x75316420]
    %v2134 = vld.sshfl [vmem:[#allocation1 + $0x10] sm:$0xff pattern:$0x75316420]
    %v2135 = vld.sshfl [vmem:[#allocation1 + $0x18] sm:$0xff pattern:$0x75316420]
    %v2136 = vld.sshfl [vmem:[#allocation1 + $0x20] sm:$0xff pattern:$0x75316420]
    %2137 = vrot.lane.b32.xlu0 %v2132, 110
    %v2138 = vpop.permute.xlu0 %2137
    %2139 = vrot.lane.b32.xlu0 %v2133, 110
    %v2140 = vpop.permute.xlu0 %2139
    %2141 = vrot.lane.b32.xlu0 %v2134, 110
    %v2142 = vpop.permute.xlu0 %2141
    %2143 = vrot.lane.b32.xlu0 %v2135, 110
    %v2144 = vpop.permute.xlu0 %2143
    %2145 = vrot.lane.b32.xlu0 %v2136, 110
    %v2146 = vpop.permute.xlu0 %2145
    %v2147 = vsel %vm792, %v2138, %v2140
    %v2148 = vsel %vm792, %v2140, %v2142
    %v2149 = vsel %vm792, %v2142, %v2144
    %v2150 = vsel %vm792, %v2144, %v2146
    %v2152 = vsel %vm73, %v2120, 0
    %v2154 = vsel %vm77, %v2147, 0
    %v2156 = vsel %vm77, %v2148, 0
    %v2158 = vsel %vm77, %v2149, 0
    %v2160 = vsel %vm77, %v2150, 0
    %v2162 = vsel %vm77, %v2146, 0
    %2164 = vmatpush.msra.mxu0 0.0
    %2165 = vmatpush.msra.mxu0 0.0
    %2166 = vmatpush.msra.mxu0 0.0
    %2167 = vmatpush.msra.mxu0 0.0
    %2168 = vmatpush.msra.mxu0 0.0
    %2169 = vmatpush.msra.mxu0 0.0
    %2170 = vmatpush.msra.mxu0 0.0
    %2171 = vmatpush.msra.mxu0 0.0
    %2172 = vmatpush.msra.mxu0 0.0
    %2173 = vmatpush.msra.mxu0 0.0
    %2174 = vmatpush.msra.mxu0 0.0
    %2175 = vmatpush.msra.mxu0 0.0
    %2176 = vmatpush.msra.mxu0 0.0
    %2177 = vmatpush.msra.mxu0 0.0
    %2178 = vmatpush.msra.mxu0 0.0
    %2179 = vmatpush.msra.mxu0 %v2154
    %2180 = vmatmul.f32.gmra.mxu0 %v2152
    %v2181 = vpop.f32.mrf.mxu0
    %v2182 = vadd.f32 0.0, %v2181
    %2183 = vdwg.mxu0
    %2184 = vmatpush.msra.mxu0 0.0
    %2185 = vmatpush.msra.mxu0 0.0
    %2186 = vmatpush.msra.mxu0 0.0
    %2187 = vmatpush.msra.mxu0 0.0
    %2188 = vmatpush.msra.mxu0 0.0
    %2189 = vmatpush.msra.mxu0 0.0
    %2190 = vmatpush.msra.mxu0 0.0
    %2191 = vmatpush.msra.mxu0 0.0
    %2192 = vmatpush.msra.mxu0 0.0
    %2193 = vmatpush.msra.mxu0 0.0
    %2194 = vmatpush.msra.mxu0 0.0
    %2195 = vmatpush.msra.mxu0 0.0
    %2196 = vmatpush.msra.mxu0 0.0
    %2197 = vmatpush.msra.mxu0 0.0
    %2198 = vmatpush.msra.mxu0 0.0
    %2199 = vmatpush.msra.mxu0 %v2156
    %2200 = vmatmul.f32.gmra.mxu0 %v2152
    %v2201 = vpop.f32.mrf.mxu0
    %v2202 = vadd.f32 0.0, %v2201
    %2203 = vdwg.mxu0
    %2204 = vmatpush.msra.mxu0 0.0
    %2205 = vmatpush.msra.mxu0 0.0
    %2206 = vmatpush.msra.mxu0 0.0
    %2207 = vmatpush.msra.mxu0 0.0
    %2208 = vmatpush.msra.mxu0 0.0
    %2209 = vmatpush.msra.mxu0 0.0
    %2210 = vmatpush.msra.mxu0 0.0
    %2211 = vmatpush.msra.mxu0 0.0
    %2212 = vmatpush.msra.mxu0 0.0
    %2213 = vmatpush.msra.mxu0 0.0
    %2214 = vmatpush.msra.mxu0 0.0
    %2215 = vmatpush.msra.mxu0 0.0
    %2216 = vmatpush.msra.mxu0 0.0
    %2217 = vmatpush.msra.mxu0 0.0
    %2218 = vmatpush.msra.mxu0 0.0
    %2219 = vmatpush.msra.mxu0 %v2158
    %2220 = vmatmul.f32.gmra.mxu0 %v2152
    %v2221 = vpop.f32.mrf.mxu0
    %v2222 = vadd.f32 0.0, %v2221
    %2223 = vdwg.mxu0
    %2224 = vmatpush.msra.mxu0 0.0
    %2225 = vmatpush.msra.mxu0 0.0
    %2226 = vmatpush.msra.mxu0 0.0
    %2227 = vmatpush.msra.mxu0 0.0
    %2228 = vmatpush.msra.mxu0 0.0
    %2229 = vmatpush.msra.mxu0 0.0
    %2230 = vmatpush.msra.mxu0 0.0
    %2231 = vmatpush.msra.mxu0 0.0
    %2232 = vmatpush.msra.mxu0 0.0
    %2233 = vmatpush.msra.mxu0 0.0
    %2234 = vmatpush.msra.mxu0 0.0
    %2235 = vmatpush.msra.mxu0 0.0
    %2236 = vmatpush.msra.mxu0 0.0
    %2237 = vmatpush.msra.mxu0 0.0
    %2238 = vmatpush.msra.mxu0 0.0
    %2239 = vmatpush.msra.mxu0 %v2160
    %2240 = vmatmul.f32.gmra.mxu0 %v2152
    %v2241 = vpop.f32.mrf.mxu0
    %v2242 = vadd.f32 0.0, %v2241
    %2243 = vdwg.mxu0
    %2244 = vmatpush.msra.mxu0 0.0
    %2245 = vmatpush.msra.mxu0 0.0
    %2246 = vmatpush.msra.mxu0 0.0
    %2247 = vmatpush.msra.mxu0 0.0
    %2248 = vmatpush.msra.mxu0 0.0
    %2249 = vmatpush.msra.mxu0 0.0
    %2250 = vmatpush.msra.mxu0 0.0
    %2251 = vmatpush.msra.mxu0 0.0
    %2252 = vmatpush.msra.mxu0 0.0
    %2253 = vmatpush.msra.mxu0 0.0
    %2254 = vmatpush.msra.mxu0 0.0
    %2255 = vmatpush.msra.mxu0 0.0
    %2256 = vmatpush.msra.mxu0 0.0
    %2257 = vmatpush.msra.mxu0 0.0
    %2258 = vmatpush.msra.mxu0 0.0
    %2259 = vmatpush.msra.mxu0 %v2162
    %2260 = vmatmul.f32.gmra.mxu0 %v2152
    %v2261 = vpop.f32.mrf.mxu0
    %v2262 = vadd.f32 0.0, %v2261
    %2263 = vdwg.mxu0
    %v2264 = vadd.f32 %v2114, %v2182
    %v2265 = vadd.f32 %v2115, %v2202
    %v2266 = vadd.f32 %v2116, %v2222
    %v2267 = vadd.f32 %v2117, %v2242
    %v2268 = vadd.f32 %v2118, %v2262
    %s2269 = scalar_lea.vmem %s3, 24
    %v2270 = vld [vmem:[%s2269] sm:$0xf]
    %v2271 = vld [vmem:[#allocation2] sm:$0xff]
    %v2272 = vld [vmem:[#allocation2 + $0x8] sm:$0xff]
    %v2273 = vld [vmem:[#allocation2 + $0x10] sm:$0xf]
    %2277 = vst [vmem:[#allocation1] ss:$2 sm:$0xff] %v2271
    %s2278 = scalar_lea.vmem [#allocation1], 16
    %2279 = vst [vmem:[%s2278] ss:$2 sm:$0xff] %v2272
    %s2280 = scalar_lea.vmem [#allocation1], 32
    %2281 = vst [vmem:[%s2280] ss:$2 sm:$0xff] %v2273
    %v2282 = vld.sshfl [vmem:[#allocation1] sm:$0xff pattern:$0x75316420]
    %v2283 = vld.sshfl [vmem:[#allocation1 + $0x8] sm:$0xff pattern:$0x75316420]
    %v2284 = vld.sshfl [vmem:[#allocation1 + $0x10] sm:$0xff pattern:$0x75316420]
    %v2285 = vld.sshfl [vmem:[#allocation1 + $0x18] sm:$0xff pattern:$0x75316420]
    %v2286 = vld.sshfl [vmem:[#allocation1 + $0x20] sm:$0xff pattern:$0x75316420]
    %2287 = vrot.lane.b32.xlu0 %v2282, 96
    %v2288 = vpop.permute.xlu0 %2287
    %2289 = vrot.lane.b32.xlu0 %v2283, 96
    %v2290 = vpop.permute.xlu0 %2289
    %2291 = vrot.lane.b32.xlu0 %v2284, 96
    %v2292 = vpop.permute.xlu0 %2291
    %2293 = vrot.lane.b32.xlu0 %v2285, 96
    %v2294 = vpop.permute.xlu0 %2293
    %2295 = vrot.lane.b32.xlu0 %v2286, 96
    %v2296 = vpop.permute.xlu0 %2295
    %v2297 = vsel %vm943, %v2288, %v2290
    %v2298 = vsel %vm943, %v2290, %v2292
    %v2299 = vsel %vm943, %v2292, %v2294
    %v2300 = vsel %vm943, %v2294, %v2296
    %v2302 = vsel %vm73, %v2270, 0
    %v2304 = vsel %vm77, %v2297, 0
    %v2306 = vsel %vm77, %v2298, 0
    %v2308 = vsel %vm77, %v2299, 0
    %v2310 = vsel %vm77, %v2300, 0
    %v2312 = vsel %vm77, %v2296, 0
    %2314 = vmatpush.msra.mxu0 0.0
    %2315 = vmatpush.msra.mxu0 0.0
    %2316 = vmatpush.msra.mxu0 0.0
    %2317 = vmatpush.msra.mxu0 0.0
    %2318 = vmatpush.msra.mxu0 0.0
    %2319 = vmatpush.msra.mxu0 0.0
    %2320 = vmatpush.msra.mxu0 0.0
    %2321 = vmatpush.msra.mxu0 0.0
    %2322 = vmatpush.msra.mxu0 0.0
    %2323 = vmatpush.msra.mxu0 0.0
    %2324 = vmatpush.msra.mxu0 0.0
    %2325 = vmatpush.msra.mxu0 0.0
    %2326 = vmatpush.msra.mxu0 0.0
    %2327 = vmatpush.msra.mxu0 0.0
    %2328 = vmatpush.msra.mxu0 0.0
    %2329 = vmatpush.msra.mxu0 %v2304
    %2330 = vmatmul.f32.gmra.mxu0 %v2302
    %v2331 = vpop.f32.mrf.mxu0
    %v2332 = vadd.f32 0.0, %v2331
    %2333 = vdwg.mxu0
    %2334 = vmatpush.msra.mxu0 0.0
    %2335 = vmatpush.msra.mxu0 0.0
    %2336 = vmatpush.msra.mxu0 0.0
    %2337 = vmatpush.msra.mxu0 0.0
    %2338 = vmatpush.msra.mxu0 0.0
    %2339 = vmatpush.msra.mxu0 0.0
    %2340 = vmatpush.msra.mxu0 0.0
    %2341 = vmatpush.msra.mxu0 0.0
    %2342 = vmatpush.msra.mxu0 0.0
    %2343 = vmatpush.msra.mxu0 0.0
    %2344 = vmatpush.msra.mxu0 0.0
    %2345 = vmatpush.msra.mxu0 0.0
    %2346 = vmatpush.msra.mxu0 0.0
    %2347 = vmatpush.msra.mxu0 0.0
    %2348 = vmatpush.msra.mxu0 0.0
    %2349 = vmatpush.msra.mxu0 %v2306
    %2350 = vmatmul.f32.gmra.mxu0 %v2302
    %v2351 = vpop.f32.mrf.mxu0
    %v2352 = vadd.f32 0.0, %v2351
    %2353 = vdwg.mxu0
    %2354 = vmatpush.msra.mxu0 0.0
    %2355 = vmatpush.msra.mxu0 0.0
    %2356 = vmatpush.msra.mxu0 0.0
    %2357 = vmatpush.msra.mxu0 0.0
    %2358 = vmatpush.msra.mxu0 0.0
    %2359 = vmatpush.msra.mxu0 0.0
    %2360 = vmatpush.msra.mxu0 0.0
    %2361 = vmatpush.msra.mxu0 0.0
    %2362 = vmatpush.msra.mxu0 0.0
    %2363 = vmatpush.msra.mxu0 0.0
    %2364 = vmatpush.msra.mxu0 0.0
    %2365 = vmatpush.msra.mxu0 0.0
    %2366 = vmatpush.msra.mxu0 0.0
    %2367 = vmatpush.msra.mxu0 0.0
    %2368 = vmatpush.msra.mxu0 0.0
    %2369 = vmatpush.msra.mxu0 %v2308
    %2370 = vmatmul.f32.gmra.mxu0 %v2302
    %v2371 = vpop.f32.mrf.mxu0
    %v2372 = vadd.f32 0.0, %v2371
    %2373 = vdwg.mxu0
    %2374 = vmatpush.msra.mxu0 0.0
    %2375 = vmatpush.msra.mxu0 0.0
    %2376 = vmatpush.msra.mxu0 0.0
    %2377 = vmatpush.msra.mxu0 0.0
    %2378 = vmatpush.msra.mxu0 0.0
    %2379 = vmatpush.msra.mxu0 0.0
    %2380 = vmatpush.msra.mxu0 0.0
    %2381 = vmatpush.msra.mxu0 0.0
    %2382 = vmatpush.msra.mxu0 0.0
    %2383 = vmatpush.msra.mxu0 0.0
    %2384 = vmatpush.msra.mxu0 0.0
    %2385 = vmatpush.msra.mxu0 0.0
    %2386 = vmatpush.msra.mxu0 0.0
    %2387 = vmatpush.msra.mxu0 0.0
    %2388 = vmatpush.msra.mxu0 0.0
    %2389 = vmatpush.msra.mxu0 %v2310
    %2390 = vmatmul.f32.gmra.mxu0 %v2302
    %v2391 = vpop.f32.mrf.mxu0
    %v2392 = vadd.f32 0.0, %v2391
    %2393 = vdwg.mxu0
    %2394 = vmatpush.msra.mxu0 0.0
    %2395 = vmatpush.msra.mxu0 0.0
    %2396 = vmatpush.msra.mxu0 0.0
    %2397 = vmatpush.msra.mxu0 0.0
    %2398 = vmatpush.msra.mxu0 0.0
    %2399 = vmatpush.msra.mxu0 0.0
    %2400 = vmatpush.msra.mxu0 0.0
    %2401 = vmatpush.msra.mxu0 0.0
    %2402 = vmatpush.msra.mxu0 0.0
    %2403 = vmatpush.msra.mxu0 0.0
    %2404 = vmatpush.msra.mxu0 0.0
    %2405 = vmatpush.msra.mxu0 0.0
    %2406 = vmatpush.msra.mxu0 0.0
    %2407 = vmatpush.msra.mxu0 0.0
    %2408 = vmatpush.msra.mxu0 0.0
    %2409 = vmatpush.msra.mxu0 %v2312
    %2410 = vmatmul.f32.gmra.mxu0 %v2302
    %v2411 = vpop.f32.mrf.mxu0
    %v2412 = vadd.f32 0.0, %v2411
    %2413 = vdwg.mxu0
    %v2414 = vadd.f32 %v2264, %v2332
    %v2415 = vadd.f32 %v2265, %v2352
    %v2416 = vadd.f32 %v2266, %v2372
    %v2417 = vadd.f32 %v2267, %v2392
    %v2418 = vadd.f32 %v2268, %v2412
    %s2419 = scalar_lea.vmem %s3, 28
    %v2420 = vld [vmem:[%s2419] sm:$0xf]
    %v2421 = vld [vmem:[#allocation2] sm:$0xff]
    %v2422 = vld [vmem:[#allocation2 + $0x8] sm:$0xff]
    %v2423 = vld [vmem:[#allocation2 + $0x10] sm:$0xf]
    %2427 = vst [vmem:[#allocation1] ss:$2 sm:$0xff] %v2421
    %s2428 = scalar_lea.vmem [#allocation1], 16
    %2429 = vst [vmem:[%s2428] ss:$2 sm:$0xff] %v2422
    %s2430 = scalar_lea.vmem [#allocation1], 32
    %2431 = vst [vmem:[%s2430] ss:$2 sm:$0xff] %v2423
    %v2432 = vld.sshfl [vmem:[#allocation1] sm:$0xff pattern:$0x75316420]
    %v2433 = vld.sshfl [vmem:[#allocation1 + $0x8] sm:$0xff pattern:$0x75316420]
    %v2434 = vld.sshfl [vmem:[#allocation1 + $0x10] sm:$0xff pattern:$0x75316420]
    %v2435 = vld.sshfl [vmem:[#allocation1 + $0x18] sm:$0xff pattern:$0x75316420]
    %v2436 = vld.sshfl [vmem:[#allocation1 + $0x20] sm:$0xff pattern:$0x75316420]
    %2437 = vrot.lane.b32.xlu0 %v2432, 95
    %v2438 = vpop.permute.xlu0 %2437
    %2439 = vrot.lane.b32.xlu0 %v2433, 95
    %v2440 = vpop.permute.xlu0 %2439
    %2441 = vrot.lane.b32.xlu0 %v2434, 95
    %v2442 = vpop.permute.xlu0 %2441
    %2443 = vrot.lane.b32.xlu0 %v2435, 95
    %v2444 = vpop.permute.xlu0 %2443
    %2445 = vrot.lane.b32.xlu0 %v2436, 95
    %v2446 = vpop.permute.xlu0 %2445
    %v2447 = vsel %vm1094, %v2438, %v2440
    %v2448 = vsel %vm1094, %v2440, %v2442
    %v2449 = vsel %vm1094, %v2442, %v2444
    %v2450 = vsel %vm1094, %v2444, %v2446
    %v2452 = vsel %vm73, %v2420, 0
    %v2454 = vsel %vm77, %v2447, 0
    %v2456 = vsel %vm77, %v2448, 0
    %v2458 = vsel %vm77, %v2449, 0
    %v2460 = vsel %vm77, %v2450, 0
    %v2462 = vsel %vm77, %v2446, 0
    %2464 = vmatpush.msra.mxu0 0.0
    %2465 = vmatpush.msra.mxu0 0.0
    %2466 = vmatpush.msra.mxu0 0.0
    %2467 = vmatpush.msra.mxu0 0.0
    %2468 = vmatpush.msra.mxu0 0.0
    %2469 = vmatpush.msra.mxu0 0.0
    %2470 = vmatpush.msra.mxu0 0.0
    %2471 = vmatpush.msra.mxu0 0.0
    %2472 = vmatpush.msra.mxu0 0.0
    %2473 = vmatpush.msra.mxu0 0.0
    %2474 = vmatpush.msra.mxu0 0.0
    %2475 = vmatpush.msra.mxu0 0.0
    %2476 = vmatpush.msra.mxu0 0.0
    %2477 = vmatpush.msra.mxu0 0.0
    %2478 = vmatpush.msra.mxu0 0.0
    %2479 = vmatpush.msra.mxu0 %v2454
    %2480 = vmatmul.f32.gmra.mxu0 %v2452
    %v2481 = vpop.f32.mrf.mxu0
    %v2482 = vadd.f32 0.0, %v2481
    %2483 = vdwg.mxu0
    %2484 = vmatpush.msra.mxu0 0.0
    %2485 = vmatpush.msra.mxu0 0.0
    %2486 = vmatpush.msra.mxu0 0.0
    %2487 = vmatpush.msra.mxu0 0.0
    %2488 = vmatpush.msra.mxu0 0.0
    %2489 = vmatpush.msra.mxu0 0.0
    %2490 = vmatpush.msra.mxu0 0.0
    %2491 = vmatpush.msra.mxu0 0.0
    %2492 = vmatpush.msra.mxu0 0.0
    %2493 = vmatpush.msra.mxu0 0.0
    %2494 = vmatpush.msra.mxu0 0.0
    %2495 = vmatpush.msra.mxu0 0.0
    %2496 = vmatpush.msra.mxu0 0.0
    %2497 = vmatpush.msra.mxu0 0.0
    %2498 = vmatpush.msra.mxu0 0.0
    %2499 = vmatpush.msra.mxu0 %v2456
    %2500 = vmatmul.f32.gmra.mxu0 %v2452
    %v2501 = vpop.f32.mrf.mxu0
    %v2502 = vadd.f32 0.0, %v2501
    %2503 = vdwg.mxu0
    %2504 = vmatpush.msra.mxu0 0.0
    %2505 = vmatpush.msra.mxu0 0.0
    %2506 = vmatpush.msra.mxu0 0.0
    %2507 = vmatpush.msra.mxu0 0.0
    %2508 = vmatpush.msra.mxu0 0.0
    %2509 = vmatpush.msra.mxu0 0.0
    %2510 = vmatpush.msra.mxu0 0.0
    %2511 = vmatpush.msra.mxu0 0.0
    %2512 = vmatpush.msra.mxu0 0.0
    %2513 = vmatpush.msra.mxu0 0.0
    %2514 = vmatpush.msra.mxu0 0.0
    %2515 = vmatpush.msra.mxu0 0.0
    %2516 = vmatpush.msra.mxu0 0.0
    %2517 = vmatpush.msra.mxu0 0.0
    %2518 = vmatpush.msra.mxu0 0.0
    %2519 = vmatpush.msra.mxu0 %v2458
    %2520 = vmatmul.f32.gmra.mxu0 %v2452
    %v2521 = vpop.f32.mrf.mxu0
    %v2522 = vadd.f32 0.0, %v2521
    %2523 = vdwg.mxu0
    %2524 = vmatpush.msra.mxu0 0.0
    %2525 = vmatpush.msra.mxu0 0.0
    %2526 = vmatpush.msra.mxu0 0.0
    %2527 = vmatpush.msra.mxu0 0.0
    %2528 = vmatpush.msra.mxu0 0.0
    %2529 = vmatpush.msra.mxu0 0.0
    %2530 = vmatpush.msra.mxu0 0.0
    %2531 = vmatpush.msra.mxu0 0.0
    %2532 = vmatpush.msra.mxu0 0.0
    %2533 = vmatpush.msra.mxu0 0.0
    %2534 = vmatpush.msra.mxu0 0.0
    %2535 = vmatpush.msra.mxu0 0.0
    %2536 = vmatpush.msra.mxu0 0.0
    %2537 = vmatpush.msra.mxu0 0.0
    %2538 = vmatpush.msra.mxu0 0.0
    %2539 = vmatpush.msra.mxu0 %v2460
    %2540 = vmatmul.f32.gmra.mxu0 %v2452
    %v2541 = vpop.f32.mrf.mxu0
    %v2542 = vadd.f32 0.0, %v2541
    %2543 = vdwg.mxu0
    %2544 = vmatpush.msra.mxu0 0.0
    %2545 = vmatpush.msra.mxu0 0.0
    %2546 = vmatpush.msra.mxu0 0.0
    %2547 = vmatpush.msra.mxu0 0.0
    %2548 = vmatpush.msra.mxu0 0.0
    %2549 = vmatpush.msra.mxu0 0.0
    %2550 = vmatpush.msra.mxu0 0.0
    %2551 = vmatpush.msra.mxu0 0.0
    %2552 = vmatpush.msra.mxu0 0.0
    %2553 = vmatpush.msra.mxu0 0.0
    %2554 = vmatpush.msra.mxu0 0.0
    %2555 = vmatpush.msra.mxu0 0.0
    %2556 = vmatpush.msra.mxu0 0.0
    %2557 = vmatpush.msra.mxu0 0.0
    %2558 = vmatpush.msra.mxu0 0.0
    %2559 = vmatpush.msra.mxu0 %v2462
    %2560 = vmatmul.f32.gmra.mxu0 %v2452
    %v2561 = vpop.f32.mrf.mxu0
    %v2562 = vadd.f32 0.0, %v2561
    %2563 = vdwg.mxu0
    %v2564 = vadd.f32 %v2414, %v2482
    %v2565 = vadd.f32 %v2415, %v2502
    %v2566 = vadd.f32 %v2416, %v2522
    %v2567 = vadd.f32 %v2417, %v2542
    %v2568 = vadd.f32 %v2418, %v2562
    %s2569 = scalar_lea.vmem %s3, 32
    %v2570 = vld [vmem:[%s2569] sm:$0xf]
    %v2571 = vld [vmem:[#allocation2] sm:$0xff]
    %v2572 = vld [vmem:[#allocation2 + $0x8] sm:$0xff]
    %v2573 = vld [vmem:[#allocation2 + $0x10] sm:$0xf]
    %2577 = vst [vmem:[#allocation1] ss:$2 sm:$0xff] %v2571
    %s2578 = scalar_lea.vmem [#allocation1], 16
    %2579 = vst [vmem:[%s2578] ss:$2 sm:$0xff] %v2572
    %s2580 = scalar_lea.vmem [#allocation1], 32
    %2581 = vst [vmem:[%s2580] ss:$2 sm:$0xff] %v2573
    %v2582 = vld.sshfl [vmem:[#allocation1] sm:$0xff pattern:$0x75316420]
    %v2583 = vld.sshfl [vmem:[#allocation1 + $0x8] sm:$0xff pattern:$0x75316420]
    %v2584 = vld.sshfl [vmem:[#allocation1 + $0x10] sm:$0xff pattern:$0x75316420]
    %v2585 = vld.sshfl [vmem:[#allocation1 + $0x18] sm:$0xff pattern:$0x75316420]
    %v2586 = vld.sshfl [vmem:[#allocation1 + $0x20] sm:$0xff pattern:$0x75316420]
    %2587 = vrot.lane.b32.xlu0 %v2582, 94
    %v2588 = vpop.permute.xlu0 %2587
    %2589 = vrot.lane.b32.xlu0 %v2583, 94
    %v2590 = vpop.permute.xlu0 %2589
    %2591 = vrot.lane.b32.xlu0 %v2584, 94
    %v2592 = vpop.permute.xlu0 %2591
    %2593 = vrot.lane.b32.xlu0 %v2585, 94
    %v2594 = vpop.permute.xlu0 %2593
    %2595 = vrot.lane.b32.xlu0 %v2586, 94
    %v2596 = vpop.permute.xlu0 %2595
    %v2597 = vsel %vm1245, %v2588, %v2590
    %v2598 = vsel %vm1245, %v2590, %v2592
    %v2599 = vsel %vm1245, %v2592, %v2594
    %v2600 = vsel %vm1245, %v2594, %v2596
    %v2602 = vsel %vm73, %v2570, 0
    %v2604 = vsel %vm77, %v2597, 0
    %v2606 = vsel %vm77, %v2598, 0
    %v2608 = vsel %vm77, %v2599, 0
    %v2610 = vsel %vm77, %v2600, 0
    %v2612 = vsel %vm77, %v2596, 0
    %2614 = vmatpush.msra.mxu0 0.0
    %2615 = vmatpush.msra.mxu0 0.0
    %2616 = vmatpush.msra.mxu0 0.0
    %2617 = vmatpush.msra.mxu0 0.0
    %2618 = vmatpush.msra.mxu0 0.0
    %2619 = vmatpush.msra.mxu0 0.0
    %2620 = vmatpush.msra.mxu0 0.0
    %2621 = vmatpush.msra.mxu0 0.0
    %2622 = vmatpush.msra.mxu0 0.0
    %2623 = vmatpush.msra.mxu0 0.0
    %2624 = vmatpush.msra.mxu0 0.0
    %2625 = vmatpush.msra.mxu0 0.0
    %2626 = vmatpush.msra.mxu0 0.0
    %2627 = vmatpush.msra.mxu0 0.0
    %2628 = vmatpush.msra.mxu0 0.0
    %2629 = vmatpush.msra.mxu0 %v2604
    %2630 = vmatmul.f32.gmra.mxu0 %v2602
    %v2631 = vpop.f32.mrf.mxu0
    %v2632 = vadd.f32 0.0, %v2631
    %2633 = vdwg.mxu0
    %2634 = vmatpush.msra.mxu0 0.0
    %2635 = vmatpush.msra.mxu0 0.0
    %2636 = vmatpush.msra.mxu0 0.0
    %2637 = vmatpush.msra.mxu0 0.0
    %2638 = vmatpush.msra.mxu0 0.0
    %2639 = vmatpush.msra.mxu0 0.0
    %2640 = vmatpush.msra.mxu0 0.0
    %2641 = vmatpush.msra.mxu0 0.0
    %2642 = vmatpush.msra.mxu0 0.0
    %2643 = vmatpush.msra.mxu0 0.0
    %2644 = vmatpush.msra.mxu0 0.0
    %2645 = vmatpush.msra.mxu0 0.0
    %2646 = vmatpush.msra.mxu0 0.0
    %2647 = vmatpush.msra.mxu0 0.0
    %2648 = vmatpush.msra.mxu0 0.0
    %2649 = vmatpush.msra.mxu0 %v2606
    %2650 = vmatmul.f32.gmra.mxu0 %v2602
    %v2651 = vpop.f32.mrf.mxu0
    %v2652 = vadd.f32 0.0, %v2651
    %2653 = vdwg.mxu0
    %2654 = vmatpush.msra.mxu0 0.0
    %2655 = vmatpush.msra.mxu0 0.0
    %2656 = vmatpush.msra.mxu0 0.0
    %2657 = vmatpush.msra.mxu0 0.0
    %2658 = vmatpush.msra.mxu0 0.0
    %2659 = vmatpush.msra.mxu0 0.0
    %2660 = vmatpush.msra.mxu0 0.0
    %2661 = vmatpush.msra.mxu0 0.0
    %2662 = vmatpush.msra.mxu0 0.0
    %2663 = vmatpush.msra.mxu0 0.0
    %2664 = vmatpush.msra.mxu0 0.0
    %2665 = vmatpush.msra.mxu0 0.0
    %2666 = vmatpush.msra.mxu0 0.0
    %2667 = vmatpush.msra.mxu0 0.0
    %2668 = vmatpush.msra.mxu0 0.0
    %2669 = vmatpush.msra.mxu0 %v2608
    %2670 = vmatmul.f32.gmra.mxu0 %v2602
    %v2671 = vpop.f32.mrf.mxu0
    %v2672 = vadd.f32 0.0, %v2671
    %2673 = vdwg.mxu0
    %2674 = vmatpush.msra.mxu0 0.0
    %2675 = vmatpush.msra.mxu0 0.0
    %2676 = vmatpush.msra.mxu0 0.0
    %2677 = vmatpush.msra.mxu0 0.0
    %2678 = vmatpush.msra.mxu0 0.0
    %2679 = vmatpush.msra.mxu0 0.0
    %2680 = vmatpush.msra.mxu0 0.0
    %2681 = vmatpush.msra.mxu0 0.0
    %2682 = vmatpush.msra.mxu0 0.0
    %2683 = vmatpush.msra.mxu0 0.0
    %2684 = vmatpush.msra.mxu0 0.0
    %2685 = vmatpush.msra.mxu0 0.0
    %2686 = vmatpush.msra.mxu0 0.0
    %2687 = vmatpush.msra.mxu0 0.0
    %2688 = vmatpush.msra.mxu0 0.0
    %2689 = vmatpush.msra.mxu0 %v2610
    %2690 = vmatmul.f32.gmra.mxu0 %v2602
    %v2691 = vpop.f32.mrf.mxu0
    %v2692 = vadd.f32 0.0, %v2691
    %2693 = vdwg.mxu0
    %2694 = vmatpush.msra.mxu0 0.0
    %2695 = vmatpush.msra.mxu0 0.0
    %2696 = vmatpush.msra.mxu0 0.0
    %2697 = vmatpush.msra.mxu0 0.0
    %2698 = vmatpush.msra.mxu0 0.0
    %2699 = vmatpush.msra.mxu0 0.0
    %2700 = vmatpush.msra.mxu0 0.0
    %2701 = vmatpush.msra.mxu0 0.0
    %2702 = vmatpush.msra.mxu0 0.0
    %2703 = vmatpush.msra.mxu0 0.0
    %2704 = vmatpush.msra.mxu0 0.0
    %2705 = vmatpush.msra.mxu0 0.0
    %2706 = vmatpush.msra.mxu0 0.0
    %2707 = vmatpush.msra.mxu0 0.0
    %2708 = vmatpush.msra.mxu0 0.0
    %2709 = vmatpush.msra.mxu0 %v2612
    %2710 = vmatmul.f32.gmra.mxu0 %v2602
    %v2711 = vpop.f32.mrf.mxu0
    %v2712 = vadd.f32 0.0, %v2711
    %2713 = vdwg.mxu0
    %v2714 = vadd.f32 %v2564, %v2632
    %v2715 = vadd.f32 %v2565, %v2652
    %v2716 = vadd.f32 %v2566, %v2672
    %v2717 = vadd.f32 %v2567, %v2692
    %v2718 = vadd.f32 %v2568, %v2712
    %v2719 = vld [vmem:[%s4] sm:$0xf]
    %2721 = vset.pattern.permute.xlu0 0
    %2722 = vperm.xlu0 %2721, %v2719
    %v2723 = vpop.permute.xlu0 %2722
    %v2725 = vadd.f32 %v2714, %v2723
    %v2726 = vadd.f32 %v2715, %v2723
    %v2727 = vadd.f32 %v2716, %v2723
    %v2728 = vadd.f32 %v2717, %v2723
    %v2729 = vadd.f32 %v2718, %v2723
    %v2730 = vmax.f32 %v2725, 0.0
    %v2731 = vmax.f32 %v2726, 0.0
    %v2732 = vmax.f32 %v2727, 0.0
    %v2733 = vmax.f32 %v2728, 0.0
    %v2734 = vmax.f32 %v2729, 0.0
    %v2739 = vrot.slane %v2731, 4
    %v2740 = vrot.slane %v2733, 4
    %v2741 = vsel %vm77, %v2730, %v2739
    %v2742 = vsel %vm77, %v2732, %v2740
    %2745 = vst [vmem:[#allocation3] sm:$0xff] %v2741
    %2746 = vst [vmem:[#allocation3 + $0x8] sm:$0xff] %v2742
    %2747 = vst.msk [vmem:[#allocation3 + $0x10] sm:$0xf] %vm1396, %v2734
    %v2748 = vld [vmem:[#allocation3] sm:$0xff]
    %v2750 = vrot.slane %v2748, 3
    %vm2751 = vcmask 1040384
    %v2752 = vsel %vm2751, %v2748, %v2750
    %vm2753 = vcmask 1041409
    %v2754 = vsel %vm2753, %v2748, %v2750
    %v2755 = vrot.slane %v2754, 1
    %vm2756 = vcmask 1042434
    %v2757 = vsel %vm2756, %v2748, %v2750
    %v2758 = vrot.slane %v2757, 2
    %vm2759 = vcmask 1043459
    %v2760 = vsel %vm2759, %v2748, %v2750
    %v2761 = vrot.slane %v2760, 3
    %v2766 = vlaneseq
    %vm2767 = vcmp.ge.s32.totalorder %v2766, 0
    %vm2768 = vcmp.lt.s32.totalorder %v2766, 256
    %vm2769 = vmand %vm2767, %vm2768
    %2770 = vst.msk [vmem:[#allocation4] ss:$2 sm:$0x3] %vm2769, %v2752
    %s2771 = scalar_lea.vmem [#allocation4], 4
    %2772 = vst.msk [vmem:[%s2771] ss:$2 sm:$0x3] %vm2769, %v2755
    %s2773 = scalar_lea.vmem [#allocation4], 8
    %2774 = vst.msk [vmem:[%s2773] ss:$2 sm:$0x3] %vm2769, %v2758
    %s2775 = scalar_lea.vmem [#allocation4], 12
    %2776 = vst.msk [vmem:[%s2775] ss:$2 sm:$0x3] %vm2769, %v2761
    %v2777 = vld [vmem:[#allocation3 + $0x8] sm:$0xff]
    %v2778 = vld [vmem:[#allocation3 + $0x10] sm:$0xf]
    %v2781 = vrot.slane %v2777, 3
    %v2782 = vrot.slane %v2778, 6
    %v2783 = vrot.slane %v2778, 1
    %v2784 = vsel %vm2751, %v2777, %v2781
    %v2785 = vsel %vm2756, %v2782, %v2783
    %vm2786 = vcmask 1041408
    %v2787 = vsel %vm2786, %v2784, %v2785
    %v2788 = vsel %vm2753, %v2777, %v2781
    %v2789 = vsel %vm2759, %v2782, %v2783
    %vm2790 = vcmask 1042433
    %v2791 = vsel %vm2790, %v2788, %v2789
    %v2792 = vrot.slane %v2791, 1
    %v2793 = vsel %vm2756, %v2777, %v2781
    %vm2794 = vcmask 1044484
    %v2795 = vsel %vm2794, %v2782, %v2783
    %vm2796 = vcmask 1043458
    %v2797 = vsel %vm2796, %v2793, %v2795
    %v2798 = vrot.slane %v2797, 2
    %v2799 = vsel %vm2759, %v2777, %v2781
    %vm2800 = vcmask 1045509
    %v2801 = vsel %vm2800, %v2782, %v2783
    %vm2802 = vcmask 1044483
    %v2803 = vsel %vm2802, %v2799, %v2801
    %v2804 = vrot.slane %v2803, 3
    %2805 = vrot.lane.b32.xlu0 %v2787, 94
    %v2806 = vpop.permute.xlu0 %2805
    %2807 = vrot.lane.b32.xlu0 %v2792, 94
    %v2808 = vpop.permute.xlu0 %2807
    %2809 = vrot.lane.b32.xlu0 %v2798, 94
    %v2810 = vpop.permute.xlu0 %2809
    %2811 = vrot.lane.b32.xlu0 %v2804, 94
    %v2812 = vpop.permute.xlu0 %2811
    %v2813 = vrot.slane %v2806, 1
    %v2814 = vrot.slane %v2808, 1
    %v2815 = vrot.slane %v2810, 1
    %v2816 = vrot.slane %v2812, 1
    %v2817 = vsel %vm1245, %v2806, %v2813
    %v2818 = vsel %vm1245, %v2808, %v2814
    %v2819 = vsel %vm1245, %v2810, %v2815
    %v2820 = vsel %vm1245, %v2812, %v2816
    %s2825 = scalar_lea.vmem [#allocation4], 1
    %2826 = vst.msk [vmem:[%s2825] ss:$2 sm:$0x3] %vm2769, %v2817
    %s2827 = scalar_lea.vmem [#allocation4], 5
    %2828 = vst.msk [vmem:[%s2827] ss:$2 sm:$0x3] %vm2769, %v2818
    %s2829 = scalar_lea.vmem [#allocation4], 9
    %2830 = vst.msk [vmem:[%s2829] ss:$2 sm:$0x3] %vm2769, %v2819
    %s2831 = scalar_lea.vmem [#allocation4], 13
    %2832 = vst.msk [vmem:[%s2831] ss:$2 sm:$0x3] %vm2769, %v2820
    %v2833 = vld [vmem:[#allocation4] sm:$0xf]
    %v2834 = vld [vmem:[%s5] sm:$0xff]
    %v2835 = vld [vmem:[%s5 + $0x8] sm:$0xff]
    %v2836 = vld [vmem:[%s5 + $0x10] sm:$0xff]
    %v2837 = vld [vmem:[%s5 + $0x18] sm:$0xff]
    %v2838 = vld [vmem:[%s5 + $0x20] sm:$0xff]
    %v2839 = vld [vmem:[%s5 + $0x28] sm:$0xff]
    %v2840 = vld [vmem:[%s5 + $0x30] sm:$0xff]
    %v2841 = vld [vmem:[%s5 + $0x38] sm:$0xff]
    %v2842 = vld [vmem:[%s5 + $0x40] sm:$0xff]
    %v2843 = vld [vmem:[%s5 + $0x48] sm:$0xff]
    %v2844 = vld [vmem:[%s5 + $0x50] sm:$0xff]
    %v2845 = vld [vmem:[%s5 + $0x58] sm:$0xff]
    %v2846 = vld [vmem:[%s5 + $0x60] sm:$0xff]
    %v2847 = vld [vmem:[%s5 + $0x68] sm:$0xff]
    %v2848 = vld [vmem:[%s5 + $0x70] sm:$0xff]
    %v2849 = vld [vmem:[%s5 + $0x78] sm:$0xff]
    %v2850 = vld [vmem:[%s5 + $0x80] sm:$0xff]
    %v2851 = vld [vmem:[%s5 + $0x88] sm:$0xff]
    %v2852 = vld [vmem:[%s5 + $0x90] sm:$0xff]
    %v2853 = vld [vmem:[%s5 + $0x98] sm:$0xff]
    %v2854 = vld [vmem:[%s5 + $0xa0] sm:$0xff]
    %v2855 = vld [vmem:[%s5 + $0xa8] sm:$0xff]
    %v2856 = vld [vmem:[%s5 + $0xb0] sm:$0xff]
    %v2857 = vld [vmem:[%s5 + $0xb8] sm:$0xff]
    %v2858 = vld [vmem:[%s5 + $0xc0] sm:$0xff]
    %v2859 = vld [vmem:[%s5 + $0xc8] sm:$0xff]
    %v2860 = vld [vmem:[%s5 + $0xd0] sm:$0xff]
    %v2861 = vld [vmem:[%s5 + $0xd8] sm:$0xff]
    %v2862 = vld [vmem:[%s5 + $0xe0] sm:$0xff]
    %v2863 = vld [vmem:[%s5 + $0xe8] sm:$0xff]
    %v2864 = vld [vmem:[%s5 + $0xf0] sm:$0xff]
    %v2865 = vld [vmem:[%s5 + $0xf8] sm:$0xff]
    %s2866 = scalar_lea.vmem [#allocation4], 4
    %v2867 = vld [vmem:[%s2866] sm:$0xf]
    %s2868 = scalar_lea.vmem %s5, 256
    %v2869 = vld [vmem:[%s2868] sm:$0xff]
    %v2870 = vld [vmem:[%s2868 + $0x8] sm:$0xff]
    %v2871 = vld [vmem:[%s2868 + $0x10] sm:$0xff]
    %v2872 = vld [vmem:[%s2868 + $0x18] sm:$0xff]
    %v2873 = vld [vmem:[%s2868 + $0x20] sm:$0xff]
    %v2874 = vld [vmem:[%s2868 + $0x28] sm:$0xff]
    %v2875 = vld [vmem:[%s2868 + $0x30] sm:$0xff]
    %v2876 = vld [vmem:[%s2868 + $0x38] sm:$0xff]
    %v2877 = vld [vmem:[%s2868 + $0x40] sm:$0xff]
    %v2878 = vld [vmem:[%s2868 + $0x48] sm:$0xff]
    %v2879 = vld [vmem:[%s2868 + $0x50] sm:$0xff]
    %v2880 = vld [vmem:[%s2868 + $0x58] sm:$0xff]
    %v2881 = vld [vmem:[%s2868 + $0x60] sm:$0xff]
    %v2882 = vld [vmem:[%s2868 + $0x68] sm:$0xff]
    %v2883 = vld [vmem:[%s2868 + $0x70] sm:$0xff]
    %v2884 = vld [vmem:[%s2868 + $0x78] sm:$0xff]
    %v2885 = vld [vmem:[%s2868 + $0x80] sm:$0xff]
    %v2886 = vld [vmem:[%s2868 + $0x88] sm:$0xff]
    %v2887 = vld [vmem:[%s2868 + $0x90] sm:$0xff]
    %v2888 = vld [vmem:[%s2868 + $0x98] sm:$0xff]
    %v2889 = vld [vmem:[%s2868 + $0xa0] sm:$0xff]
    %v2890 = vld [vmem:[%s2868 + $0xa8] sm:$0xff]
    %v2891 = vld [vmem:[%s2868 + $0xb0] sm:$0xff]
    %v2892 = vld [vmem:[%s2868 + $0xb8] sm:$0xff]
    %v2893 = vld [vmem:[%s2868 + $0xc0] sm:$0xff]
    %v2894 = vld [vmem:[%s2868 + $0xc8] sm:$0xff]
    %v2895 = vld [vmem:[%s2868 + $0xd0] sm:$0xff]
    %v2896 = vld [vmem:[%s2868 + $0xd8] sm:$0xff]
    %v2897 = vld [vmem:[%s2868 + $0xe0] sm:$0xff]
    %v2898 = vld [vmem:[%s2868 + $0xe8] sm:$0xff]
    %v2899 = vld [vmem:[%s2868 + $0xf0] sm:$0xff]
    %v2900 = vld [vmem:[%s2868 + $0xf8] sm:$0xff]
    %2902 = vst [vmem:[#allocation1] ss:$4 sm:$0xff] %v2867
    %v2903 = vld.sshfl [vmem:[#allocation1] sm:$0xff pattern:$0x73625140]
    %v2904 = vld.sshfl [vmem:[#allocation1 + $0x8] sm:$0xff pattern:$0x73625140]
    %2907 = vmatpush.msra.mxu0 %v2884
    %2908 = vmatpush.msra.mxu0 %v2883
    %2909 = vmatpush.msra.mxu0 %v2882
    %2910 = vmatpush.msra.mxu0 %v2881
    %2911 = vmatpush.msra.mxu0 %v2880
    %2912 = vmatpush.msra.mxu0 %v2879
    %2913 = vmatpush.msra.mxu0 %v2878
    %2914 = vmatpush.msra.mxu0 %v2877
    %2915 = vmatpush.msra.mxu0 %v2876
    %2916 = vmatpush.msra.mxu0 %v2875
    %2917 = vmatpush.msra.mxu0 %v2874
    %2918 = vmatpush.msra.mxu0 %v2873
    %2919 = vmatpush.msra.mxu0 %v2872
    %2920 = vmatpush.msra.mxu0 %v2871
    %2921 = vmatpush.msra.mxu0 %v2870
    %2922 = vmatpush.msra.mxu0 %v2869
    %2923 = vmatmul.f32.gmra.mxu0 %v2903
    %v2924 = vpop.f32.mrf.mxu0
    %v2925 = vadd.f32 0.0, %v2924
    %2926 = vdwg.mxu0
    %2927 = vmatpush.msra.mxu0 %v2900
    %2928 = vmatpush.msra.mxu0 %v2899
    %2929 = vmatpush.msra.mxu0 %v2898
    %2930 = vmatpush.msra.mxu0 %v2897
    %2931 = vmatpush.msra.mxu0 %v2896
    %2932 = vmatpush.msra.mxu0 %v2895
    %2933 = vmatpush.msra.mxu0 %v2894
    %2934 = vmatpush.msra.mxu0 %v2893
    %2935 = vmatpush.msra.mxu0 %v2892
    %2936 = vmatpush.msra.mxu0 %v2891
    %2937 = vmatpush.msra.mxu0 %v2890
    %2938 = vmatpush.msra.mxu0 %v2889
    %2939 = vmatpush.msra.mxu0 %v2888
    %2940 = vmatpush.msra.mxu0 %v2887
    %2941 = vmatpush.msra.mxu0 %v2886
    %2942 = vmatpush.msra.mxu0 %v2885
    %2943 = vmatmul.f32.gmra.mxu0 %v2904
    %v2944 = vpop.f32.mrf.mxu0
    %v2945 = vadd.f32 %v2925, %v2944
    %2946 = vdwg.mxu0
    %2948 = vst [vmem:[#allocation1] ss:$4 sm:$0xff] %v2833
    %v2949 = vld.sshfl [vmem:[#allocation1] sm:$0xff pattern:$0x73625140]
    %v2950 = vld.sshfl [vmem:[#allocation1 + $0x8] sm:$0xff pattern:$0x73625140]
    %2953 = vmatpush.msra.mxu0 %v2849
    %2954 = vmatpush.msra.mxu0 %v2848
    %2955 = vmatpush.msra.mxu0 %v2847
    %2956 = vmatpush.msra.mxu0 %v2846
    %2957 = vmatpush.msra.mxu0 %v2845
    %2958 = vmatpush.msra.mxu0 %v2844
    %2959 = vmatpush.msra.mxu0 %v2843
    %2960 = vmatpush.msra.mxu0 %v2842
    %2961 = vmatpush.msra.mxu0 %v2841
    %2962 = vmatpush.msra.mxu0 %v2840
    %2963 = vmatpush.msra.mxu0 %v2839
    %2964 = vmatpush.msra.mxu0 %v2838
    %2965 = vmatpush.msra.mxu0 %v2837
    %2966 = vmatpush.msra.mxu0 %v2836
    %2967 = vmatpush.msra.mxu0 %v2835
    %2968 = vmatpush.msra.mxu0 %v2834
    %2969 = vmatmul.f32.gmra.mxu0 %v2949
    %v2970 = vpop.f32.mrf.mxu0
    %v2971 = vadd.f32 %v2945, %v2970
    %2972 = vdwg.mxu0
    %2973 = vmatpush.msra.mxu0 %v2865
    %2974 = vmatpush.msra.mxu0 %v2864
    %2975 = vmatpush.msra.mxu0 %v2863
    %2976 = vmatpush.msra.mxu0 %v2862
    %2977 = vmatpush.msra.mxu0 %v2861
    %2978 = vmatpush.msra.mxu0 %v2860
    %2979 = vmatpush.msra.mxu0 %v2859
    %2980 = vmatpush.msra.mxu0 %v2858
    %2981 = vmatpush.msra.mxu0 %v2857
    %2982 = vmatpush.msra.mxu0 %v2856
    %2983 = vmatpush.msra.mxu0 %v2855
    %2984 = vmatpush.msra.mxu0 %v2854
    %2985 = vmatpush.msra.mxu0 %v2853
    %2986 = vmatpush.msra.mxu0 %v2852
    %2987 = vmatpush.msra.mxu0 %v2851
    %2988 = vmatpush.msra.mxu0 %v2850
    %2989 = vmatmul.f32.gmra.mxu0 %v2950
    %v2990 = vpop.f32.mrf.mxu0
    %v2991 = vadd.f32 %v2971, %v2990
    %2992 = vdwg.mxu0
    %s2993 = scalar_lea.vmem [#allocation4], 8
    %v2994 = vld [vmem:[%s2993] sm:$0xf]
    %s2995 = scalar_lea.vmem %s5, 512
    %v2996 = vld [vmem:[%s2995] sm:$0xff]
    %v2997 = vld [vmem:[%s2995 + $0x8] sm:$0xff]
    %v2998 = vld [vmem:[%s2995 + $0x10] sm:$0xff]
    %v2999 = vld [vmem:[%s2995 + $0x18] sm:$0xff]
    %v3000 = vld [vmem:[%s2995 + $0x20] sm:$0xff]
    %v3001 = vld [vmem:[%s2995 + $0x28] sm:$0xff]
    %v3002 = vld [vmem:[%s2995 + $0x30] sm:$0xff]
    %v3003 = vld [vmem:[%s2995 + $0x38] sm:$0xff]
    %v3004 = vld [vmem:[%s2995 + $0x40] sm:$0xff]
    %v3005 = vld [vmem:[%s2995 + $0x48] sm:$0xff]
    %v3006 = vld [vmem:[%s2995 + $0x50] sm:$0xff]
    %v3007 = vld [vmem:[%s2995 + $0x58] sm:$0xff]
    %v3008 = vld [vmem:[%s2995 + $0x60] sm:$0xff]
    %v3009 = vld [vmem:[%s2995 + $0x68] sm:$0xff]
    %v3010 = vld [vmem:[%s2995 + $0x70] sm:$0xff]
    %v3011 = vld [vmem:[%s2995 + $0x78] sm:$0xff]
    %v3012 = vld [vmem:[%s2995 + $0x80] sm:$0xff]
    %v3013 = vld [vmem:[%s2995 + $0x88] sm:$0xff]
    %v3014 = vld [vmem:[%s2995 + $0x90] sm:$0xff]
    %v3015 = vld [vmem:[%s2995 + $0x98] sm:$0xff]
    %v3016 = vld [vmem:[%s2995 + $0xa0] sm:$0xff]
    %v3017 = vld [vmem:[%s2995 + $0xa8] sm:$0xff]
    %v3018 = vld [vmem:[%s2995 + $0xb0] sm:$0xff]
    %v3019 = vld [vmem:[%s2995 + $0xb8] sm:$0xff]
    %v3020 = vld [vmem:[%s2995 + $0xc0] sm:$0xff]
    %v3021 = vld [vmem:[%s2995 + $0xc8] sm:$0xff]
    %v3022 = vld [vmem:[%s2995 + $0xd0] sm:$0xff]
    %v3023 = vld [vmem:[%s2995 + $0xd8] sm:$0xff]
    %v3024 = vld [vmem:[%s2995 + $0xe0] sm:$0xff]
    %v3025 = vld [vmem:[%s2995 + $0xe8] sm:$0xff]
    %v3026 = vld [vmem:[%s2995 + $0xf0] sm:$0xff]
    %v3027 = vld [vmem:[%s2995 + $0xf8] sm:$0xff]
    %3029 = vst [vmem:[#allocation1] ss:$4 sm:$0xff] %v2994
    %v3030 = vld.sshfl [vmem:[#allocation1] sm:$0xff pattern:$0x73625140]
    %v3031 = vld.sshfl [vmem:[#allocation1 + $0x8] sm:$0xff pattern:$0x73625140]
    %3034 = vmatpush.msra.mxu0 %v3011
    %3035 = vmatpush.msra.mxu0 %v3010
    %3036 = vmatpush.msra.mxu0 %v3009
    %3037 = vmatpush.msra.mxu0 %v3008
    %3038 = vmatpush.msra.mxu0 %v3007
    %3039 = vmatpush.msra.mxu0 %v3006
    %3040 = vmatpush.msra.mxu0 %v3005
    %3041 = vmatpush.msra.mxu0 %v3004
    %3042 = vmatpush.msra.mxu0 %v3003
    %3043 = vmatpush.msra.mxu0 %v3002
    %3044 = vmatpush.msra.mxu0 %v3001
    %3045 = vmatpush.msra.mxu0 %v3000
    %3046 = vmatpush.msra.mxu0 %v2999
    %3047 = vmatpush.msra.mxu0 %v2998
    %3048 = vmatpush.msra.mxu0 %v2997
    %3049 = vmatpush.msra.mxu0 %v2996
    %3050 = vmatmul.f32.gmra.mxu0 %v3030
    %v3051 = vpop.f32.mrf.mxu0
    %v3052 = vadd.f32 0.0, %v3051
    %3053 = vdwg.mxu0
    %3054 = vmatpush.msra.mxu0 %v3027
    %3055 = vmatpush.msra.mxu0 %v3026
    %3056 = vmatpush.msra.mxu0 %v3025
    %3057 = vmatpush.msra.mxu0 %v3024
    %3058 = vmatpush.msra.mxu0 %v3023
    %3059 = vmatpush.msra.mxu0 %v3022
    %3060 = vmatpush.msra.mxu0 %v3021
    %3061 = vmatpush.msra.mxu0 %v3020
    %3062 = vmatpush.msra.mxu0 %v3019
    %3063 = vmatpush.msra.mxu0 %v3018
    %3064 = vmatpush.msra.mxu0 %v3017
    %3065 = vmatpush.msra.mxu0 %v3016
    %3066 = vmatpush.msra.mxu0 %v3015
    %3067 = vmatpush.msra.mxu0 %v3014
    %3068 = vmatpush.msra.mxu0 %v3013
    %3069 = vmatpush.msra.mxu0 %v3012
    %3070 = vmatmul.f32.gmra.mxu0 %v3031
    %v3071 = vpop.f32.mrf.mxu0
    %v3072 = vadd.f32 %v3052, %v3071
    %3073 = vdwg.mxu0
    %v3074 = vadd.f32 %v2991, %v3072
    %s3075 = scalar_lea.vmem [#allocation4], 12
    %v3076 = vld [vmem:[%s3075] sm:$0xf]
    %s3077 = scalar_lea.vmem %s5, 768
    %v3078 = vld [vmem:[%s3077] sm:$0xff]
    %v3079 = vld [vmem:[%s3077 + $0x8] sm:$0xff]
    %v3080 = vld [vmem:[%s3077 + $0x10] sm:$0xff]
    %v3081 = vld [vmem:[%s3077 + $0x18] sm:$0xff]
    %v3082 = vld [vmem:[%s3077 + $0x20] sm:$0xff]
    %v3083 = vld [vmem:[%s3077 + $0x28] sm:$0xff]
    %v3084 = vld [vmem:[%s3077 + $0x30] sm:$0xff]
    %v3085 = vld [vmem:[%s3077 + $0x38] sm:$0xff]
    %v3086 = vld [vmem:[%s3077 + $0x40] sm:$0xff]
    %v3087 = vld [vmem:[%s3077 + $0x48] sm:$0xff]
    %v3088 = vld [vmem:[%s3077 + $0x50] sm:$0xff]
    %v3089 = vld [vmem:[%s3077 + $0x58] sm:$0xff]
    %v3090 = vld [vmem:[%s3077 + $0x60] sm:$0xff]
    %v3091 = vld [vmem:[%s3077 + $0x68] sm:$0xff]
    %v3092 = vld [vmem:[%s3077 + $0x70] sm:$0xff]
    %v3093 = vld [vmem:[%s3077 + $0x78] sm:$0xff]
    %v3094 = vld [vmem:[%s3077 + $0x80] sm:$0xff]
    %v3095 = vld [vmem:[%s3077 + $0x88] sm:$0xff]
    %v3096 = vld [vmem:[%s3077 + $0x90] sm:$0xff]
    %v3097 = vld [vmem:[%s3077 + $0x98] sm:$0xff]
    %v3098 = vld [vmem:[%s3077 + $0xa0] sm:$0xff]
    %v3099 = vld [vmem:[%s3077 + $0xa8] sm:$0xff]
    %v3100 = vld [vmem:[%s3077 + $0xb0] sm:$0xff]
    %v3101 = vld [vmem:[%s3077 + $0xb8] sm:$0xff]
    %v3102 = vld [vmem:[%s3077 + $0xc0] sm:$0xff]
    %v3103 = vld [vmem:[%s3077 + $0xc8] sm:$0xff]
    %v3104 = vld [vmem:[%s3077 + $0xd0] sm:$0xff]
    %v3105 = vld [vmem:[%s3077 + $0xd8] sm:$0xff]
    %v3106 = vld [vmem:[%s3077 + $0xe0] sm:$0xff]
    %v3107 = vld [vmem:[%s3077 + $0xe8] sm:$0xff]
    %v3108 = vld [vmem:[%s3077 + $0xf0] sm:$0xff]
    %v3109 = vld [vmem:[%s3077 + $0xf8] sm:$0xff]
    %3111 = vst [vmem:[#allocation1] ss:$4 sm:$0xff] %v3076
    %v3112 = vld.sshfl [vmem:[#allocation1] sm:$0xff pattern:$0x73625140]
    %v3113 = vld.sshfl [vmem:[#allocation1 + $0x8] sm:$0xff pattern:$0x73625140]
    %3116 = vmatpush.msra.mxu0 %v3093
    %3117 = vmatpush.msra.mxu0 %v3092
    %3118 = vmatpush.msra.mxu0 %v3091
    %3119 = vmatpush.msra.mxu0 %v3090
    %3120 = vmatpush.msra.mxu0 %v3089
    %3121 = vmatpush.msra.mxu0 %v3088
    %3122 = vmatpush.msra.mxu0 %v3087
    %3123 = vmatpush.msra.mxu0 %v3086
    %3124 = vmatpush.msra.mxu0 %v3085
    %3125 = vmatpush.msra.mxu0 %v3084
    %3126 = vmatpush.msra.mxu0 %v3083
    %3127 = vmatpush.msra.mxu0 %v3082
    %3128 = vmatpush.msra.mxu0 %v3081
    %3129 = vmatpush.msra.mxu0 %v3080
    %3130 = vmatpush.msra.mxu0 %v3079
    %3131 = vmatpush.msra.mxu0 %v3078
    %3132 = vmatmul.f32.gmra.mxu0 %v3112
    %v3133 = vpop.f32.mrf.mxu0
    %v3134 = vadd.f32 0.0, %v3133
    %3135 = vdwg.mxu0
    %3136 = vmatpush.msra.mxu0 %v3109
    %3137 = vmatpush.msra.mxu0 %v3108
    %3138 = vmatpush.msra.mxu0 %v3107
    %3139 = vmatpush.msra.mxu0 %v3106
    %3140 = vmatpush.msra.mxu0 %v3105
    %3141 = vmatpush.msra.mxu0 %v3104
    %3142 = vmatpush.msra.mxu0 %v3103
    %3143 = vmatpush.msra.mxu0 %v3102
    %3144 = vmatpush.msra.mxu0 %v3101
    %3145 = vmatpush.msra.mxu0 %v3100
    %3146 = vmatpush.msra.mxu0 %v3099
    %3147 = vmatpush.msra.mxu0 %v3098
    %3148 = vmatpush.msra.mxu0 %v3097
    %3149 = vmatpush.msra.mxu0 %v3096
    %3150 = vmatpush.msra.mxu0 %v3095
    %3151 = vmatpush.msra.mxu0 %v3094
    %3152 = vmatmul.f32.gmra.mxu0 %v3113
    %v3153 = vpop.f32.mrf.mxu0
    %v3154 = vadd.f32 %v3134, %v3153
    %3155 = vdwg.mxu0
    %v3156 = vadd.f32 %v3074, %v3154
    %v3157 = vld [vmem:[%s6] sm:$0x1]
    %v3159 = vperm.slane %v3157, 0
    %v3161 = vadd.f32 %v3156, %v3159
    %v3162 = vmax.f32 %v3161, 0.0
    %v3163 = vld [vmem:[%s7] sm:$0xff]
    %v3164 = vld [vmem:[%s7 + $0x8] sm:$0xff]
    %v3165 = vld [vmem:[%s7 + $0x10] sm:$0xff]
    %v3166 = vld [vmem:[%s7 + $0x18] sm:$0xff]
    %v3167 = vld [vmem:[%s7 + $0x20] sm:$0xff]
    %v3168 = vld [vmem:[%s7 + $0x28] sm:$0xff]
    %v3169 = vld [vmem:[%s7 + $0x30] sm:$0xff]
    %v3170 = vld [vmem:[%s7 + $0x38] sm:$0xff]
    %v3171 = vld [vmem:[%s7 + $0x40] sm:$0xff]
    %v3172 = vld [vmem:[%s7 + $0x48] sm:$0xff]
    %v3173 = vld [vmem:[%s7 + $0x50] sm:$0xff]
    %v3174 = vld [vmem:[%s7 + $0x58] sm:$0xff]
    %v3175 = vld [vmem:[%s7 + $0x60] sm:$0xff]
    %v3176 = vld [vmem:[%s7 + $0x68] sm:$0xff]
    %v3177 = vld [vmem:[%s7 + $0x70] sm:$0xff]
    %v3178 = vld [vmem:[%s8] sm:$0x1]
    %v3180 = vperm.slane %v3178, 0
    %vm3182 = vcmask 982016
    %v3184 = vsel %vm3182, %v3162, 0
    %3186 = vmatpush.msra.mxu0 0.0
    %3187 = vmatpush.msra.mxu0 %v3177
    %3188 = vmatpush.msra.mxu0 %v3176
    %3189 = vmatpush.msra.mxu0 %v3175
    %3190 = vmatpush.msra.mxu0 %v3174
    %3191 = vmatpush.msra.mxu0 %v3173
    %3192 = vmatpush.msra.mxu0 %v3172
    %3193 = vmatpush.msra.mxu0 %v3171
    %3194 = vmatpush.msra.mxu0 %v3170
    %3195 = vmatpush.msra.mxu0 %v3169
    %3196 = vmatpush.msra.mxu0 %v3168
    %3197 = vmatpush.msra.mxu0 %v3167
    %3198 = vmatpush.msra.mxu0 %v3166
    %3199 = vmatpush.msra.mxu0 %v3165
    %3200 = vmatpush.msra.mxu0 %v3164
    %3201 = vmatpush.msra.mxu0 %v3163
    %3202 = vmatmul.f32.gmra.mxu0 %v3184
    %v3203 = vpop.f32.mrf.mxu0
    %v3204 = vadd.f32 %v3180, %v3203
    %3205 = vdwg.mxu0
    %v3206 = vmax.f32 %v3204, 0.0
    %v3207 = vld [vmem:[%s9] sm:$0xff]
    %v3208 = vld [vmem:[%s9 + $0x8] sm:$0xff]
    %v3209 = vld [vmem:[%s9 + $0x10] sm:$0xff]
    %v3210 = vld [vmem:[%s9 + $0x18] sm:$0xff]
    %v3211 = vld [vmem:[%s9 + $0x20] sm:$0xff]
    %v3212 = vld [vmem:[%s9 + $0x28] sm:$0xff]
    %v3213 = vld [vmem:[%s9 + $0x30] sm:$0xff]
    %v3214 = vld [vmem:[%s9 + $0x38] sm:$0xff]
    %v3215 = vld [vmem:[%s9 + $0x40] sm:$0xff]
    %v3216 = vld [vmem:[%s9 + $0x48] sm:$0xff]
    %v3217 = vld [vmem:[%s9 + $0x50] sm:$0xf]
    %v3218 = vld [vmem:[%s10] sm:$0x1]
    %v3220 = vperm.slane %v3218, 0
    %vm3222 = vcmask 687104
    %v3224 = vsel %vm3222, %v3206, 0
    %v3227 = vsel %vm77, %v3217, 0
    %3229 = vmatpush.msra.mxu0 0.0
    %3230 = vmatpush.msra.mxu0 0.0
    %3231 = vmatpush.msra.mxu0 0.0
    %3232 = vmatpush.msra.mxu0 0.0
    %3233 = vmatpush.msra.mxu0 0.0
    %3234 = vmatpush.msra.mxu0 %v3227
    %3235 = vmatpush.msra.mxu0 %v3216
    %3236 = vmatpush.msra.mxu0 %v3215
    %3237 = vmatpush.msra.mxu0 %v3214
    %3238 = vmatpush.msra.mxu0 %v3213
    %3239 = vmatpush.msra.mxu0 %v3212
    %3240 = vmatpush.msra.mxu0 %v3211
    %3241 = vmatpush.msra.mxu0 %v3210
    %3242 = vmatpush.msra.mxu0 %v3209
    %3243 = vmatpush.msra.mxu0 %v3208
    %3244 = vmatpush.msra.mxu0 %v3207
    %3245 = vmatmul.f32.gmra.mxu0 %v3224
    %v3246 = vpop.f32.mrf.mxu0
    %v3247 = vadd.f32 %v3220, %v3246
    %3248 = vdwg.mxu0
    %3249 = vst [vmem:[#allocation5] sm:$0x3] %v3247
    // Predicated region
    $region46: #{tpu_custom_call.1} parent=1 // pred_check
      _
    $region47: #{tpu_custom_call.1} parent=1 // pred_check_branch
      %3251 = sbr.rel (0) target = $region49
    $region48: #{tpu_custom_call.1} parent=1 // pred_region
      %3253 = vsyncadd [#allocation6], 0
      %s3255 = sshll.u32 [#allocation5], 4
      %s3256 = int_to_ptr.vmem [resolvable:$true] %s3255
      %s3257 = sshll.u32 %s11, 4
      %s3258 = int_to_ptr.hbm [resolvable:$true] %s3257
      %3260 = dma.vmem_to_hbm [thread:$0]  %s3256, 32, %s3258, [#allocation6]
    $region49: #{tpu_custom_call.1} parent=1 // pred_fallthru
      _
    // Predicated region
    $region50: #{tpu_custom_call.1} parent=1 // pred_check
      _
    $region51: #{tpu_custom_call.1} parent=1 // pred_check_branch
      %3262 = sbr.rel (0) target = $region53
    $region52: #{tpu_custom_call.1} parent=1 // pred_region
      %3264 = dma.done [#allocation6], 32
    $region53: #{tpu_custom_call.1} parent=1 // pred_fallthru
      _
    %3265 = vsyncpa [#allocation6], 1

</llo_original>
